<compile_context>
chip_gen: v7x
topology: tpu7x:2x2x1
jax: 0.10.0
libtpu: 0.0.40
codegen_flags: <defaults>
</compile_context>

<pallas_src>
import math
import functools

import jax
import jax.numpy as jnp
from jax.experimental import pallas as pl
from jax.experimental.pallas import tpu as pltpu


def _decoder_block_kernel(
    xq_ref, xf_ref,
    wq_ref, wk_ref, wv_ref, bq_ref, bk_ref, bv_ref,
    wo_ref, bo_ref,
    g1_ref, be1_ref,
    w1_ref, b1_ref, w2_ref, b2_ref,
    g2_ref, be2_ref,
    out_ref,
    k_scr, v_scr,
    *, n_heads,
):
    D = xq_ref.shape[-1]
    hd = D // n_heads

    # ---- K/V cache: fused (S,D)x(D,D) projections, computed once per batch ----
    @pl.when(pl.program_id(1) == 0)
    def _():
        xf = xf_ref[0]                                             # (S, D) bf16
        k = jnp.dot(xf, wk_ref[...], preferred_element_type=jnp.float32) + bk_ref[...]
        v = jnp.dot(xf, wv_ref[...], preferred_element_type=jnp.float32) + bv_ref[...]
        k_scr[...] = k.astype(jnp.bfloat16)
        v_scr[...] = v.astype(jnp.bfloat16)

    xq = xq_ref[0]                                                 # (TQ, D) f32 residual

    # ---- fused Q projection (1/sqrt(hd) folded into Wq/bq at prep time) ----
    q = jnp.dot(xq.astype(jnp.bfloat16), wq_ref[...],
                preferred_element_type=jnp.float32) + bq_ref[...]  # (TQ, D)
    q_b = q.astype(jnp.bfloat16)

    # ---- per-head attention off the shared K/V cache (static lane slices) ----
    ctx_heads = []
    for h in range(n_heads):
        lo = h * hd
        q_h = q_b[:, lo:lo + hd]                                   # (TQ, hd) bf16
        k_h = k_scr[:, lo:lo + hd]                                 # (S, hd)  bf16
        v_h = v_scr[:, lo:lo + hd]                                 # (S, hd)  bf16

        # scores: contract last dims — no materialized K transpose.
        s = jax.lax.dot_general(
            q_h, k_h, dimension_numbers=(((1,), (1,)), ((), ())),
            preferred_element_type=jnp.float32)                    # (TQ, S)
        # TODO(synk): optional attn_mask not supported (forward exercised with mask=None)
        s = s - jnp.max(s, axis=-1, keepdims=True)
        p = jnp.exp(s)
        denom = jnp.sum(p, axis=-1, keepdims=True)                 # (TQ, 1)
        ctx_h = jnp.dot(p.astype(jnp.bfloat16), v_h,
                        preferred_element_type=jnp.float32)        # (TQ, hd)
        # deferred softmax normalization: TQ*hd multiplies (not TQ*S), EUP recip
        ctx_h = ctx_h * pl.reciprocal(denom, approx=True)
        ctx_heads.append(ctx_h.astype(jnp.bfloat16))

    # ---- fused output projection: single (TQ,D)x(D,D) matmul, depth D ----
    ctx = jnp.concatenate(ctx_heads, axis=-1)                      # (TQ, D) bf16
    attn = jnp.dot(ctx, wo_ref[...],
                   preferred_element_type=jnp.float32) + bo_ref[...]

    # ---- residual + LayerNorm 1 (dropout = identity at inference) ----
    h1 = attn + xq
    mu1 = jnp.mean(h1, axis=-1, keepdims=True)
    var1 = jnp.mean(jnp.square(h1 - mu1), axis=-1, keepdims=True)
    h1n = (h1 - mu1) * jax.lax.rsqrt(var1 + 1e-5) * g1_ref[...] + be1_ref[...]

    # ---- feedforward: Linear -> GELU(exact erf, f32) -> Linear ----
    f = jnp.dot(h1n.astype(jnp.bfloat16), w1_ref[...],
                preferred_element_type=jnp.float32) + b1_ref[...]
    f = 0.5 * f * (1.0 + jax.lax.erf(f * (1.0 / math.sqrt(2.0))))
    f = jnp.dot(f.astype(jnp.bfloat16), w2_ref[...],
                preferred_element_type=jnp.float32) + b2_ref[...]

    # ---- residual + LayerNorm 2 (dropout = identity) ----
    h2 = f + h1n
    mu2 = jnp.mean(h2, axis=-1, keepdims=True)
    var2 = jnp.mean(jnp.square(h2 - mu2), axis=-1, keepdims=True)
    out = (h2 - mu2) * jax.lax.rsqrt(var2 + 1e-5) * g2_ref[...] + be2_ref[...]

    out_ref[0] = out.astype(out_ref.dtype)


def prepare_params(params, *, n_heads):
    """One-time parameter prep: fold softmax scale into Wq/bq and cast matmul
    weights to bf16 (biases / LN params stay f32). Weights stay fused (D,D)."""
    D = params["wq"].shape[0]
    hd = D // n_heads
    assert hd * n_heads == D, "dim must be divisible by n_heads"
    scale = 1.0 / math.sqrt(hd)
    return {
        "wq": (params["wq"] * scale).astype(jnp.bfloat16),
        "bq": params["bq"] * scale,
        "wk": params["wk"].astype(jnp.bfloat16), "bk": params["bk"],
        "wv": params["wv"].astype(jnp.bfloat16), "bv": params["bv"],
        "wo": params["wo"].astype(jnp.bfloat16), "bo": params["bo"],
        "g1": params["g1"], "be1": params["be1"],
        "w1": params["w1"].astype(jnp.bfloat16), "b1": params["bf1"],
        "w2": params["w2"].astype(jnp.bfloat16), "b2": params["bf2"],
        "g2": params["g2"], "be2": params["be2"],
    }


def _pick_q_tile(S, q_tile):
    """Largest divisor of S <= q_tile that is sublane-aligned (or S itself)."""
    for t in range(min(S, q_tile), 0, -1):
        if S % t == 0 and (t % 8 == 0 or t == S):
            return t
    return S


def _default_vmem_limit():
    """Size the scoped-VMEM limit off the actual part (64 MiB v7x vs 128 MiB v5e/v6e)."""
    try:
        cap = pltpu.get_tpu_info().vmem_capacity_bytes
    except Exception:
        cap = 64 * 1024 * 1024
    return min(int(cap * 0.9), 110 * 1024 * 1024)


def decoder_block(x, p, *, n_heads, mask=None, q_tile=256,
                  single_buffer_consts=True, vmem_limit_bytes=None):
    """x: (B, S, D) float32.  p: output of prepare_params()."""
    if mask is not None:
        # TODO(synk): attn_mask not implemented; the PyTorch module is exercised with mask=None.
        raise NotImplementedError("attn_mask is not supported by this kernel")
    B, S, D = x.shape
    dff = p["w1"].shape[1]
    assert D % n_heads == 0, "dim must be divisible by n_heads"

    tq = _pick_q_tile(S, q_tile)
    num_q = S // tq

    if vmem_limit_bytes is None:
        vmem_limit_bytes = _default_vmem_limit()

    # K/V source passed as bf16 (kernel only ever uses it as bf16) — halves its
    # DMA and VMEM.  The f32 query tile is kept for the residual path.
    x_bf = x.astype(jnp.bfloat16)

    def const_spec(shape):
        # Constant operands never change block index -> single-buffer them.
        if single_buffer_consts:
            try:
                return pl.BlockSpec(shape, lambda b, i: (0, 0),
                                    pipeline_mode=pl.Buffered(1))
            except Exception:
                pass
        return pl.BlockSpec(shape, lambda b, i: (0, 0))

    kernel = functools.partial(_decoder_block_kernel, n_heads=n_heads)

    # NOTE: output last dim D < 128 causes masked partial stores; at real sizes
    # D is a multiple of 128 and the store path is lane-dense.
    return pl.pallas_call(
        kernel,
        out_shape=jax.ShapeDtypeStruct((B, S, D), x.dtype),
        grid_spec=pltpu.PrefetchScalarGridSpec(
            num_scalar_prefetch=0,
            grid=(B, num_q),
            in_specs=[
                pl.BlockSpec((1, tq, D), lambda b, i: (b, i, 0)),   # x: query tile / residual (f32)
                pl.BlockSpec((1, S, D), lambda b, i: (b, 0, 0)),    # x: full sequence (bf16, K/V src)
                const_spec((D, D)),                                 # Wq (scale folded, bf16)
                const_spec((D, D)),                                 # Wk (bf16)
                const_spec((D, D)),                                 # Wv (bf16)
                const_spec((1, D)),                                 # bq (scale folded)
                const_spec((1, D)),                                 # bk
                const_spec((1, D)),                                 # bv
                const_spec((D, D)),                                 # Wo (bf16)
                const_spec((1, D)),                                 # bo
                const_spec((1, D)), const_spec((1, D)),             # ln1 gamma, beta
                const_spec((D, dff)), const_spec((1, dff)),         # FFN W1 (bf16), b1
                const_spec((dff, D)), const_spec((1, D)),           # FFN W2 (bf16), b2
                const_spec((1, D)), const_spec((1, D)),             # ln2 gamma, beta
            ],
            out_specs=pl.BlockSpec((1, tq, D), lambda b, i: (b, i, 0)),
            scratch_shapes=[
                pltpu.VMEM((S, D), jnp.bfloat16),                   # K cache (per batch)
                pltpu.VMEM((S, D), jnp.bfloat16),                   # V cache (per batch)
            ],
        ),
        compiler_params=pltpu.CompilerParams(
            # Query-tile axis must stay sequential ("arbitrary"): it reuses the
            # per-batch K/V scratch initialized at i == 0.  Batch axis is the
            # megacore-sharded "parallel" axis.
            dimension_semantics=("parallel", "arbitrary"),
            vmem_limit_bytes=vmem_limit_bytes,
        ),
    )(
        x, x_bf,
        p["wq"], p["wk"], p["wv"], p["bq"], p["bk"], p["bv"],
        p["wo"], p["bo"],
        p["g1"], p["be1"],
        p["w1"], p["b1"], p["w2"], p["b2"],
        p["g2"], p["be2"],
    )


def _reference(x, params, *, n_heads):
    """Pure-JAX f32 reference mirroring PyTorch semantics (eval mode)."""
    B, S, D = x.shape
    hd = D // n_heads
    q = x @ params["wq"] + params["bq"]
    k = x @ params["wk"] + params["bk"]
    v = x @ params["wv"] + params["bv"]

    def split(t):  # (B,S,D) -> (B,H,S,hd)
        return t.reshape(B, S, n_heads, hd).transpose(0, 2, 1, 3)

    qh, kh, vh = split(q), split(k), split(v)
    s = jnp.einsum("bhqd,bhkd->bhqk", qh, kh) / math.sqrt(hd)
    p = jax.nn.softmax(s, axis=-1)
    a = jnp.einsum("bhqk,bhkd->bhqd", p, vh)
    a = a.transpose(0, 2, 1, 3).reshape(B, S, D)
    attn = a @ params["wo"] + params["bo"]

    def ln(t, g, b):
        mu = jnp.mean(t, axis=-1, keepdims=True)
        var = jnp.mean((t - mu) ** 2, axis=-1, keepdims=True)
        return (t - mu) * jax.lax.rsqrt(var + 1e-5) * g + b

    h1 = ln(attn + x, params["g1"], params["be1"])
    f = h1 @ params["w1"] + params["bf1"]
    f = 0.5 * f * (1.0 + jax.lax.erf(f / math.sqrt(2.0)))
    f = f @ params["w2"] + params["bf2"]
    return ln(f + h1, params["g2"], params["be2"])


def make_params(key, dim, dff):
    ks = jax.random.split(key, 12)
    s = 0.1
    return {
        # attention projections, stored pre-transposed: y = x @ W + b
        "wq": s * jax.random.normal(ks[0], (dim, dim), jnp.float32),
        "wk": s * jax.random.normal(ks[1], (dim, dim), jnp.float32),
        "wv": s * jax.random.normal(ks[2], (dim, dim), jnp.float32),
        "bq": s * jax.random.normal(ks[3], (1, dim), jnp.float32),
        "bk": s * jax.random.normal(ks[4], (1, dim), jnp.float32),
        "bv": s * jax.random.normal(ks[5], (1, dim), jnp.float32),
        "wo": s * jax.random.normal(ks[6], (dim, dim), jnp.float32),
        "bo": s * jax.random.normal(ks[7], (1, dim), jnp.float32),
        # layernorm 1
        "g1": jnp.ones((1, dim), jnp.float32),
        "be1": jnp.zeros((1, dim), jnp.float32),
        # feedforward, pre-transposed
        "w1": s * jax.random.normal(ks[8], (dim, dff), jnp.float32),
        "bf1": s * jax.random.normal(ks[9], (1, dff), jnp.float32),
        "w2": s * jax.random.normal(ks[10], (dff, dim), jnp.float32),
        "bf2": s * jax.random.normal(ks[11], (1, dim), jnp.float32),
        # layernorm 2
        "g2": jnp.ones((1, dim), jnp.float32),
        "be2": jnp.zeros((1, dim), jnp.float32),
    }


if __name__ == "__main__":
    B, S, dim, dff, n_heads = 2, 8, 32, 64, 4

    key = jax.random.PRNGKey(0)
    kx, kp = jax.random.split(key)
    x = jax.random.normal(kx, (B, S, dim), jnp.float32)
    raw = make_params(kp, dim, dff)
    prepped = prepare_params(raw, n_heads=n_heads)

    try:
        out = decoder_block(x, prepped, n_heads=n_heads)
    except Exception:
        # Fallback for JAX builds where pl.Buffered(1) on pallas_call specs is
        # not supported: identical kernel, default (double) buffering.
        out = decoder_block(x, prepped, n_heads=n_heads, single_buffer_consts=False)
    out = jax.block_until_ready(out)

    ref = _reference(x, raw, n_heads=n_heads)
    assert out.shape == (B, S, dim)
    # bf16 MXU inputs (f32 accumulation) + approx reciprocal -> loose tolerance.
    assert jnp.allclose(out, ref, atol=3e-2, rtol=3e-2), "mismatch vs JAX reference"

    print("KERNEL_OK")
</pallas_src>

<mosaic_0001>
module attributes {stable_mosaic.version = 11 : i64} {
  func.func @_decoder_block_kernel(%arg0: i32, %arg1: i32, %arg2: memref<1x8x32xf32, #tpu.memory_space<vmem>>, %arg3: memref<1x8x32xbf16, #tpu.memory_space<vmem>>, %arg4: memref<32x32xbf16, #tpu.memory_space<vmem>>, %arg5: memref<32x32xbf16, #tpu.memory_space<vmem>>, %arg6: memref<32x32xbf16, #tpu.memory_space<vmem>>, %arg7: memref<1x32xf32, #tpu.memory_space<vmem>>, %arg8: memref<1x32xf32, #tpu.memory_space<vmem>>, %arg9: memref<1x32xf32, #tpu.memory_space<vmem>>, %arg10: memref<32x32xbf16, #tpu.memory_space<vmem>>, %arg11: memref<1x32xf32, #tpu.memory_space<vmem>>, %arg12: memref<1x32xf32, #tpu.memory_space<vmem>>, %arg13: memref<1x32xf32, #tpu.memory_space<vmem>>, %arg14: memref<32x64xbf16, #tpu.memory_space<vmem>>, %arg15: memref<1x64xf32, #tpu.memory_space<vmem>>, %arg16: memref<64x32xbf16, #tpu.memory_space<vmem>>, %arg17: memref<1x32xf32, #tpu.memory_space<vmem>>, %arg18: memref<1x32xf32, #tpu.memory_space<vmem>>, %arg19: memref<1x32xf32, #tpu.memory_space<vmem>>, %arg20: memref<1x8x32xf32, #tpu.memory_space<vmem>>, %arg21: memref<8x32xbf16, #tpu.memory_space<vmem>>, %arg22: memref<8x32xbf16, #tpu.memory_space<vmem>>) attributes {dimension_semantics = [#tpu.dimension_semantics<parallel>, #tpu.dimension_semantics<arbitrary>], iteration_bounds = array<i64: 2, 1>, scalar_prefetch = 0 : i64, scratch_operands = 2 : i64, tpu.core_type = #tpu.core_type<tc>, window_params = [{transform_indices = @transform_0, window_bounds = array<i64: 1, 8, 32>}, {transform_indices = @transform_1, window_bounds = array<i64: 1, 8, 32>}, {pipeline_mode = #tpu.pipeline_mode<synchronous>, transform_indices = @transform_2, window_bounds = array<i64: 32, 32>}, {pipeline_mode = #tpu.pipeline_mode<synchronous>, transform_indices = @transform_3, window_bounds = array<i64: 32, 32>}, {pipeline_mode = #tpu.pipeline_mode<synchronous>, transform_indices = @transform_4, window_bounds = array<i64: 32, 32>}, {pipeline_mode = #tpu.pipeline_mode<synchronous>, transform_indices = @transform_5, window_bounds = array<i64: 1, 32>}, {pipeline_mode = #tpu.pipeline_mode<synchronous>, transform_indices = @transform_6, window_bounds = array<i64: 1, 32>}, {pipeline_mode = #tpu.pipeline_mode<synchronous>, transform_indices = @transform_7, window_bounds = array<i64: 1, 32>}, {pipeline_mode = #tpu.pipeline_mode<synchronous>, transform_indices = @transform_8, window_bounds = array<i64: 32, 32>}, {pipeline_mode = #tpu.pipeline_mode<synchronous>, transform_indices = @transform_9, window_bounds = array<i64: 1, 32>}, {pipeline_mode = #tpu.pipeline_mode<synchronous>, transform_indices = @transform_10, window_bounds = array<i64: 1, 32>}, {pipeline_mode = #tpu.pipeline_mode<synchronous>, transform_indices = @transform_11, window_bounds = array<i64: 1, 32>}, {pipeline_mode = #tpu.pipeline_mode<synchronous>, transform_indices = @transform_12, window_bounds = array<i64: 32, 64>}, {pipeline_mode = #tpu.pipeline_mode<synchronous>, transform_indices = @transform_13, window_bounds = array<i64: 1, 64>}, {pipeline_mode = #tpu.pipeline_mode<synchronous>, transform_indices = @transform_14, window_bounds = array<i64: 64, 32>}, {pipeline_mode = #tpu.pipeline_mode<synchronous>, transform_indices = @transform_15, window_bounds = array<i64: 1, 32>}, {pipeline_mode = #tpu.pipeline_mode<synchronous>, transform_indices = @transform_16, window_bounds = array<i64: 1, 32>}, {pipeline_mode = #tpu.pipeline_mode<synchronous>, transform_indices = @transform_17, window_bounds = array<i64: 1, 32>}, {transform_indices = @transform_18, window_bounds = array<i64: 1, 8, 32>}]} {
    %c0_i32 = arith.constant 0 : i32
    %0 = arith.cmpi eq, %arg1, %c0_i32 : i32
    %1 = arith.extui %0 : i1 to i32
    %c0_i32_0 = arith.constant 0 : i32
    %2 = arith.cmpi ne, %1, %c0_i32_0 : i32
    scf.if %2 {
      %c0_75 = arith.constant 0 : index
      %c0_76 = arith.constant 0 : index
      %c0_77 = arith.constant 0 : index
      %159 = vector.load %arg3[%c0_75, %c0_76, %c0_77] : memref<1x8x32xbf16, #tpu.memory_space<vmem>>, vector<1x8x32xbf16>
      %160 = vector.shape_cast %159 : vector<1x8x32xbf16> to vector<8x32xbf16>
      %c0_78 = arith.constant 0 : index
      %c0_79 = arith.constant 0 : index
      %161 = vector.load %arg5[%c0_78, %c0_79] : memref<32x32xbf16, #tpu.memory_space<vmem>>, vector<32x32xbf16>
      %cst_80 = arith.constant dense<0.000000e+00> : vector<8x32xf32>
      %162 = tpu.matmul %160, %161, %cst_80 {dimension_numbers = #tpu.dot_dimension_numbers<[1], [0], [0], [1], [0, 0, 1, 1], [], []>} : vector<8x32xbf16>, vector<32x32xbf16>, vector<8x32xf32> -> vector<8x32xf32>
      %c0_81 = arith.constant 0 : index
      %c0_82 = arith.constant 0 : index
      %163 = vector.load %arg8[%c0_81, %c0_82] : memref<1x32xf32, #tpu.memory_space<vmem>>, vector<1x32xf32>
      %164 = vector.broadcast %163 : vector<1x32xf32> to vector<8x32xf32>
      %165 = arith.addf %162, %164 : vector<8x32xf32>
      %c0_83 = arith.constant 0 : index
      %c0_84 = arith.constant 0 : index
      %166 = vector.load %arg6[%c0_83, %c0_84] : memref<32x32xbf16, #tpu.memory_space<vmem>>, vector<32x32xbf16>
      %cst_85 = arith.constant dense<0.000000e+00> : vector<8x32xf32>
      %167 = tpu.matmul %160, %166, %cst_85 {dimension_numbers = #tpu.dot_dimension_numbers<[1], [0], [0], [1], [0, 0, 1, 1], [], []>} : vector<8x32xbf16>, vector<32x32xbf16>, vector<8x32xf32> -> vector<8x32xf32>
      %c0_86 = arith.constant 0 : index
      %c0_87 = arith.constant 0 : index
      %168 = vector.load %arg9[%c0_86, %c0_87] : memref<1x32xf32, #tpu.memory_space<vmem>>, vector<1x32xf32>
      %169 = vector.broadcast %168 : vector<1x32xf32> to vector<8x32xf32>
      %170 = arith.addf %167, %169 : vector<8x32xf32>
      %171 = arith.truncf %165 : vector<8x32xf32> to vector<8x32xbf16>
      %c0_88 = arith.constant 0 : index
      %c0_89 = arith.constant 0 : index
      %172 = vector.load %arg21[%c0_88, %c0_89] : memref<8x32xbf16, #tpu.memory_space<vmem>>, vector<8x32xbf16>
      tpu.vector_store %arg21[%c0_88, %c0_89], %171 {strides = array<i32>} : memref<8x32xbf16, #tpu.memory_space<vmem>>, vector<8x32xbf16>,
      %173 = arith.truncf %170 : vector<8x32xf32> to vector<8x32xbf16>
      %c0_90 = arith.constant 0 : index
      %c0_91 = arith.constant 0 : index
      %174 = vector.load %arg22[%c0_90, %c0_91] : memref<8x32xbf16, #tpu.memory_space<vmem>>, vector<8x32xbf16>
      tpu.vector_store %arg22[%c0_90, %c0_91], %173 {strides = array<i32>} : memref<8x32xbf16, #tpu.memory_space<vmem>>, vector<8x32xbf16>,
    } else {
    }
    %c0 = arith.constant 0 : index
    %c0_1 = arith.constant 0 : index
    %c0_2 = arith.constant 0 : index
    %3 = vector.load %arg2[%c0, %c0_1, %c0_2] : memref<1x8x32xf32, #tpu.memory_space<vmem>>, vector<1x8x32xf32>
    %4 = vector.shape_cast %3 : vector<1x8x32xf32> to vector<8x32xf32>
    %5 = arith.truncf %4 : vector<8x32xf32> to vector<8x32xbf16>
    %c0_3 = arith.constant 0 : index
    %c0_4 = arith.constant 0 : index
    %6 = vector.load %arg4[%c0_3, %c0_4] : memref<32x32xbf16, #tpu.memory_space<vmem>>, vector<32x32xbf16>
    %cst = arith.constant dense<0.000000e+00> : vector<8x32xf32>
    %7 = tpu.matmul %5, %6, %cst {dimension_numbers = #tpu.dot_dimension_numbers<[1], [0], [0], [1], [0, 0, 1, 1], [], []>} : vector<8x32xbf16>, vector<32x32xbf16>, vector<8x32xf32> -> vector<8x32xf32>
    %c0_5 = arith.constant 0 : index
    %c0_6 = arith.constant 0 : index
    %8 = vector.load %arg7[%c0_5, %c0_6] : memref<1x32xf32, #tpu.memory_space<vmem>>, vector<1x32xf32>
    %9 = vector.broadcast %8 : vector<1x32xf32> to vector<8x32xf32>
    %10 = arith.addf %7, %9 : vector<8x32xf32>
    %11 = arith.truncf %10 : vector<8x32xf32> to vector<8x32xbf16>
    %12 = vector.extract_strided_slice %11 {offsets = [0, 0], sizes = [8, 8], strides = [1, 1]} : vector<8x32xbf16> to vector<8x8xbf16>
    %c0_7 = arith.constant 0 : index
    %c0_8 = arith.constant 0 : index
    %13 = vector.load %arg21[%c0_7, %c0_8] : memref<8x32xbf16, #tpu.memory_space<vmem>>, vector<8x8xbf16>
    %c0_9 = arith.constant 0 : index
    %c0_10 = arith.constant 0 : index
    %14 = vector.load %arg22[%c0_9, %c0_10] : memref<8x32xbf16, #tpu.memory_space<vmem>>, vector<8x8xbf16>
    %cst_11 = arith.constant dense<0.000000e+00> : vector<8x8xf32>
    %15 = tpu.matmul %12, %13, %cst_11 {dimension_numbers = #tpu.dot_dimension_numbers<[1], [1], [0], [0], [0, 0, 1, 0], [], []>} : vector<8x8xbf16>, vector<8x8xbf16>, vector<8x8xf32> -> vector<8x8xf32>
    %cst_12 = arith.constant dense<0xFF800000> : vector<8xf32>
    %16 = vector.multi_reduction <maximumf>, %15, %cst_12 [1] : vector<8x8xf32> to vector<8xf32>
    %17 = vector.shape_cast %16 : vector<8xf32> to vector<8x1xf32>
    %18 = vector.broadcast %17 : vector<8x1xf32> to vector<8x8xf32>
    %19 = arith.subf %15, %18 : vector<8x8xf32>
    %20 = math.exp %19 : vector<8x8xf32>
    %cst_13 = arith.constant dense<0.000000e+00> : vector<8xf32>
    %21 = vector.multi_reduction <add>, %20, %cst_13 [1] : vector<8x8xf32> to vector<8xf32>
    %22 = vector.shape_cast %21 : vector<8xf32> to vector<8x1xf32>
    %23 = arith.truncf %20 : vector<8x8xf32> to vector<8x8xbf16>
    %cst_14 = arith.constant dense<0.000000e+00> : vector<8x8xf32>
    %24 = tpu.matmul %23, %14, %cst_14 {dimension_numbers = #tpu.dot_dimension_numbers<[1], [0], [0], [1], [0, 0, 1, 1], [], []>} : vector<8x8xbf16>, vector<8x8xbf16>, vector<8x8xf32> -> vector<8x8xf32>
    %25 = tpu.reciprocal %22 {approx = true} : vector<8x1xf32> -> vector<8x1xf32>
    %26 = vector.broadcast %25 : vector<8x1xf32> to vector<8x8xf32>
    %27 = arith.mulf %24, %26 : vector<8x8xf32>
    %28 = arith.truncf %27 : vector<8x8xf32> to vector<8x8xbf16>
    %29 = vector.extract_strided_slice %11 {offsets = [0, 8], sizes = [8, 8], strides = [1, 1]} : vector<8x32xbf16> to vector<8x8xbf16>
    %c0_15 = arith.constant 0 : index
    %c8 = arith.constant 8 : index
    %30 = vector.load %arg21[%c0_15, %c8] : memref<8x32xbf16, #tpu.memory_space<vmem>>, vector<8x8xbf16>
    %c0_16 = arith.constant 0 : index
    %c8_17 = arith.constant 8 : index
    %31 = vector.load %arg22[%c0_16, %c8_17] : memref<8x32xbf16, #tpu.memory_space<vmem>>, vector<8x8xbf16>
    %cst_18 = arith.constant dense<0.000000e+00> : vector<8x8xf32>
    %32 = tpu.matmul %29, %30, %cst_18 {dimension_numbers = #tpu.dot_dimension_numbers<[1], [1], [0], [0], [0, 0, 1, 0], [], []>} : vector<8x8xbf16>, vector<8x8xbf16>, vector<8x8xf32> -> vector<8x8xf32>
    %cst_19 = arith.constant dense<0xFF800000> : vector<8xf32>
    %33 = vector.multi_reduction <maximumf>, %32, %cst_19 [1] : vector<8x8xf32> to vector<8xf32>
    %34 = vector.shape_cast %33 : vector<8xf32> to vector<8x1xf32>
    %35 = vector.broadcast %34 : vector<8x1xf32> to vector<8x8xf32>
    %36 = arith.subf %32, %35 : vector<8x8xf32>
    %37 = math.exp %36 : vector<8x8xf32>
    %cst_20 = arith.constant dense<0.000000e+00> : vector<8xf32>
    %38 = vector.multi_reduction <add>, %37, %cst_20 [1] : vector<8x8xf32> to vector<8xf32>
    %39 = vector.shape_cast %38 : vector<8xf32> to vector<8x1xf32>
    %40 = arith.truncf %37 : vector<8x8xf32> to vector<8x8xbf16>
    %cst_21 = arith.constant dense<0.000000e+00> : vector<8x8xf32>
    %41 = tpu.matmul %40, %31, %cst_21 {dimension_numbers = #tpu.dot_dimension_numbers<[1], [0], [0], [1], [0, 0, 1, 1], [], []>} : vector<8x8xbf16>, vector<8x8xbf16>, vector<8x8xf32> -> vector<8x8xf32>
    %42 = tpu.reciprocal %39 {approx = true} : vector<8x1xf32> -> vector<8x1xf32>
    %43 = vector.broadcast %42 : vector<8x1xf32> to vector<8x8xf32>
    %44 = arith.mulf %41, %43 : vector<8x8xf32>
    %45 = arith.truncf %44 : vector<8x8xf32> to vector<8x8xbf16>
    %46 = vector.extract_strided_slice %11 {offsets = [0, 16], sizes = [8, 8], strides = [1, 1]} : vector<8x32xbf16> to vector<8x8xbf16>
    %c0_22 = arith.constant 0 : index
    %c16 = arith.constant 16 : index
    %47 = vector.load %arg21[%c0_22, %c16] : memref<8x32xbf16, #tpu.memory_space<vmem>>, vector<8x8xbf16>
    %c0_23 = arith.constant 0 : index
    %c16_24 = arith.constant 16 : index
    %48 = vector.load %arg22[%c0_23, %c16_24] : memref<8x32xbf16, #tpu.memory_space<vmem>>, vector<8x8xbf16>
    %cst_25 = arith.constant dense<0.000000e+00> : vector<8x8xf32>
    %49 = tpu.matmul %46, %47, %cst_25 {dimension_numbers = #tpu.dot_dimension_numbers<[1], [1], [0], [0], [0, 0, 1, 0], [], []>} : vector<8x8xbf16>, vector<8x8xbf16>, vector<8x8xf32> -> vector<8x8xf32>
    %cst_26 = arith.constant dense<0xFF800000> : vector<8xf32>
    %50 = vector.multi_reduction <maximumf>, %49, %cst_26 [1] : vector<8x8xf32> to vector<8xf32>
    %51 = vector.shape_cast %50 : vector<8xf32> to vector<8x1xf32>
    %52 = vector.broadcast %51 : vector<8x1xf32> to vector<8x8xf32>
    %53 = arith.subf %49, %52 : vector<8x8xf32>
    %54 = math.exp %53 : vector<8x8xf32>
    %cst_27 = arith.constant dense<0.000000e+00> : vector<8xf32>
    %55 = vector.multi_reduction <add>, %54, %cst_27 [1] : vector<8x8xf32> to vector<8xf32>
    %56 = vector.shape_cast %55 : vector<8xf32> to vector<8x1xf32>
    %57 = arith.truncf %54 : vector<8x8xf32> to vector<8x8xbf16>
    %cst_28 = arith.constant dense<0.000000e+00> : vector<8x8xf32>
    %58 = tpu.matmul %57, %48, %cst_28 {dimension_numbers = #tpu.dot_dimension_numbers<[1], [0], [0], [1], [0, 0, 1, 1], [], []>} : vector<8x8xbf16>, vector<8x8xbf16>, vector<8x8xf32> -> vector<8x8xf32>
    %59 = tpu.reciprocal %56 {approx = true} : vector<8x1xf32> -> vector<8x1xf32>
    %60 = vector.broadcast %59 : vector<8x1xf32> to vector<8x8xf32>
    %61 = arith.mulf %58, %60 : vector<8x8xf32>
    %62 = arith.truncf %61 : vector<8x8xf32> to vector<8x8xbf16>
    %63 = vector.extract_strided_slice %11 {offsets = [0, 24], sizes = [8, 8], strides = [1, 1]} : vector<8x32xbf16> to vector<8x8xbf16>
    %c0_29 = arith.constant 0 : index
    %c24 = arith.constant 24 : index
    %64 = vector.load %arg21[%c0_29, %c24] : memref<8x32xbf16, #tpu.memory_space<vmem>>, vector<8x8xbf16>
    %c0_30 = arith.constant 0 : index
    %c24_31 = arith.constant 24 : index
    %65 = vector.load %arg22[%c0_30, %c24_31] : memref<8x32xbf16, #tpu.memory_space<vmem>>, vector<8x8xbf16>
    %cst_32 = arith.constant dense<0.000000e+00> : vector<8x8xf32>
    %66 = tpu.matmul %63, %64, %cst_32 {dimension_numbers = #tpu.dot_dimension_numbers<[1], [1], [0], [0], [0, 0, 1, 0], [], []>} : vector<8x8xbf16>, vector<8x8xbf16>, vector<8x8xf32> -> vector<8x8xf32>
    %cst_33 = arith.constant dense<0xFF800000> : vector<8xf32>
    %67 = vector.multi_reduction <maximumf>, %66, %cst_33 [1] : vector<8x8xf32> to vector<8xf32>
    %68 = vector.shape_cast %67 : vector<8xf32> to vector<8x1xf32>
    %69 = vector.broadcast %68 : vector<8x1xf32> to vector<8x8xf32>
    %70 = arith.subf %66, %69 : vector<8x8xf32>
    %71 = math.exp %70 : vector<8x8xf32>
    %cst_34 = arith.constant dense<0.000000e+00> : vector<8xf32>
    %72 = vector.multi_reduction <add>, %71, %cst_34 [1] : vector<8x8xf32> to vector<8xf32>
    %73 = vector.shape_cast %72 : vector<8xf32> to vector<8x1xf32>
    %74 = arith.truncf %71 : vector<8x8xf32> to vector<8x8xbf16>
    %cst_35 = arith.constant dense<0.000000e+00> : vector<8x8xf32>
    %75 = tpu.matmul %74, %65, %cst_35 {dimension_numbers = #tpu.dot_dimension_numbers<[1], [0], [0], [1], [0, 0, 1, 1], [], []>} : vector<8x8xbf16>, vector<8x8xbf16>, vector<8x8xf32> -> vector<8x8xf32>
    %76 = tpu.reciprocal %73 {approx = true} : vector<8x1xf32> -> vector<8x1xf32>
    %77 = vector.broadcast %76 : vector<8x1xf32> to vector<8x8xf32>
    %78 = arith.mulf %75, %77 : vector<8x8xf32>
    %79 = arith.truncf %78 : vector<8x8xf32> to vector<8x8xbf16>
    %80 = tpu.concatenate %28, %45, %62, %79 in 1 : vector<8x8xbf16>, vector<8x8xbf16>, vector<8x8xbf16>, vector<8x8xbf16> -> vector<8x32xbf16>
    %c0_36 = arith.constant 0 : index
    %c0_37 = arith.constant 0 : index
    %81 = vector.load %arg10[%c0_36, %c0_37] : memref<32x32xbf16, #tpu.memory_space<vmem>>, vector<32x32xbf16>
    %cst_38 = arith.constant dense<0.000000e+00> : vector<8x32xf32>
    %82 = tpu.matmul %80, %81, %cst_38 {dimension_numbers = #tpu.dot_dimension_numbers<[1], [0], [0], [1], [0, 0, 1, 1], [], []>} : vector<8x32xbf16>, vector<32x32xbf16>, vector<8x32xf32> -> vector<8x32xf32>
    %c0_39 = arith.constant 0 : index
    %c0_40 = arith.constant 0 : index
    %83 = vector.load %arg11[%c0_39, %c0_40] : memref<1x32xf32, #tpu.memory_space<vmem>>, vector<1x32xf32>
    %84 = vector.broadcast %83 : vector<1x32xf32> to vector<8x32xf32>
    %85 = arith.addf %82, %84 : vector<8x32xf32>
    %86 = arith.addf %85, %4 : vector<8x32xf32>
    %cst_41 = arith.constant dense<0.000000e+00> : vector<8xf32>
    %87 = vector.multi_reduction <add>, %86, %cst_41 [1] : vector<8x32xf32> to vector<8xf32>
    %88 = vector.shape_cast %87 : vector<8xf32> to vector<8x1xf32>
    %cst_42 = arith.constant 3.200000e+01 : f32
    %89 = vector.broadcast %cst_42 : f32 to vector<8x1xf32>
    %90 = arith.divf %88, %89 : vector<8x1xf32>
    %91 = vector.broadcast %90 : vector<8x1xf32> to vector<8x32xf32>
    %92 = arith.subf %86, %91 : vector<8x32xf32>
    %93 = arith.mulf %92, %92 : vector<8x32xf32>
    %cst_43 = arith.constant dense<0.000000e+00> : vector<8xf32>
    %94 = vector.multi_reduction <add>, %93, %cst_43 [1] : vector<8x32xf32> to vector<8xf32>
    %95 = vector.shape_cast %94 : vector<8xf32> to vector<8x1xf32>
    %cst_44 = arith.constant 3.200000e+01 : f32
    %96 = vector.broadcast %cst_44 : f32 to vector<8x1xf32>
    %97 = arith.divf %95, %96 : vector<8x1xf32>
    %98 = vector.broadcast %90 : vector<8x1xf32> to vector<8x32xf32>
    %99 = arith.subf %86, %98 : vector<8x32xf32>
    %cst_45 = arith.constant 9.99999974E-6 : f32
    %100 = vector.broadcast %cst_45 : f32 to vector<8x1xf32>
    %101 = arith.addf %97, %100 : vector<8x1xf32>
    %102 = math.rsqrt %101 : vector<8x1xf32>
    %103 = vector.broadcast %102 : vector<8x1xf32> to vector<8x32xf32>
    %104 = arith.mulf %99, %103 : vector<8x32xf32>
    %c0_46 = arith.constant 0 : index
    %c0_47 = arith.constant 0 : index
    %105 = vector.load %arg12[%c0_46, %c0_47] : memref<1x32xf32, #tpu.memory_space<vmem>>, vector<1x32xf32>
    %106 = vector.broadcast %105 : vector<1x32xf32> to vector<8x32xf32>
    %107 = arith.mulf %104, %106 : vector<8x32xf32>
    %c0_48 = arith.constant 0 : index
    %c0_49 = arith.constant 0 : index
    %108 = vector.load %arg13[%c0_48, %c0_49] : memref<1x32xf32, #tpu.memory_space<vmem>>, vector<1x32xf32>
    %109 = vector.broadcast %108 : vector<1x32xf32> to vector<8x32xf32>
    %110 = arith.addf %107, %109 : vector<8x32xf32>
    %111 = arith.truncf %110 : vector<8x32xf32> to vector<8x32xbf16>
    %c0_50 = arith.constant 0 : index
    %c0_51 = arith.constant 0 : index
    %112 = vector.load %arg14[%c0_50, %c0_51] : memref<32x64xbf16, #tpu.memory_space<vmem>>, vector<32x64xbf16>
    %cst_52 = arith.constant dense<0.000000e+00> : vector<8x64xf32>
    %113 = tpu.matmul %111, %112, %cst_52 {dimension_numbers = #tpu.dot_dimension_numbers<[1], [0], [0], [1], [0, 0, 1, 1], [], []>} : vector<8x32xbf16>, vector<32x64xbf16>, vector<8x64xf32> -> vector<8x64xf32>
    %c0_53 = arith.constant 0 : index
    %c0_54 = arith.constant 0 : index
    %114 = vector.load %arg15[%c0_53, %c0_54] : memref<1x64xf32, #tpu.memory_space<vmem>>, vector<1x64xf32>
    %115 = vector.broadcast %114 : vector<1x64xf32> to vector<8x64xf32>
    %116 = arith.addf %113, %115 : vector<8x64xf32>
    %cst_55 = arith.constant 5.000000e-01 : f32
    %117 = vector.broadcast %cst_55 : f32 to vector<8x64xf32>
    %118 = arith.mulf %117, %116 : vector<8x64xf32>
    %cst_56 = arith.constant 0.707106769 : f32
    %119 = vector.broadcast %cst_56 : f32 to vector<8x64xf32>
    %120 = arith.mulf %116, %119 : vector<8x64xf32>
    %121 = math.erf %120 : vector<8x64xf32>
    %cst_57 = arith.constant 1.000000e+00 : f32
    %122 = vector.broadcast %cst_57 : f32 to vector<8x64xf32>
    %123 = arith.addf %122, %121 : vector<8x64xf32>
    %124 = arith.mulf %118, %123 : vector<8x64xf32>
    %125 = arith.truncf %124 : vector<8x64xf32> to vector<8x64xbf16>
    %c0_58 = arith.constant 0 : index
    %c0_59 = arith.constant 0 : index
    %126 = vector.load %arg16[%c0_58, %c0_59] : memref<64x32xbf16, #tpu.memory_space<vmem>>, vector<64x32xbf16>
    %cst_60 = arith.constant dense<0.000000e+00> : vector<8x32xf32>
    %127 = tpu.matmul %125, %126, %cst_60 {dimension_numbers = #tpu.dot_dimension_numbers<[1], [0], [0], [1], [0, 0, 1, 1], [], []>} : vector<8x64xbf16>, vector<64x32xbf16>, vector<8x32xf32> -> vector<8x32xf32>
    %c0_61 = arith.constant 0 : index
    %c0_62 = arith.constant 0 : index
    %128 = vector.load %arg17[%c0_61, %c0_62] : memref<1x32xf32, #tpu.memory_space<vmem>>, vector<1x32xf32>
    %129 = vector.broadcast %128 : vector<1x32xf32> to vector<8x32xf32>
    %130 = arith.addf %127, %129 : vector<8x32xf32>
    %131 = arith.addf %130, %110 : vector<8x32xf32>
    %cst_63 = arith.constant dense<0.000000e+00> : vector<8xf32>
    %132 = vector.multi_reduction <add>, %131, %cst_63 [1] : vector<8x32xf32> to vector<8xf32>
    %133 = vector.shape_cast %132 : vector<8xf32> to vector<8x1xf32>
    %cst_64 = arith.constant 3.200000e+01 : f32
    %134 = vector.broadcast %cst_64 : f32 to vector<8x1xf32>
    %135 = arith.divf %133, %134 : vector<8x1xf32>
    %136 = vector.broadcast %135 : vector<8x1xf32> to vector<8x32xf32>
    %137 = arith.subf %131, %136 : vector<8x32xf32>
    %138 = arith.mulf %137, %137 : vector<8x32xf32>
    %cst_65 = arith.constant dense<0.000000e+00> : vector<8xf32>
    %139 = vector.multi_reduction <add>, %138, %cst_65 [1] : vector<8x32xf32> to vector<8xf32>
    %140 = vector.shape_cast %139 : vector<8xf32> to vector<8x1xf32>
    %cst_66 = arith.constant 3.200000e+01 : f32
    %141 = vector.broadcast %cst_66 : f32 to vector<8x1xf32>
    %142 = arith.divf %140, %141 : vector<8x1xf32>
    %143 = vector.broadcast %135 : vector<8x1xf32> to vector<8x32xf32>
    %144 = arith.subf %131, %143 : vector<8x32xf32>
    %cst_67 = arith.constant 9.99999974E-6 : f32
    %145 = vector.broadcast %cst_67 : f32 to vector<8x1xf32>
    %146 = arith.addf %142, %145 : vector<8x1xf32>
    %147 = math.rsqrt %146 : vector<8x1xf32>
    %148 = vector.broadcast %147 : vector<8x1xf32> to vector<8x32xf32>
    %149 = arith.mulf %144, %148 : vector<8x32xf32>
    %c0_68 = arith.constant 0 : index
    %c0_69 = arith.constant 0 : index
    %150 = vector.load %arg18[%c0_68, %c0_69] : memref<1x32xf32, #tpu.memory_space<vmem>>, vector<1x32xf32>
    %151 = vector.broadcast %150 : vector<1x32xf32> to vector<8x32xf32>
    %152 = arith.mulf %149, %151 : vector<8x32xf32>
    %c0_70 = arith.constant 0 : index
    %c0_71 = arith.constant 0 : index
    %153 = vector.load %arg19[%c0_70, %c0_71] : memref<1x32xf32, #tpu.memory_space<vmem>>, vector<1x32xf32>
    %154 = vector.broadcast %153 : vector<1x32xf32> to vector<8x32xf32>
    %155 = arith.addf %152, %154 : vector<8x32xf32>
    %c0_72 = arith.constant 0 : index
    %c0_73 = arith.constant 0 : index
    %c0_74 = arith.constant 0 : index
    %156 = vector.load %arg20[%c0_72, %c0_73, %c0_74] : memref<1x8x32xf32, #tpu.memory_space<vmem>>, vector<1x8x32xf32>
    %157 = vector.shape_cast %156 : vector<1x8x32xf32> to vector<8x32xf32>
    %158 = vector.shape_cast %155 : vector<8x32xf32> to vector<1x8x32xf32>
    tpu.vector_store %arg20[%c0_72, %c0_73, %c0_74], %158 {strides = array<i32>} : memref<1x8x32xf32, #tpu.memory_space<vmem>>, vector<1x8x32xf32>,
    return
  }
  func.func @transform_0(%arg0: i32, %arg1: i32) -> (i32, i32, i32) {
    %c0_i32 = arith.constant 0 : i32
    %c0_i32_0 = arith.constant 0 : i32
    return %arg0, %arg1, %c0_i32 : i32, i32, i32
  }
  func.func @transform_1(%arg0: i32, %arg1: i32) -> (i32, i32, i32) {
    %c0_i32 = arith.constant 0 : i32
    %c0_i32_0 = arith.constant 0 : i32
    %c0_i32_1 = arith.constant 0 : i32
    return %arg0, %c0_i32, %c0_i32_0 : i32, i32, i32
  }
  func.func @transform_2(%arg0: i32, %arg1: i32) -> (i32, i32) {
    %c0_i32 = arith.constant 0 : i32
    %c0_i32_0 = arith.constant 0 : i32
    %c0_i32_1 = arith.constant 0 : i32
    return %c0_i32, %c0_i32_0 : i32, i32
  }
  func.func @transform_3(%arg0: i32, %arg1: i32) -> (i32, i32) {
    %c0_i32 = arith.constant 0 : i32
    %c0_i32_0 = arith.constant 0 : i32
    %c0_i32_1 = arith.constant 0 : i32
    return %c0_i32, %c0_i32_0 : i32, i32
  }
  func.func @transform_4(%arg0: i32, %arg1: i32) -> (i32, i32) {
    %c0_i32 = arith.constant 0 : i32
    %c0_i32_0 = arith.constant 0 : i32
    %c0_i32_1 = arith.constant 0 : i32
    return %c0_i32, %c0_i32_0 : i32, i32
  }
  func.func @transform_5(%arg0: i32, %arg1: i32) -> (i32, i32) {
    %c0_i32 = arith.constant 0 : i32
    %c0_i32_0 = arith.constant 0 : i32
    %c0_i32_1 = arith.constant 0 : i32
    return %c0_i32, %c0_i32_0 : i32, i32
  }
  func.func @transform_6(%arg0: i32, %arg1: i32) -> (i32, i32) {
    %c0_i32 = arith.constant 0 : i32
    %c0_i32_0 = arith.constant 0 : i32
    %c0_i32_1 = arith.constant 0 : i32
    return %c0_i32, %c0_i32_0 : i32, i32
  }
  func.func @transform_7(%arg0: i32, %arg1: i32) -> (i32, i32) {
    %c0_i32 = arith.constant 0 : i32
    %c0_i32_0 = arith.constant 0 : i32
    %c0_i32_1 = arith.constant 0 : i32
    return %c0_i32, %c0_i32_0 : i32, i32
  }
  func.func @transform_8(%arg0: i32, %arg1: i32) -> (i32, i32) {
    %c0_i32 = arith.constant 0 : i32
    %c0_i32_0 = arith.constant 0 : i32
    %c0_i32_1 = arith.constant 0 : i32
    return %c0_i32, %c0_i32_0 : i32, i32
  }
  func.func @transform_9(%arg0: i32, %arg1: i32) -> (i32, i32) {
    %c0_i32 = arith.constant 0 : i32
    %c0_i32_0 = arith.constant 0 : i32
    %c0_i32_1 = arith.constant 0 : i32
    return %c0_i32, %c0_i32_0 : i32, i32
  }
  func.func @transform_10(%arg0: i32, %arg1: i32) -> (i32, i32) {
    %c0_i32 = arith.constant 0 : i32
    %c0_i32_0 = arith.constant 0 : i32
    %c0_i32_1 = arith.constant 0 : i32
    return %c0_i32, %c0_i32_0 : i32, i32
  }
  func.func @transform_11(%arg0: i32, %arg1: i32) -> (i32, i32) {
    %c0_i32 = arith.constant 0 : i32
    %c0_i32_0 = arith.constant 0 : i32
    %c0_i32_1 = arith.constant 0 : i32
    return %c0_i32, %c0_i32_0 : i32, i32
  }
  func.func @transform_12(%arg0: i32, %arg1: i32) -> (i32, i32) {
    %c0_i32 = arith.constant 0 : i32
    %c0_i32_0 = arith.constant 0 : i32
    %c0_i32_1 = arith.constant 0 : i32
    return %c0_i32, %c0_i32_0 : i32, i32
  }
  func.func @transform_13(%arg0: i32, %arg1: i32) -> (i32, i32) {
    %c0_i32 = arith.constant 0 : i32
    %c0_i32_0 = arith.constant 0 : i32
    %c0_i32_1 = arith.constant 0 : i32
    return %c0_i32, %c0_i32_0 : i32, i32
  }
  func.func @transform_14(%arg0: i32, %arg1: i32) -> (i32, i32) {
    %c0_i32 = arith.constant 0 : i32
    %c0_i32_0 = arith.constant 0 : i32
    %c0_i32_1 = arith.constant 0 : i32
    return %c0_i32, %c0_i32_0 : i32, i32
  }
  func.func @transform_15(%arg0: i32, %arg1: i32) -> (i32, i32) {
    %c0_i32 = arith.constant 0 : i32
    %c0_i32_0 = arith.constant 0 : i32
    %c0_i32_1 = arith.constant 0 : i32
    return %c0_i32, %c0_i32_0 : i32, i32
  }
  func.func @transform_16(%arg0: i32, %arg1: i32) -> (i32, i32) {
    %c0_i32 = arith.constant 0 : i32
    %c0_i32_0 = arith.constant 0 : i32
    %c0_i32_1 = arith.constant 0 : i32
    return %c0_i32, %c0_i32_0 : i32, i32
  }
  func.func @transform_17(%arg0: i32, %arg1: i32) -> (i32, i32) {
    %c0_i32 = arith.constant 0 : i32
    %c0_i32_0 = arith.constant 0 : i32
    %c0_i32_1 = arith.constant 0 : i32
    return %c0_i32, %c0_i32_0 : i32, i32
  }
  func.func @transform_18(%arg0: i32, %arg1: i32) -> (i32, i32, i32) {
    %c0_i32 = arith.constant 0 : i32
    %c0_i32_0 = arith.constant 0 : i32
    return %arg0, %arg1, %c0_i32 : i32, i32, i32
  }
}

module attributes {stable_mosaic.version = 11 : i64} {
  func.func @_decoder_block_kernel(%arg0: i32, %arg1: i32, %arg2: memref<1x8x32xf32, #tpu.memory_space<vmem>>, %arg3: memref<1x8x32xbf16, #tpu.memory_space<vmem>>, %arg4: memref<32x32xbf16, #tpu.memory_space<vmem>>, %arg5: memref<32x32xbf16, #tpu.memory_space<vmem>>, %arg6: memref<32x32xbf16, #tpu.memory_space<vmem>>, %arg7: memref<1x32xf32, #tpu.memory_space<vmem>>, %arg8: memref<1x32xf32, #tpu.memory_space<vmem>>, %arg9: memref<1x32xf32, #tpu.memory_space<vmem>>, %arg10: memref<32x32xbf16, #tpu.memory_space<vmem>>, %arg11: memref<1x32xf32, #tpu.memory_space<vmem>>, %arg12: memref<1x32xf32, #tpu.memory_space<vmem>>, %arg13: memref<1x32xf32, #tpu.memory_space<vmem>>, %arg14: memref<32x64xbf16, #tpu.memory_space<vmem>>, %arg15: memref<1x64xf32, #tpu.memory_space<vmem>>, %arg16: memref<64x32xbf16, #tpu.memory_space<vmem>>, %arg17: memref<1x32xf32, #tpu.memory_space<vmem>>, %arg18: memref<1x32xf32, #tpu.memory_space<vmem>>, %arg19: memref<1x32xf32, #tpu.memory_space<vmem>>, %arg20: memref<1x8x32xf32, #tpu.memory_space<vmem>>, %arg21: memref<8x32xbf16, #tpu.memory_space<vmem>>, %arg22: memref<8x32xbf16, #tpu.memory_space<vmem>>) attributes {dimension_semantics = [#tpu.dimension_semantics<parallel>, #tpu.dimension_semantics<arbitrary>], iteration_bounds = array<i64: 2, 1>, scalar_prefetch = 0 : i64, scratch_operands = 2 : i64, tpu.core_type = #tpu.core_type<tc>, window_params = [{transform_indices = @transform_0, window_bounds = array<i64: 1, 8, 32>}, {transform_indices = @transform_1, window_bounds = array<i64: 1, 8, 32>}, {pipeline_mode = #tpu.pipeline_mode<synchronous>, transform_indices = @transform_2, window_bounds = array<i64: 32, 32>}, {pipeline_mode = #tpu.pipeline_mode<synchronous>, transform_indices = @transform_3, window_bounds = array<i64: 32, 32>}, {pipeline_mode = #tpu.pipeline_mode<synchronous>, transform_indices = @transform_4, window_bounds = array<i64: 32, 32>}, {pipeline_mode = #tpu.pipeline_mode<synchronous>, transform_indices = @transform_5, window_bounds = array<i64: 1, 32>}, {pipeline_mode = #tpu.pipeline_mode<synchronous>, transform_indices = @transform_6, window_bounds = array<i64: 1, 32>}, {pipeline_mode = #tpu.pipeline_mode<synchronous>, transform_indices = @transform_7, window_bounds = array<i64: 1, 32>}, {pipeline_mode = #tpu.pipeline_mode<synchronous>, transform_indices = @transform_8, window_bounds = array<i64: 32, 32>}, {pipeline_mode = #tpu.pipeline_mode<synchronous>, transform_indices = @transform_9, window_bounds = array<i64: 1, 32>}, {pipeline_mode = #tpu.pipeline_mode<synchronous>, transform_indices = @transform_10, window_bounds = array<i64: 1, 32>}, {pipeline_mode = #tpu.pipeline_mode<synchronous>, transform_indices = @transform_11, window_bounds = array<i64: 1, 32>}, {pipeline_mode = #tpu.pipeline_mode<synchronous>, transform_indices = @transform_12, window_bounds = array<i64: 32, 64>}, {pipeline_mode = #tpu.pipeline_mode<synchronous>, transform_indices = @transform_13, window_bounds = array<i64: 1, 64>}, {pipeline_mode = #tpu.pipeline_mode<synchronous>, transform_indices = @transform_14, window_bounds = array<i64: 64, 32>}, {pipeline_mode = #tpu.pipeline_mode<synchronous>, transform_indices = @transform_15, window_bounds = array<i64: 1, 32>}, {pipeline_mode = #tpu.pipeline_mode<synchronous>, transform_indices = @transform_16, window_bounds = array<i64: 1, 32>}, {pipeline_mode = #tpu.pipeline_mode<synchronous>, transform_indices = @transform_17, window_bounds = array<i64: 1, 32>}, {transform_indices = @transform_18, window_bounds = array<i64: 1, 8, 32>}]} {
    %c0_i32 = arith.constant 0 : i32
    %0 = arith.cmpi eq, %arg1, %c0_i32 : i32
    %1 = arith.extui %0 : i1 to i32
    %c0_i32_0 = arith.constant 0 : i32
    %2 = arith.cmpi ne, %1, %c0_i32_0 : i32
    scf.if %2 {
      %c0_75 = arith.constant 0 : index
      %c0_76 = arith.constant 0 : index
      %c0_77 = arith.constant 0 : index
      %159 = vector.load %arg3[%c0_75, %c0_76, %c0_77] : memref<1x8x32xbf16, #tpu.memory_space<vmem>>, vector<1x8x32xbf16>
      %160 = vector.shape_cast %159 : vector<1x8x32xbf16> to vector<8x32xbf16>
      %c0_78 = arith.constant 0 : index
      %c0_79 = arith.constant 0 : index
      %161 = vector.load %arg5[%c0_78, %c0_79] : memref<32x32xbf16, #tpu.memory_space<vmem>>, vector<32x32xbf16>
      %cst_80 = arith.constant dense<0.000000e+00> : vector<8x32xf32>
      %162 = tpu.matmul %160, %161, %cst_80 {dimension_numbers = #tpu.dot_dimension_numbers<[1], [0], [0], [1], [0, 0, 1, 1], [], []>} : vector<8x32xbf16>, vector<32x32xbf16>, vector<8x32xf32> -> vector<8x32xf32>
      %c0_81 = arith.constant 0 : index
      %c0_82 = arith.constant 0 : index
      %163 = vector.load %arg8[%c0_81, %c0_82] : memref<1x32xf32, #tpu.memory_space<vmem>>, vector<1x32xf32>
      %164 = vector.broadcast %163 : vector<1x32xf32> to vector<8x32xf32>
      %165 = arith.addf %162, %164 : vector<8x32xf32>
      %c0_83 = arith.constant 0 : index
      %c0_84 = arith.constant 0 : index
      %166 = vector.load %arg6[%c0_83, %c0_84] : memref<32x32xbf16, #tpu.memory_space<vmem>>, vector<32x32xbf16>
      %cst_85 = arith.constant dense<0.000000e+00> : vector<8x32xf32>
      %167 = tpu.matmul %160, %166, %cst_85 {dimension_numbers = #tpu.dot_dimension_numbers<[1], [0], [0], [1], [0, 0, 1, 1], [], []>} : vector<8x32xbf16>, vector<32x32xbf16>, vector<8x32xf32> -> vector<8x32xf32>
      %c0_86 = arith.constant 0 : index
      %c0_87 = arith.constant 0 : index
      %168 = vector.load %arg9[%c0_86, %c0_87] : memref<1x32xf32, #tpu.memory_space<vmem>>, vector<1x32xf32>
      %169 = vector.broadcast %168 : vector<1x32xf32> to vector<8x32xf32>
      %170 = arith.addf %167, %169 : vector<8x32xf32>
      %171 = arith.truncf %165 : vector<8x32xf32> to vector<8x32xbf16>
      %c0_88 = arith.constant 0 : index
      %c0_89 = arith.constant 0 : index
      %172 = vector.load %arg21[%c0_88, %c0_89] : memref<8x32xbf16, #tpu.memory_space<vmem>>, vector<8x32xbf16>
      tpu.vector_store %arg21[%c0_88, %c0_89], %171 {strides = array<i32>} : memref<8x32xbf16, #tpu.memory_space<vmem>>, vector<8x32xbf16>,
      %173 = arith.truncf %170 : vector<8x32xf32> to vector<8x32xbf16>
      %c0_90 = arith.constant 0 : index
      %c0_91 = arith.constant 0 : index
      %174 = vector.load %arg22[%c0_90, %c0_91] : memref<8x32xbf16, #tpu.memory_space<vmem>>, vector<8x32xbf16>
      tpu.vector_store %arg22[%c0_90, %c0_91], %173 {strides = array<i32>} : memref<8x32xbf16, #tpu.memory_space<vmem>>, vector<8x32xbf16>,
    } else {
    }
    %c0 = arith.constant 0 : index
    %c0_1 = arith.constant 0 : index
    %c0_2 = arith.constant 0 : index
    %3 = vector.load %arg2[%c0, %c0_1, %c0_2] : memref<1x8x32xf32, #tpu.memory_space<vmem>>, vector<1x8x32xf32>
    %4 = vector.shape_cast %3 : vector<1x8x32xf32> to vector<8x32xf32>
    %5 = arith.truncf %4 : vector<8x32xf32> to vector<8x32xbf16>
    %c0_3 = arith.constant 0 : index
    %c0_4 = arith.constant 0 : index
    %6 = vector.load %arg4[%c0_3, %c0_4] : memref<32x32xbf16, #tpu.memory_space<vmem>>, vector<32x32xbf16>
    %cst = arith.constant dense<0.000000e+00> : vector<8x32xf32>
    %7 = tpu.matmul %5, %6, %cst {dimension_numbers = #tpu.dot_dimension_numbers<[1], [0], [0], [1], [0, 0, 1, 1], [], []>} : vector<8x32xbf16>, vector<32x32xbf16>, vector<8x32xf32> -> vector<8x32xf32>
    %c0_5 = arith.constant 0 : index
    %c0_6 = arith.constant 0 : index
    %8 = vector.load %arg7[%c0_5, %c0_6] : memref<1x32xf32, #tpu.memory_space<vmem>>, vector<1x32xf32>
    %9 = vector.broadcast %8 : vector<1x32xf32> to vector<8x32xf32>
    %10 = arith.addf %7, %9 : vector<8x32xf32>
    %11 = arith.truncf %10 : vector<8x32xf32> to vector<8x32xbf16>
    %12 = vector.extract_strided_slice %11 {offsets = [0, 0], sizes = [8, 8], strides = [1, 1]} : vector<8x32xbf16> to vector<8x8xbf16>
    %c0_7 = arith.constant 0 : index
    %c0_8 = arith.constant 0 : index
    %13 = vector.load %arg21[%c0_7, %c0_8] : memref<8x32xbf16, #tpu.memory_space<vmem>>, vector<8x8xbf16>
    %c0_9 = arith.constant 0 : index
    %c0_10 = arith.constant 0 : index
    %14 = vector.load %arg22[%c0_9, %c0_10] : memref<8x32xbf16, #tpu.memory_space<vmem>>, vector<8x8xbf16>
    %cst_11 = arith.constant dense<0.000000e+00> : vector<8x8xf32>
    %15 = tpu.matmul %12, %13, %cst_11 {dimension_numbers = #tpu.dot_dimension_numbers<[1], [1], [0], [0], [0, 0, 1, 0], [], []>} : vector<8x8xbf16>, vector<8x8xbf16>, vector<8x8xf32> -> vector<8x8xf32>
    %cst_12 = arith.constant dense<0xFF800000> : vector<8xf32>
    %16 = vector.multi_reduction <maximumf>, %15, %cst_12 [1] : vector<8x8xf32> to vector<8xf32>
    %17 = vector.shape_cast %16 : vector<8xf32> to vector<8x1xf32>
    %18 = vector.broadcast %17 : vector<8x1xf32> to vector<8x8xf32>
    %19 = arith.subf %15, %18 : vector<8x8xf32>
    %20 = math.exp %19 : vector<8x8xf32>
    %cst_13 = arith.constant dense<0.000000e+00> : vector<8xf32>
    %21 = vector.multi_reduction <add>, %20, %cst_13 [1] : vector<8x8xf32> to vector<8xf32>
    %22 = vector.shape_cast %21 : vector<8xf32> to vector<8x1xf32>
    %23 = arith.truncf %20 : vector<8x8xf32> to vector<8x8xbf16>
    %cst_14 = arith.constant dense<0.000000e+00> : vector<8x8xf32>
    %24 = tpu.matmul %23, %14, %cst_14 {dimension_numbers = #tpu.dot_dimension_numbers<[1], [0], [0], [1], [0, 0, 1, 1], [], []>} : vector<8x8xbf16>, vector<8x8xbf16>, vector<8x8xf32> -> vector<8x8xf32>
    %25 = tpu.reciprocal %22 {approx = true} : vector<8x1xf32> -> vector<8x1xf32>
    %26 = vector.broadcast %25 : vector<8x1xf32> to vector<8x8xf32>
    %27 = arith.mulf %24, %26 : vector<8x8xf32>
    %28 = arith.truncf %27 : vector<8x8xf32> to vector<8x8xbf16>
    %29 = vector.extract_strided_slice %11 {offsets = [0, 8], sizes = [8, 8], strides = [1, 1]} : vector<8x32xbf16> to vector<8x8xbf16>
    %c0_15 = arith.constant 0 : index
    %c8 = arith.constant 8 : index
    %30 = vector.load %arg21[%c0_15, %c8] : memref<8x32xbf16, #tpu.memory_space<vmem>>, vector<8x8xbf16>
    %c0_16 = arith.constant 0 : index
    %c8_17 = arith.constant 8 : index
    %31 = vector.load %arg22[%c0_16, %c8_17] : memref<8x32xbf16, #tpu.memory_space<vmem>>, vector<8x8xbf16>
    %cst_18 = arith.constant dense<0.000000e+00> : vector<8x8xf32>
    %32 = tpu.matmul %29, %30, %cst_18 {dimension_numbers = #tpu.dot_dimension_numbers<[1], [1], [0], [0], [0, 0, 1, 0], [], []>} : vector<8x8xbf16>, vector<8x8xbf16>, vector<8x8xf32> -> vector<8x8xf32>
    %cst_19 = arith.constant dense<0xFF800000> : vector<8xf32>
    %33 = vector.multi_reduction <maximumf>, %32, %cst_19 [1] : vector<8x8xf32> to vector<8xf32>
    %34 = vector.shape_cast %33 : vector<8xf32> to vector<8x1xf32>
    %35 = vector.broadcast %34 : vector<8x1xf32> to vector<8x8xf32>
    %36 = arith.subf %32, %35 : vector<8x8xf32>
    %37 = math.exp %36 : vector<8x8xf32>
    %cst_20 = arith.constant dense<0.000000e+00> : vector<8xf32>
    %38 = vector.multi_reduction <add>, %37, %cst_20 [1] : vector<8x8xf32> to vector<8xf32>
    %39 = vector.shape_cast %38 : vector<8xf32> to vector<8x1xf32>
    %40 = arith.truncf %37 : vector<8x8xf32> to vector<8x8xbf16>
    %cst_21 = arith.constant dense<0.000000e+00> : vector<8x8xf32>
    %41 = tpu.matmul %40, %31, %cst_21 {dimension_numbers = #tpu.dot_dimension_numbers<[1], [0], [0], [1], [0, 0, 1, 1], [], []>} : vector<8x8xbf16>, vector<8x8xbf16>, vector<8x8xf32> -> vector<8x8xf32>
    %42 = tpu.reciprocal %39 {approx = true} : vector<8x1xf32> -> vector<8x1xf32>
    %43 = vector.broadcast %42 : vector<8x1xf32> to vector<8x8xf32>
    %44 = arith.mulf %41, %43 : vector<8x8xf32>
    %45 = arith.truncf %44 : vector<8x8xf32> to vector<8x8xbf16>
    %46 = vector.extract_strided_slice %11 {offsets = [0, 16], sizes = [8, 8], strides = [1, 1]} : vector<8x32xbf16> to vector<8x8xbf16>
    %c0_22 = arith.constant 0 : index
    %c16 = arith.constant 16 : index
    %47 = vector.load %arg21[%c0_22, %c16] : memref<8x32xbf16, #tpu.memory_space<vmem>>, vector<8x8xbf16>
    %c0_23 = arith.constant 0 : index
    %c16_24 = arith.constant 16 : index
    %48 = vector.load %arg22[%c0_23, %c16_24] : memref<8x32xbf16, #tpu.memory_space<vmem>>, vector<8x8xbf16>
    %cst_25 = arith.constant dense<0.000000e+00> : vector<8x8xf32>
    %49 = tpu.matmul %46, %47, %cst_25 {dimension_numbers = #tpu.dot_dimension_numbers<[1], [1], [0], [0], [0, 0, 1, 0], [], []>} : vector<8x8xbf16>, vector<8x8xbf16>, vector<8x8xf32> -> vector<8x8xf32>
    %cst_26 = arith.constant dense<0xFF800000> : vector<8xf32>
    %50 = vector.multi_reduction <maximumf>, %49, %cst_26 [1] : vector<8x8xf32> to vector<8xf32>
    %51 = vector.shape_cast %50 : vector<8xf32> to vector<8x1xf32>
    %52 = vector.broadcast %51 : vector<8x1xf32> to vector<8x8xf32>
    %53 = arith.subf %49, %52 : vector<8x8xf32>
    %54 = math.exp %53 : vector<8x8xf32>
    %cst_27 = arith.constant dense<0.000000e+00> : vector<8xf32>
    %55 = vector.multi_reduction <add>, %54, %cst_27 [1] : vector<8x8xf32> to vector<8xf32>
    %56 = vector.shape_cast %55 : vector<8xf32> to vector<8x1xf32>
    %57 = arith.truncf %54 : vector<8x8xf32> to vector<8x8xbf16>
    %cst_28 = arith.constant dense<0.000000e+00> : vector<8x8xf32>
    %58 = tpu.matmul %57, %48, %cst_28 {dimension_numbers = #tpu.dot_dimension_numbers<[1], [0], [0], [1], [0, 0, 1, 1], [], []>} : vector<8x8xbf16>, vector<8x8xbf16>, vector<8x8xf32> -> vector<8x8xf32>
    %59 = tpu.reciprocal %56 {approx = true} : vector<8x1xf32> -> vector<8x1xf32>
    %60 = vector.broadcast %59 : vector<8x1xf32> to vector<8x8xf32>
    %61 = arith.mulf %58, %60 : vector<8x8xf32>
    %62 = arith.truncf %61 : vector<8x8xf32> to vector<8x8xbf16>
    %63 = vector.extract_strided_slice %11 {offsets = [0, 24], sizes = [8, 8], strides = [1, 1]} : vector<8x32xbf16> to vector<8x8xbf16>
    %c0_29 = arith.constant 0 : index
    %c24 = arith.constant 24 : index
    %64 = vector.load %arg21[%c0_29, %c24] : memref<8x32xbf16, #tpu.memory_space<vmem>>, vector<8x8xbf16>
    %c0_30 = arith.constant 0 : index
    %c24_31 = arith.constant 24 : index
    %65 = vector.load %arg22[%c0_30, %c24_31] : memref<8x32xbf16, #tpu.memory_space<vmem>>, vector<8x8xbf16>
    %cst_32 = arith.constant dense<0.000000e+00> : vector<8x8xf32>
    %66 = tpu.matmul %63, %64, %cst_32 {dimension_numbers = #tpu.dot_dimension_numbers<[1], [1], [0], [0], [0, 0, 1, 0], [], []>} : vector<8x8xbf16>, vector<8x8xbf16>, vector<8x8xf32> -> vector<8x8xf32>
    %cst_33 = arith.constant dense<0xFF800000> : vector<8xf32>
    %67 = vector.multi_reduction <maximumf>, %66, %cst_33 [1] : vector<8x8xf32> to vector<8xf32>
    %68 = vector.shape_cast %67 : vector<8xf32> to vector<8x1xf32>
    %69 = vector.broadcast %68 : vector<8x1xf32> to vector<8x8xf32>
    %70 = arith.subf %66, %69 : vector<8x8xf32>
    %71 = math.exp %70 : vector<8x8xf32>
    %cst_34 = arith.constant dense<0.000000e+00> : vector<8xf32>
    %72 = vector.multi_reduction <add>, %71, %cst_34 [1] : vector<8x8xf32> to vector<8xf32>
    %73 = vector.shape_cast %72 : vector<8xf32> to vector<8x1xf32>
    %74 = arith.truncf %71 : vector<8x8xf32> to vector<8x8xbf16>
    %cst_35 = arith.constant dense<0.000000e+00> : vector<8x8xf32>
    %75 = tpu.matmul %74, %65, %cst_35 {dimension_numbers = #tpu.dot_dimension_numbers<[1], [0], [0], [1], [0, 0, 1, 1], [], []>} : vector<8x8xbf16>, vector<8x8xbf16>, vector<8x8xf32> -> vector<8x8xf32>
    %76 = tpu.reciprocal %73 {approx = true} : vector<8x1xf32> -> vector<8x1xf32>
    %77 = vector.broadcast %76 : vector<8x1xf32> to vector<8x8xf32>
    %78 = arith.mulf %75, %77 : vector<8x8xf32>
    %79 = arith.truncf %78 : vector<8x8xf32> to vector<8x8xbf16>
    %80 = tpu.concatenate %28, %45, %62, %79 in 1 : vector<8x8xbf16>, vector<8x8xbf16>, vector<8x8xbf16>, vector<8x8xbf16> -> vector<8x32xbf16>
    %c0_36 = arith.constant 0 : index
    %c0_37 = arith.constant 0 : index
    %81 = vector.load %arg10[%c0_36, %c0_37] : memref<32x32xbf16, #tpu.memory_space<vmem>>, vector<32x32xbf16>
    %cst_38 = arith.constant dense<0.000000e+00> : vector<8x32xf32>
    %82 = tpu.matmul %80, %81, %cst_38 {dimension_numbers = #tpu.dot_dimension_numbers<[1], [0], [0], [1], [0, 0, 1, 1], [], []>} : vector<8x32xbf16>, vector<32x32xbf16>, vector<8x32xf32> -> vector<8x32xf32>
    %c0_39 = arith.constant 0 : index
    %c0_40 = arith.constant 0 : index
    %83 = vector.load %arg11[%c0_39, %c0_40] : memref<1x32xf32, #tpu.memory_space<vmem>>, vector<1x32xf32>
    %84 = vector.broadcast %83 : vector<1x32xf32> to vector<8x32xf32>
    %85 = arith.addf %82, %84 : vector<8x32xf32>
    %86 = arith.addf %85, %4 : vector<8x32xf32>
    %cst_41 = arith.constant dense<0.000000e+00> : vector<8xf32>
    %87 = vector.multi_reduction <add>, %86, %cst_41 [1] : vector<8x32xf32> to vector<8xf32>
    %88 = vector.shape_cast %87 : vector<8xf32> to vector<8x1xf32>
    %cst_42 = arith.constant 3.200000e+01 : f32
    %89 = vector.broadcast %cst_42 : f32 to vector<8x1xf32>
    %90 = arith.divf %88, %89 : vector<8x1xf32>
    %91 = vector.broadcast %90 : vector<8x1xf32> to vector<8x32xf32>
    %92 = arith.subf %86, %91 : vector<8x32xf32>
    %93 = arith.mulf %92, %92 : vector<8x32xf32>
    %cst_43 = arith.constant dense<0.000000e+00> : vector<8xf32>
    %94 = vector.multi_reduction <add>, %93, %cst_43 [1] : vector<8x32xf32> to vector<8xf32>
    %95 = vector.shape_cast %94 : vector<8xf32> to vector<8x1xf32>
    %cst_44 = arith.constant 3.200000e+01 : f32
    %96 = vector.broadcast %cst_44 : f32 to vector<8x1xf32>
    %97 = arith.divf %95, %96 : vector<8x1xf32>
    %98 = vector.broadcast %90 : vector<8x1xf32> to vector<8x32xf32>
    %99 = arith.subf %86, %98 : vector<8x32xf32>
    %cst_45 = arith.constant 9.99999974E-6 : f32
    %100 = vector.broadcast %cst_45 : f32 to vector<8x1xf32>
    %101 = arith.addf %97, %100 : vector<8x1xf32>
    %102 = math.rsqrt %101 : vector<8x1xf32>
    %103 = vector.broadcast %102 : vector<8x1xf32> to vector<8x32xf32>
    %104 = arith.mulf %99, %103 : vector<8x32xf32>
    %c0_46 = arith.constant 0 : index
    %c0_47 = arith.constant 0 : index
    %105 = vector.load %arg12[%c0_46, %c0_47] : memref<1x32xf32, #tpu.memory_space<vmem>>, vector<1x32xf32>
    %106 = vector.broadcast %105 : vector<1x32xf32> to vector<8x32xf32>
    %107 = arith.mulf %104, %106 : vector<8x32xf32>
    %c0_48 = arith.constant 0 : index
    %c0_49 = arith.constant 0 : index
    %108 = vector.load %arg13[%c0_48, %c0_49] : memref<1x32xf32, #tpu.memory_space<vmem>>, vector<1x32xf32>
    %109 = vector.broadcast %108 : vector<1x32xf32> to vector<8x32xf32>
    %110 = arith.addf %107, %109 : vector<8x32xf32>
    %111 = arith.truncf %110 : vector<8x32xf32> to vector<8x32xbf16>
    %c0_50 = arith.constant 0 : index
    %c0_51 = arith.constant 0 : index
    %112 = vector.load %arg14[%c0_50, %c0_51] : memref<32x64xbf16, #tpu.memory_space<vmem>>, vector<32x64xbf16>
    %cst_52 = arith.constant dense<0.000000e+00> : vector<8x64xf32>
    %113 = tpu.matmul %111, %112, %cst_52 {dimension_numbers = #tpu.dot_dimension_numbers<[1], [0], [0], [1], [0, 0, 1, 1], [], []>} : vector<8x32xbf16>, vector<32x64xbf16>, vector<8x64xf32> -> vector<8x64xf32>
    %c0_53 = arith.constant 0 : index
    %c0_54 = arith.constant 0 : index
    %114 = vector.load %arg15[%c0_53, %c0_54] : memref<1x64xf32, #tpu.memory_space<vmem>>, vector<1x64xf32>
    %115 = vector.broadcast %114 : vector<1x64xf32> to vector<8x64xf32>
    %116 = arith.addf %113, %115 : vector<8x64xf32>
    %cst_55 = arith.constant 5.000000e-01 : f32
    %117 = vector.broadcast %cst_55 : f32 to vector<8x64xf32>
    %118 = arith.mulf %117, %116 : vector<8x64xf32>
    %cst_56 = arith.constant 0.707106769 : f32
    %119 = vector.broadcast %cst_56 : f32 to vector<8x64xf32>
    %120 = arith.mulf %116, %119 : vector<8x64xf32>
    %121 = math.erf %120 : vector<8x64xf32>
    %cst_57 = arith.constant 1.000000e+00 : f32
    %122 = vector.broadcast %cst_57 : f32 to vector<8x64xf32>
    %123 = arith.addf %122, %121 : vector<8x64xf32>
    %124 = arith.mulf %118, %123 : vector<8x64xf32>
    %125 = arith.truncf %124 : vector<8x64xf32> to vector<8x64xbf16>
    %c0_58 = arith.constant 0 : index
    %c0_59 = arith.constant 0 : index
    %126 = vector.load %arg16[%c0_58, %c0_59] : memref<64x32xbf16, #tpu.memory_space<vmem>>, vector<64x32xbf16>
    %cst_60 = arith.constant dense<0.000000e+00> : vector<8x32xf32>
    %127 = tpu.matmul %125, %126, %cst_60 {dimension_numbers = #tpu.dot_dimension_numbers<[1], [0], [0], [1], [0, 0, 1, 1], [], []>} : vector<8x64xbf16>, vector<64x32xbf16>, vector<8x32xf32> -> vector<8x32xf32>
    %c0_61 = arith.constant 0 : index
    %c0_62 = arith.constant 0 : index
    %128 = vector.load %arg17[%c0_61, %c0_62] : memref<1x32xf32, #tpu.memory_space<vmem>>, vector<1x32xf32>
    %129 = vector.broadcast %128 : vector<1x32xf32> to vector<8x32xf32>
    %130 = arith.addf %127, %129 : vector<8x32xf32>
    %131 = arith.addf %130, %110 : vector<8x32xf32>
    %cst_63 = arith.constant dense<0.000000e+00> : vector<8xf32>
    %132 = vector.multi_reduction <add>, %131, %cst_63 [1] : vector<8x32xf32> to vector<8xf32>
    %133 = vector.shape_cast %132 : vector<8xf32> to vector<8x1xf32>
    %cst_64 = arith.constant 3.200000e+01 : f32
    %134 = vector.broadcast %cst_64 : f32 to vector<8x1xf32>
    %135 = arith.divf %133, %134 : vector<8x1xf32>
    %136 = vector.broadcast %135 : vector<8x1xf32> to vector<8x32xf32>
    %137 = arith.subf %131, %136 : vector<8x32xf32>
    %138 = arith.mulf %137, %137 : vector<8x32xf32>
    %cst_65 = arith.constant dense<0.000000e+00> : vector<8xf32>
    %139 = vector.multi_reduction <add>, %138, %cst_65 [1] : vector<8x32xf32> to vector<8xf32>
    %140 = vector.shape_cast %139 : vector<8xf32> to vector<8x1xf32>
    %cst_66 = arith.constant 3.200000e+01 : f32
    %141 = vector.broadcast %cst_66 : f32 to vector<8x1xf32>
    %142 = arith.divf %140, %141 : vector<8x1xf32>
    %143 = vector.broadcast %135 : vector<8x1xf32> to vector<8x32xf32>
    %144 = arith.subf %131, %143 : vector<8x32xf32>
    %cst_67 = arith.constant 9.99999974E-6 : f32
    %145 = vector.broadcast %cst_67 : f32 to vector<8x1xf32>
    %146 = arith.addf %142, %145 : vector<8x1xf32>
    %147 = math.rsqrt %146 : vector<8x1xf32>
    %148 = vector.broadcast %147 : vector<8x1xf32> to vector<8x32xf32>
    %149 = arith.mulf %144, %148 : vector<8x32xf32>
    %c0_68 = arith.constant 0 : index
    %c0_69 = arith.constant 0 : index
    %150 = vector.load %arg18[%c0_68, %c0_69] : memref<1x32xf32, #tpu.memory_space<vmem>>, vector<1x32xf32>
    %151 = vector.broadcast %150 : vector<1x32xf32> to vector<8x32xf32>
    %152 = arith.mulf %149, %151 : vector<8x32xf32>
    %c0_70 = arith.constant 0 : index
    %c0_71 = arith.constant 0 : index
    %153 = vector.load %arg19[%c0_70, %c0_71] : memref<1x32xf32, #tpu.memory_space<vmem>>, vector<1x32xf32>
    %154 = vector.broadcast %153 : vector<1x32xf32> to vector<8x32xf32>
    %155 = arith.addf %152, %154 : vector<8x32xf32>
    %c0_72 = arith.constant 0 : index
    %c0_73 = arith.constant 0 : index
    %c0_74 = arith.constant 0 : index
    %156 = vector.load %arg20[%c0_72, %c0_73, %c0_74] : memref<1x8x32xf32, #tpu.memory_space<vmem>>, vector<1x8x32xf32>
    %157 = vector.shape_cast %156 : vector<1x8x32xf32> to vector<8x32xf32>
    %158 = vector.shape_cast %155 : vector<8x32xf32> to vector<1x8x32xf32>
    tpu.vector_store %arg20[%c0_72, %c0_73, %c0_74], %158 {strides = array<i32>} : memref<1x8x32xf32, #tpu.memory_space<vmem>>, vector<1x8x32xf32>,
    return
  }
  func.func @transform_0(%arg0: i32, %arg1: i32) -> (i32, i32, i32) {
    %c0_i32 = arith.constant 0 : i32
    %c0_i32_0 = arith.constant 0 : i32
    return %arg0, %arg1, %c0_i32 : i32, i32, i32
  }
  func.func @transform_1(%arg0: i32, %arg1: i32) -> (i32, i32, i32) {
    %c0_i32 = arith.constant 0 : i32
    %c0_i32_0 = arith.constant 0 : i32
    %c0_i32_1 = arith.constant 0 : i32
    return %arg0, %c0_i32, %c0_i32_0 : i32, i32, i32
  }
  func.func @transform_2(%arg0: i32, %arg1: i32) -> (i32, i32) {
    %c0_i32 = arith.constant 0 : i32
    %c0_i32_0 = arith.constant 0 : i32
    %c0_i32_1 = arith.constant 0 : i32
    return %c0_i32, %c0_i32_0 : i32, i32
  }
  func.func @transform_3(%arg0: i32, %arg1: i32) -> (i32, i32) {
    %c0_i32 = arith.constant 0 : i32
    %c0_i32_0 = arith.constant 0 : i32
    %c0_i32_1 = arith.constant 0 : i32
    return %c0_i32, %c0_i32_0 : i32, i32
  }
  func.func @transform_4(%arg0: i32, %arg1: i32) -> (i32, i32) {
    %c0_i32 = arith.constant 0 : i32
    %c0_i32_0 = arith.constant 0 : i32
    %c0_i32_1 = arith.constant 0 : i32
    return %c0_i32, %c0_i32_0 : i32, i32
  }
  func.func @transform_5(%arg0: i32, %arg1: i32) -> (i32, i32) {
    %c0_i32 = arith.constant 0 : i32
    %c0_i32_0 = arith.constant 0 : i32
    %c0_i32_1 = arith.constant 0 : i32
    return %c0_i32, %c0_i32_0 : i32, i32
  }
  func.func @transform_6(%arg0: i32, %arg1: i32) -> (i32, i32) {
    %c0_i32 = arith.constant 0 : i32
    %c0_i32_0 = arith.constant 0 : i32
    %c0_i32_1 = arith.constant 0 : i32
    return %c0_i32, %c0_i32_0 : i32, i32
  }
  func.func @transform_7(%arg0: i32, %arg1: i32) -> (i32, i32) {
    %c0_i32 = arith.constant 0 : i32
    %c0_i32_0 = arith.constant 0 : i32
    %c0_i32_1 = arith.constant 0 : i32
    return %c0_i32, %c0_i32_0 : i32, i32
  }
  func.func @transform_8(%arg0: i32, %arg1: i32) -> (i32, i32) {
    %c0_i32 = arith.constant 0 : i32
    %c0_i32_0 = arith.constant 0 : i32
    %c0_i32_1 = arith.constant 0 : i32
    return %c0_i32, %c0_i32_0 : i32, i32
  }
  func.func @transform_9(%arg0: i32, %arg1: i32) -> (i32, i32) {
    %c0_i32 = arith.constant 0 : i32
    %c0_i32_0 = arith.constant 0 : i32
    %c0_i32_1 = arith.constant 0 : i32
    return %c0_i32, %c0_i32_0 : i32, i32
  }
  func.func @transform_10(%arg0: i32, %arg1: i32) -> (i32, i32) {
    %c0_i32 = arith.constant 0 : i32
    %c0_i32_0 = arith.constant 0 : i32
    %c0_i32_1 = arith.constant 0 : i32
    return %c0_i32, %c0_i32_0 : i32, i32
  }
  func.func @transform_11(%arg0: i32, %arg1: i32) -> (i32, i32) {
    %c0_i32 = arith.constant 0 : i32
    %c0_i32_0 = arith.constant 0 : i32
    %c0_i32_1 = arith.constant 0 : i32
    return %c0_i32, %c0_i32_0 : i32, i32
  }
  func.func @transform_12(%arg0: i32, %arg1: i32) -> (i32, i32) {
    %c0_i32 = arith.constant 0 : i32
    %c0_i32_0 = arith.constant 0 : i32
    %c0_i32_1 = arith.constant 0 : i32
    return %c0_i32, %c0_i32_0 : i32, i32
  }
  func.func @transform_13(%arg0: i32, %arg1: i32) -> (i32, i32) {
    %c0_i32 = arith.constant 0 : i32
    %c0_i32_0 = arith.constant 0 : i32
    %c0_i32_1 = arith.constant 0 : i32
    return %c0_i32, %c0_i32_0 : i32, i32
  }
  func.func @transform_14(%arg0: i32, %arg1: i32) -> (i32, i32) {
    %c0_i32 = arith.constant 0 : i32
    %c0_i32_0 = arith.constant 0 : i32
    %c0_i32_1 = arith.constant 0 : i32
    return %c0_i32, %c0_i32_0 : i32, i32
  }
  func.func @transform_15(%arg0: i32, %arg1: i32) -> (i32, i32) {
    %c0_i32 = arith.constant 0 : i32
    %c0_i32_0 = arith.constant 0 : i32
    %c0_i32_1 = arith.constant 0 : i32
    return %c0_i32, %c0_i32_0 : i32, i32
  }
  func.func @transform_16(%arg0: i32, %arg1: i32) -> (i32, i32) {
    %c0_i32 = arith.constant 0 : i32
    %c0_i32_0 = arith.constant 0 : i32
    %c0_i32_1 = arith.constant 0 : i32
    return %c0_i32, %c0_i32_0 : i32, i32
  }
  func.func @transform_17(%arg0: i32, %arg1: i32) -> (i32, i32) {
    %c0_i32 = arith.constant 0 : i32
    %c0_i32_0 = arith.constant 0 : i32
    %c0_i32_1 = arith.constant 0 : i32
    return %c0_i32, %c0_i32_0 : i32, i32
  }
  func.func @transform_18(%arg0: i32, %arg1: i32) -> (i32, i32, i32) {
    %c0_i32 = arith.constant 0 : i32
    %c0_i32_0 = arith.constant 0 : i32
    return %arg0, %arg1, %c0_i32 : i32, i32, i32
  }
}

</mosaic_0001>

<llo_original>
// kernel: tpu_custom_call.1
$region0: #{tpu_custom_call.1}
  #allocation0 [shape = 'u32[]', space=smem, size = 0x4, offset = 0x4, fixed_abs, tag = 'smem constant byte address 0x4 - core index']
  #allocation1 [shape = 'u32[144,128]{1,0:T(1,128)}', space=vmem, size = 0x12000, scoped, tag = 'internal scratch']
  #allocation2 [shape = 'bf16[8,32]{1,0:T(8,128)(2,1)}', space=vmem, size = 0x800, scoped, tag = 'scratch operand']
  #allocation3 [shape = 'bf16[8,32]{1,0:T(8,128)(2,1)}', space=vmem, size = 0x800, scoped, tag = 'scratch operand']
  %s0 = inlined_call_operand.vmem [shape: f32[2,8,32], index: 0, kind: input, shape index: {}]
  %s1 = inlined_call_operand.hbm [shape: bf16[2,8,32], index: 1, kind: input, shape index: {}]
  %s2 = inlined_call_operand.vmem [shape: bf16[32,32], index: 2, kind: input, shape index: {}]
  %s3 = inlined_call_operand.vmem [shape: bf16[32,32], index: 3, kind: input, shape index: {}]
  %s4 = inlined_call_operand.hbm [shape: bf16[32,32], index: 4, kind: input, shape index: {}]
  %s5 = inlined_call_operand.vmem [shape: f32[1,32], index: 5, kind: input, shape index: {}]
  %s6 = inlined_call_operand.vmem [shape: f32[1,32], index: 6, kind: input, shape index: {}]
  %s7 = inlined_call_operand.hbm [shape: f32[1,32], index: 7, kind: input, shape index: {}]
  %s8 = inlined_call_operand.hbm [shape: bf16[32,32], index: 8, kind: input, shape index: {}]
  %s9 = inlined_call_operand.hbm [shape: f32[1,32], index: 9, kind: input, shape index: {}]
  %s10 = inlined_call_operand.vmem [shape: f32[1,32], index: 10, kind: input, shape index: {}]
  %s11 = inlined_call_operand.vmem [shape: f32[1,32], index: 11, kind: input, shape index: {}]
  %s12 = inlined_call_operand.vmem [shape: bf16[32,64], index: 12, kind: input, shape index: {}]
  %s13 = inlined_call_operand.vmem [shape: f32[1,64], index: 13, kind: input, shape index: {}]
  %s14 = inlined_call_operand.vmem [shape: bf16[64,32], index: 14, kind: input, shape index: {}]
  %s15 = inlined_call_operand.vmem [shape: f32[1,32], index: 15, kind: input, shape index: {}]
  %s16 = inlined_call_operand.vmem [shape: f32[1,32], index: 16, kind: input, shape index: {}]
  %s17 = inlined_call_operand.vmem [shape: f32[1,32], index: 17, kind: input, shape index: {}]
  %s18 = inlined_call_operand.hbm [shape: f32[2,8,32], index: 18, kind: output, shape index: {}]
  %s19 = sld [smem:[#allocation0]]
  $region129: #{tpu_custom_call.1} parent=0
    _
  %s21 = ssub.s32 1, %s19
  %s22 = scalar_select 0, %s21, %s19
  $region1: #{tpu_custom_call.1} parent=0
    #allocation4 [shape = 'u8[4096]{0}', space=vmem, size = 0x1000, scoped, tag = 'input window, operand 1']
    #allocation5 [shape = 's32[2]{0}', space=sflag, size = 0x8, scoped, tag = 'scoped memory for tpu_custom_call.1']
    #allocation6 [shape = 's32[2]{0}', space=sflag, size = 0x8, scoped, tag = 'scoped memory for tpu_custom_call.1']
    #allocation7 [shape = 'u8[8192]{0}', space=vmem, size = 0x2000, scoped, tag = 'input window, operand 4, single buffered']
    #allocation8 [shape = 's32[1]{0}', space=sflag, size = 0x4, scoped, tag = 'scoped memory for tpu_custom_call.1']
    #allocation9 [shape = 'u8[512]{0}', space=vmem, size = 0x400, scoped, tag = 'input window, operand 7, single buffered']
    #allocation10 [shape = 'u8[8192]{0}', space=vmem, size = 0x2000, scoped, tag = 'input window, operand 8, single buffered']
    #allocation11 [shape = 's32[1]{0}', space=sflag, size = 0x4, scoped, tag = 'scoped memory for tpu_custom_call.1']
    #allocation12 [shape = 'u8[512]{0}', space=vmem, size = 0x400, scoped, tag = 'input window, operand 9, single buffered']
    #allocation13 [shape = 'u8[8192]{0}', space=vmem, size = 0x2000, scoped, tag = 'output window, operand 0']
    %23 = vsyncpa [#allocation5], 0
    %s24 = scalar_lea.sflag [#allocation5], 1
    %25 = vsyncpa %s24, 0
    %26 = vsyncpa [#allocation8], 0
    %27 = vsyncpa [#allocation11], 0
    %28 = vsyncpa [#allocation6], 0
    %s29 = scalar_lea.sflag [#allocation6], 1
    %30 = vsyncpa %s29, 0
    loop: start=0, step=1, limit=4
    $region2: #{tpu_custom_call.1} parent=1 // loop_pre_header
      _
    $region3: #{tpu_custom_call.1} parent=1 // loop_header
      %s32 = sphi 0, %s36
      %p33 = scmp.ge.s32.totalorder %s32, 4
      %s39 = sphi 0, %s51
      %s40 = sphi 0, %s47
      %s41 = sphi 0, %s39
      %s42 = sphi 0, %s40
      %s43 = sphi 0, %s41
      %s44 = sphi 0, %s42
      %s56 = sphi 0, %s58
      %s59 = sphi 0, %s56
      %s60 = sphi 0, %s59
      %s76 = sphi 0, %s60
      %s82 = sphi 0, %s84
      %s85 = sphi 0, %s82
      %s86 = sphi 0, %s85
      %s102 = sphi 0, %s86
      %s106 = sphi 0, %s106
      %s108 = sphi 0, %s106
      %s109 = sphi 0, %s108
      %s123 = sphi 0, %s109
      %s127 = sphi 0, %s127
      %s129 = sphi 0, %s127
      %s130 = sphi 0, %s129
      %s144 = sphi 0, %s130
      %s148 = sphi 0, %s148
      %s150 = sphi 0, %s148
      %s151 = sphi 0, %s150
      %s165 = sphi 0, %s151
      %s169 = sphi 0, %s169
      %s171 = sphi 0, %s169
      %s172 = sphi 0, %s171
      %s186 = sphi 0, %s172
      %s190 = sphi 0, %s190
      %s192 = sphi 0, %s190
      %s193 = sphi 0, %s192
      %s207 = sphi 0, %s193
      %s211 = sphi 0, %s211
      %s213 = sphi 0, %s211
      %s214 = sphi 0, %s213
      %s228 = sphi 0, %s214
      %s232 = sphi 0, %s232
      %s234 = sphi 0, %s232
      %s235 = sphi 0, %s234
      %s249 = sphi 0, %s235
      %s253 = sphi 0, %s253
      %s255 = sphi 0, %s253
      %s256 = sphi 0, %s255
      %s270 = sphi 0, %s256
      %s274 = sphi 0, %s274
      %s276 = sphi 0, %s274
      %s277 = sphi 0, %s276
      %s291 = sphi 0, %s277
      %s295 = sphi 0, %s295
      %s297 = sphi 0, %s295
      %s298 = sphi 0, %s297
      %s312 = sphi 0, %s298
      %s316 = sphi 0, %s316
      %s318 = sphi 0, %s316
      %s319 = sphi 0, %s318
      %s333 = sphi 0, %s319
      %s337 = sphi 0, %s337
      %s339 = sphi 0, %s337
      %s340 = sphi 0, %s339
      %s354 = sphi 0, %s340
      %s358 = sphi 0, %s358
      %s360 = sphi 0, %s358
      %s361 = sphi 0, %s360
      %s375 = sphi 0, %s361
      %s379 = sphi 0, %s379
      %s381 = sphi 0, %s379
      %s382 = sphi 0, %s381
      %s396 = sphi 0, %s382
      %s400 = sphi 0, %s400
      %s402 = sphi 0, %s400
      %s403 = sphi 0, %s402
      %s417 = sphi 0, %s403
      %s421 = sphi 0, %s421
      %s423 = sphi 0, %s421
      %s424 = sphi 0, %s423
      %s438 = sphi 0, %s424
      %s446 = sphi 0, %s448
      %s449 = sphi 0, %s446
      %s450 = sphi 0, %s449
      %s466 = sphi 0, %s450
    $region4: #{tpu_custom_call.1} parent=1 // loop_header_branch
      %35 = sbr.rel (%p33) target = $region8
    $region5: #{tpu_custom_call.1} parent=1 // loop_body
      %s37 = ssub.s32 %s32, 1
      %s38 = ssub.s32 %s32, 2
      %s45 = sadd.s32 1, %s40
      %p46 = scmp.ge.s32.totalorder %s45, 1
      %s47 = scalar_select %p46, 0, %s45
      %s48 = sadd.s32 1, %s39
      %s49 = scalar_select %p46, %s48, %s39
      %p50 = scmp.ge.s32.totalorder %s49, 2
      %s51 = scalar_select %p50, 0, %s49
      %s52 = ssub.s32 %s39, %s51
      %s53 = ssub.s32 %s40, %s47
      %s54 = sor.u32 %s52, %s53
      %p55 = scmp.eq.s32.totalorder %s54, 0
      %s57 = sadd.s32 %s56, 1
      %s58 = scalar_select %p55, %s56, %s57
      %p61 = pneg %p55
      %p62 = scmp.eq.s32.totalorder %s32, 1
      %p63 = por %p61, %p62
      %p64 = scmp.ne.s32.totalorder %s56, %s59
      %p65 = scmp.eq.s32.totalorder %s32, 0
      %p66 = por %p64, %p65
      %p67 = scmp.ne.s32.totalorder %s56, %s59
      %p68 = scmp.eq.s32.totalorder %s37, 1
      %p69 = por %p67, %p68
      %p70 = scmp.ne.s32.totalorder %s59, %s60
      %p71 = scmp.eq.s32.totalorder %s37, 0
      %p72 = por %p70, %p71
      %p73 = scmp.ne.s32.totalorder %s59, %s60
      %p74 = scmp.eq.s32.totalorder %s38, 1
      %p75 = por %p73, %p74
      %p77 = scmp.ne.s32.totalorder %s60, %s76
      %p78 = scmp.eq.s32.totalorder %s38, 0
      %p79 = por %p77, %p78
      %s80 = ssub.s32 %s39, %s51
      %p81 = scmp.eq.s32.totalorder %s80, 0
      %s83 = sadd.s32 %s82, 1
      %s84 = scalar_select %p81, %s82, %s83
      %p87 = pneg %p81
      %p88 = scmp.eq.s32.totalorder %s32, 1
      %p89 = por %p87, %p88
      %p90 = scmp.ne.s32.totalorder %s82, %s85
      %p91 = scmp.eq.s32.totalorder %s32, 0
      %p92 = por %p90, %p91
      %p93 = scmp.ne.s32.totalorder %s82, %s85
      %p94 = scmp.eq.s32.totalorder %s37, 1
      %p95 = por %p93, %p94
      %p96 = scmp.ne.s32.totalorder %s85, %s86
      %p97 = scmp.eq.s32.totalorder %s37, 0
      %p98 = por %p96, %p97
      %p99 = scmp.ne.s32.totalorder %s85, %s86
      %p100 = scmp.eq.s32.totalorder %s38, 1
      %p101 = por %p99, %p100
      %p103 = scmp.ne.s32.totalorder %s86, %s102
      %p104 = scmp.eq.s32.totalorder %s38, 0
      %p105 = por %p103, %p104
      %s107 = sadd.s32 %s106, 1
      %p110 = scmp.eq.s32.totalorder %s32, 1
      %p111 = scmp.ne.s32.totalorder %s106, %s108
      %p112 = scmp.eq.s32.totalorder %s32, 0
      %p113 = por %p111, %p112
      %p114 = scmp.ne.s32.totalorder %s106, %s108
      %p115 = scmp.eq.s32.totalorder %s37, 1
      %p116 = por %p114, %p115
      %p117 = scmp.ne.s32.totalorder %s108, %s109
      %p118 = scmp.eq.s32.totalorder %s37, 0
      %p119 = por %p117, %p118
      %p120 = scmp.ne.s32.totalorder %s108, %s109
      %p121 = scmp.eq.s32.totalorder %s38, 1
      %p122 = por %p120, %p121
      %p124 = scmp.ne.s32.totalorder %s109, %s123
      %p125 = scmp.eq.s32.totalorder %s38, 0
      %p126 = por %p124, %p125
      %s128 = sadd.s32 %s127, 1
      %p131 = scmp.eq.s32.totalorder %s32, 1
      %p132 = scmp.ne.s32.totalorder %s127, %s129
      %p133 = scmp.eq.s32.totalorder %s32, 0
      %p134 = por %p132, %p133
      %p135 = scmp.ne.s32.totalorder %s127, %s129
      %p136 = scmp.eq.s32.totalorder %s37, 1
      %p137 = por %p135, %p136
      %p138 = scmp.ne.s32.totalorder %s129, %s130
      %p139 = scmp.eq.s32.totalorder %s37, 0
      %p140 = por %p138, %p139
      %p141 = scmp.ne.s32.totalorder %s129, %s130
      %p142 = scmp.eq.s32.totalorder %s38, 1
      %p143 = por %p141, %p142
      %p145 = scmp.ne.s32.totalorder %s130, %s144
      %p146 = scmp.eq.s32.totalorder %s38, 0
      %p147 = por %p145, %p146
      %s149 = sadd.s32 %s148, 1
      %p152 = scmp.eq.s32.totalorder %s32, 1
      %p153 = scmp.ne.s32.totalorder %s148, %s150
      %p154 = scmp.eq.s32.totalorder %s32, 0
      %p155 = por %p153, %p154
      %p156 = scmp.ne.s32.totalorder %s148, %s150
      %p157 = scmp.eq.s32.totalorder %s37, 1
      %p158 = por %p156, %p157
      %p159 = scmp.ne.s32.totalorder %s150, %s151
      %p160 = scmp.eq.s32.totalorder %s37, 0
      %p161 = por %p159, %p160
      %p162 = scmp.ne.s32.totalorder %s150, %s151
      %p163 = scmp.eq.s32.totalorder %s38, 1
      %p164 = por %p162, %p163
      %p166 = scmp.ne.s32.totalorder %s151, %s165
      %p167 = scmp.eq.s32.totalorder %s38, 0
      %p168 = por %p166, %p167
      %s170 = sadd.s32 %s169, 1
      %p173 = scmp.eq.s32.totalorder %s32, 1
      %p174 = scmp.ne.s32.totalorder %s169, %s171
      %p175 = scmp.eq.s32.totalorder %s32, 0
      %p176 = por %p174, %p175
      %p177 = scmp.ne.s32.totalorder %s169, %s171
      %p178 = scmp.eq.s32.totalorder %s37, 1
      %p179 = por %p177, %p178
      %p180 = scmp.ne.s32.totalorder %s171, %s172
      %p181 = scmp.eq.s32.totalorder %s37, 0
      %p182 = por %p180, %p181
      %p183 = scmp.ne.s32.totalorder %s171, %s172
      %p184 = scmp.eq.s32.totalorder %s38, 1
      %p185 = por %p183, %p184
      %p187 = scmp.ne.s32.totalorder %s172, %s186
      %p188 = scmp.eq.s32.totalorder %s38, 0
      %p189 = por %p187, %p188
      %s191 = sadd.s32 %s190, 1
      %p194 = scmp.eq.s32.totalorder %s32, 1
      %p195 = scmp.ne.s32.totalorder %s190, %s192
      %p196 = scmp.eq.s32.totalorder %s32, 0
      %p197 = por %p195, %p196
      %p198 = scmp.ne.s32.totalorder %s190, %s192
      %p199 = scmp.eq.s32.totalorder %s37, 1
      %p200 = por %p198, %p199
      %p201 = scmp.ne.s32.totalorder %s192, %s193
      %p202 = scmp.eq.s32.totalorder %s37, 0
      %p203 = por %p201, %p202
      %p204 = scmp.ne.s32.totalorder %s192, %s193
      %p205 = scmp.eq.s32.totalorder %s38, 1
      %p206 = por %p204, %p205
      %p208 = scmp.ne.s32.totalorder %s193, %s207
      %p209 = scmp.eq.s32.totalorder %s38, 0
      %p210 = por %p208, %p209
      %s212 = sadd.s32 %s211, 1
      %p215 = scmp.eq.s32.totalorder %s32, 1
      %p216 = scmp.ne.s32.totalorder %s211, %s213
      %p217 = scmp.eq.s32.totalorder %s32, 0
      %p218 = por %p216, %p217
      %p219 = scmp.ne.s32.totalorder %s211, %s213
      %p220 = scmp.eq.s32.totalorder %s37, 1
      %p221 = por %p219, %p220
      %p222 = scmp.ne.s32.totalorder %s213, %s214
      %p223 = scmp.eq.s32.totalorder %s37, 0
      %p224 = por %p222, %p223
      %p225 = scmp.ne.s32.totalorder %s213, %s214
      %p226 = scmp.eq.s32.totalorder %s38, 1
      %p227 = por %p225, %p226
      %p229 = scmp.ne.s32.totalorder %s214, %s228
      %p230 = scmp.eq.s32.totalorder %s38, 0
      %p231 = por %p229, %p230
      %s233 = sadd.s32 %s232, 1
      %p236 = scmp.eq.s32.totalorder %s32, 1
      %p237 = scmp.ne.s32.totalorder %s232, %s234
      %p238 = scmp.eq.s32.totalorder %s32, 0
      %p239 = por %p237, %p238
      %p240 = scmp.ne.s32.totalorder %s232, %s234
      %p241 = scmp.eq.s32.totalorder %s37, 1
      %p242 = por %p240, %p241
      %p243 = scmp.ne.s32.totalorder %s234, %s235
      %p244 = scmp.eq.s32.totalorder %s37, 0
      %p245 = por %p243, %p244
      %p246 = scmp.ne.s32.totalorder %s234, %s235
      %p247 = scmp.eq.s32.totalorder %s38, 1
      %p248 = por %p246, %p247
      %p250 = scmp.ne.s32.totalorder %s235, %s249
      %p251 = scmp.eq.s32.totalorder %s38, 0
      %p252 = por %p250, %p251
      %s254 = sadd.s32 %s253, 1
      %p257 = scmp.eq.s32.totalorder %s32, 1
      %p258 = scmp.ne.s32.totalorder %s253, %s255
      %p259 = scmp.eq.s32.totalorder %s32, 0
      %p260 = por %p258, %p259
      %p261 = scmp.ne.s32.totalorder %s253, %s255
      %p262 = scmp.eq.s32.totalorder %s37, 1
      %p263 = por %p261, %p262
      %p264 = scmp.ne.s32.totalorder %s255, %s256
      %p265 = scmp.eq.s32.totalorder %s37, 0
      %p266 = por %p264, %p265
      %p267 = scmp.ne.s32.totalorder %s255, %s256
      %p268 = scmp.eq.s32.totalorder %s38, 1
      %p269 = por %p267, %p268
      %p271 = scmp.ne.s32.totalorder %s256, %s270
      %p272 = scmp.eq.s32.totalorder %s38, 0
      %p273 = por %p271, %p272
      %s275 = sadd.s32 %s274, 1
      %p278 = scmp.eq.s32.totalorder %s32, 1
      %p279 = scmp.ne.s32.totalorder %s274, %s276
      %p280 = scmp.eq.s32.totalorder %s32, 0
      %p281 = por %p279, %p280
      %p282 = scmp.ne.s32.totalorder %s274, %s276
      %p283 = scmp.eq.s32.totalorder %s37, 1
      %p284 = por %p282, %p283
      %p285 = scmp.ne.s32.totalorder %s276, %s277
      %p286 = scmp.eq.s32.totalorder %s37, 0
      %p287 = por %p285, %p286
      %p288 = scmp.ne.s32.totalorder %s276, %s277
      %p289 = scmp.eq.s32.totalorder %s38, 1
      %p290 = por %p288, %p289
      %p292 = scmp.ne.s32.totalorder %s277, %s291
      %p293 = scmp.eq.s32.totalorder %s38, 0
      %p294 = por %p292, %p293
      %s296 = sadd.s32 %s295, 1
      %p299 = scmp.eq.s32.totalorder %s32, 1
      %p300 = scmp.ne.s32.totalorder %s295, %s297
      %p301 = scmp.eq.s32.totalorder %s32, 0
      %p302 = por %p300, %p301
      %p303 = scmp.ne.s32.totalorder %s295, %s297
      %p304 = scmp.eq.s32.totalorder %s37, 1
      %p305 = por %p303, %p304
      %p306 = scmp.ne.s32.totalorder %s297, %s298
      %p307 = scmp.eq.s32.totalorder %s37, 0
      %p308 = por %p306, %p307
      %p309 = scmp.ne.s32.totalorder %s297, %s298
      %p310 = scmp.eq.s32.totalorder %s38, 1
      %p311 = por %p309, %p310
      %p313 = scmp.ne.s32.totalorder %s298, %s312
      %p314 = scmp.eq.s32.totalorder %s38, 0
      %p315 = por %p313, %p314
      %s317 = sadd.s32 %s316, 1
      %p320 = scmp.eq.s32.totalorder %s32, 1
      %p321 = scmp.ne.s32.totalorder %s316, %s318
      %p322 = scmp.eq.s32.totalorder %s32, 0
      %p323 = por %p321, %p322
      %p324 = scmp.ne.s32.totalorder %s316, %s318
      %p325 = scmp.eq.s32.totalorder %s37, 1
      %p326 = por %p324, %p325
      %p327 = scmp.ne.s32.totalorder %s318, %s319
      %p328 = scmp.eq.s32.totalorder %s37, 0
      %p329 = por %p327, %p328
      %p330 = scmp.ne.s32.totalorder %s318, %s319
      %p331 = scmp.eq.s32.totalorder %s38, 1
      %p332 = por %p330, %p331
      %p334 = scmp.ne.s32.totalorder %s319, %s333
      %p335 = scmp.eq.s32.totalorder %s38, 0
      %p336 = por %p334, %p335
      %s338 = sadd.s32 %s337, 1
      %p341 = scmp.eq.s32.totalorder %s32, 1
      %p342 = scmp.ne.s32.totalorder %s337, %s339
      %p343 = scmp.eq.s32.totalorder %s32, 0
      %p344 = por %p342, %p343
      %p345 = scmp.ne.s32.totalorder %s337, %s339
      %p346 = scmp.eq.s32.totalorder %s37, 1
      %p347 = por %p345, %p346
      %p348 = scmp.ne.s32.totalorder %s339, %s340
      %p349 = scmp.eq.s32.totalorder %s37, 0
      %p350 = por %p348, %p349
      %p351 = scmp.ne.s32.totalorder %s339, %s340
      %p352 = scmp.eq.s32.totalorder %s38, 1
      %p353 = por %p351, %p352
      %p355 = scmp.ne.s32.totalorder %s340, %s354
      %p356 = scmp.eq.s32.totalorder %s38, 0
      %p357 = por %p355, %p356
      %s359 = sadd.s32 %s358, 1
      %p362 = scmp.eq.s32.totalorder %s32, 1
      %p363 = scmp.ne.s32.totalorder %s358, %s360
      %p364 = scmp.eq.s32.totalorder %s32, 0
      %p365 = por %p363, %p364
      %p366 = scmp.ne.s32.totalorder %s358, %s360
      %p367 = scmp.eq.s32.totalorder %s37, 1
      %p368 = por %p366, %p367
      %p369 = scmp.ne.s32.totalorder %s360, %s361
      %p370 = scmp.eq.s32.totalorder %s37, 0
      %p371 = por %p369, %p370
      %p372 = scmp.ne.s32.totalorder %s360, %s361
      %p373 = scmp.eq.s32.totalorder %s38, 1
      %p374 = por %p372, %p373
      %p376 = scmp.ne.s32.totalorder %s361, %s375
      %p377 = scmp.eq.s32.totalorder %s38, 0
      %p378 = por %p376, %p377
      %s380 = sadd.s32 %s379, 1
      %p383 = scmp.eq.s32.totalorder %s32, 1
      %p384 = scmp.ne.s32.totalorder %s379, %s381
      %p385 = scmp.eq.s32.totalorder %s32, 0
      %p386 = por %p384, %p385
      %p387 = scmp.ne.s32.totalorder %s379, %s381
      %p388 = scmp.eq.s32.totalorder %s37, 1
      %p389 = por %p387, %p388
      %p390 = scmp.ne.s32.totalorder %s381, %s382
      %p391 = scmp.eq.s32.totalorder %s37, 0
      %p392 = por %p390, %p391
      %p393 = scmp.ne.s32.totalorder %s381, %s382
      %p394 = scmp.eq.s32.totalorder %s38, 1
      %p395 = por %p393, %p394
      %p397 = scmp.ne.s32.totalorder %s382, %s396
      %p398 = scmp.eq.s32.totalorder %s38, 0
      %p399 = por %p397, %p398
      %s401 = sadd.s32 %s400, 1
      %p404 = scmp.eq.s32.totalorder %s32, 1
      %p405 = scmp.ne.s32.totalorder %s400, %s402
      %p406 = scmp.eq.s32.totalorder %s32, 0
      %p407 = por %p405, %p406
      %p408 = scmp.ne.s32.totalorder %s400, %s402
      %p409 = scmp.eq.s32.totalorder %s37, 1
      %p410 = por %p408, %p409
      %p411 = scmp.ne.s32.totalorder %s402, %s403
      %p412 = scmp.eq.s32.totalorder %s37, 0
      %p413 = por %p411, %p412
      %p414 = scmp.ne.s32.totalorder %s402, %s403
      %p415 = scmp.eq.s32.totalorder %s38, 1
      %p416 = por %p414, %p415
      %p418 = scmp.ne.s32.totalorder %s403, %s417
      %p419 = scmp.eq.s32.totalorder %s38, 0
      %p420 = por %p418, %p419
      %s422 = sadd.s32 %s421, 1
      %p425 = scmp.eq.s32.totalorder %s32, 1
      %p426 = scmp.ne.s32.totalorder %s421, %s423
      %p427 = scmp.eq.s32.totalorder %s32, 0
      %p428 = por %p426, %p427
      %p429 = scmp.ne.s32.totalorder %s421, %s423
      %p430 = scmp.eq.s32.totalorder %s37, 1
      %p431 = por %p429, %p430
      %p432 = scmp.ne.s32.totalorder %s423, %s424
      %p433 = scmp.eq.s32.totalorder %s37, 0
      %p434 = por %p432, %p433
      %p435 = scmp.ne.s32.totalorder %s423, %s424
      %p436 = scmp.eq.s32.totalorder %s38, 1
      %p437 = por %p435, %p436
      %p439 = scmp.ne.s32.totalorder %s424, %s438
      %p440 = scmp.eq.s32.totalorder %s38, 0
      %p441 = por %p439, %p440
      %s442 = ssub.s32 %s39, %s51
      %s443 = ssub.s32 %s40, %s47
      %s444 = sor.u32 %s442, %s443
      %p445 = scmp.eq.s32.totalorder %s444, 0
      %s447 = sadd.s32 %s446, 1
      %s448 = scalar_select %p445, %s446, %s447
      %p451 = pneg %p445
      %p452 = scmp.eq.s32.totalorder %s32, 1
      %p453 = por %p451, %p452
      %p454 = scmp.ne.s32.totalorder %s446, %s449
      %p455 = scmp.eq.s32.totalorder %s32, 0
      %p456 = por %p454, %p455
      %p457 = scmp.ne.s32.totalorder %s446, %s449
      %p458 = scmp.eq.s32.totalorder %s37, 1
      %p459 = por %p457, %p458
      %p460 = scmp.ne.s32.totalorder %s449, %s450
      %p461 = scmp.eq.s32.totalorder %s37, 0
      %p462 = por %p460, %p461
      %p463 = scmp.ne.s32.totalorder %s449, %s450
      %p464 = scmp.eq.s32.totalorder %s38, 1
      %p465 = por %p463, %p464
      %p467 = scmp.ne.s32.totalorder %s450, %s466
      %p468 = scmp.eq.s32.totalorder %s38, 0
      %p469 = por %p467, %p468
      %p470 = scmp.le.s32.totalorder 1, %s32
      %p471 = scmp.lt.s32.totalorder %s32, 3
      %p472 = pnand %p470, %p471
      %p473 = pneg %p472
      // Predicated region
      $region9: #{tpu_custom_call.1} parent=5 // pred_check
        _
      $region10: #{tpu_custom_call.1} parent=5 // pred_check_branch
        %475 = sbr.rel (%p472) target = $region12
      $region11: #{tpu_custom_call.1} parent=5 // pred_region
        %s476 = ssub.s32 %s32, 1
        // Predicated region
        $region13: #{tpu_custom_call.1} parent=11 // pred_check
          %p477 = pneg %p119
        $region14: #{tpu_custom_call.1} parent=11 // pred_check_branch
          %479 = sbr.rel (%p477) target = $region16
        $region15: #{tpu_custom_call.1} parent=11 // pred_region
          _
        $region16: #{tpu_custom_call.1} parent=11 // pred_fallthru
          _
        // Predicated region
        $region17: #{tpu_custom_call.1} parent=11 // pred_check
          %p480 = pneg %p140
        $region18: #{tpu_custom_call.1} parent=11 // pred_check_branch
          %482 = sbr.rel (%p480) target = $region20
        $region19: #{tpu_custom_call.1} parent=11 // pred_region
          _
        $region20: #{tpu_custom_call.1} parent=11 // pred_fallthru
          _
        // Predicated region
        $region21: #{tpu_custom_call.1} parent=11 // pred_check
          %p483 = pneg %p161
        $region22: #{tpu_custom_call.1} parent=11 // pred_check_branch
          %485 = sbr.rel (%p483) target = $region24
        $region23: #{tpu_custom_call.1} parent=11 // pred_region
          %s487 = ssub.s32 256, 256
          %488 = vsyncadd [#allocation8], %s487
          %s489 = sshll.u32 [#allocation7], 4
          %s490 = int_to_ptr.vmem [resolvable:$true] %s489
          %495 = dma.hbm_to_vmem [thread:$0]  %s4, 256, %s490, [#allocation8], 64, 64, 4
        $region24: #{tpu_custom_call.1} parent=11 // pred_fallthru
          _
        // Predicated region
        $region25: #{tpu_custom_call.1} parent=11 // pred_check
          %p496 = pneg %p182
        $region26: #{tpu_custom_call.1} parent=11 // pred_check_branch
          %498 = sbr.rel (%p496) target = $region28
        $region27: #{tpu_custom_call.1} parent=11 // pred_region
          _
        $region28: #{tpu_custom_call.1} parent=11 // pred_fallthru
          _
        // Predicated region
        $region29: #{tpu_custom_call.1} parent=11 // pred_check
          %p499 = pneg %p203
        $region30: #{tpu_custom_call.1} parent=11 // pred_check_branch
          %501 = sbr.rel (%p499) target = $region32
        $region31: #{tpu_custom_call.1} parent=11 // pred_region
          _
        $region32: #{tpu_custom_call.1} parent=11 // pred_fallthru
          _
        // Predicated region
        $region33: #{tpu_custom_call.1} parent=11 // pred_check
          %p502 = pneg %p224
        $region34: #{tpu_custom_call.1} parent=11 // pred_check_branch
          %504 = sbr.rel (%p502) target = $region36
        $region35: #{tpu_custom_call.1} parent=11 // pred_region
          %s506 = ssub.s32 16, 16
          %507 = vsyncadd [#allocation8], %s506
          %s509 = sshll.u32 [#allocation9], 4
          %s510 = int_to_ptr.vmem [resolvable:$true] %s509
          %512 = dma.hbm_to_vmem [thread:$0]  %s7, 16, %s510, [#allocation8]
        $region36: #{tpu_custom_call.1} parent=11 // pred_fallthru
          _
        // Predicated region
        $region37: #{tpu_custom_call.1} parent=11 // pred_check
          %p513 = pneg %p245
        $region38: #{tpu_custom_call.1} parent=11 // pred_check_branch
          %515 = sbr.rel (%p513) target = $region40
        $region39: #{tpu_custom_call.1} parent=11 // pred_region
          %s517 = ssub.s32 256, 256
          %518 = vsyncadd [#allocation11], %s517
          %s519 = sshll.u32 [#allocation10], 4
          %s520 = int_to_ptr.vmem [resolvable:$true] %s519
          %525 = dma.hbm_to_vmem [thread:$0]  %s8, 256, %s520, [#allocation11], 64, 64, 4
        $region40: #{tpu_custom_call.1} parent=11 // pred_fallthru
          _
        // Predicated region
        $region41: #{tpu_custom_call.1} parent=11 // pred_check
          %p526 = pneg %p266
        $region42: #{tpu_custom_call.1} parent=11 // pred_check_branch
          %528 = sbr.rel (%p526) target = $region44
        $region43: #{tpu_custom_call.1} parent=11 // pred_region
          %s530 = ssub.s32 16, 16
          %531 = vsyncadd [#allocation11], %s530
          %s533 = sshll.u32 [#allocation12], 4
          %s534 = int_to_ptr.vmem [resolvable:$true] %s533
          %536 = dma.hbm_to_vmem [thread:$0]  %s9, 16, %s534, [#allocation11]
        $region44: #{tpu_custom_call.1} parent=11 // pred_fallthru
          _
        // Predicated region
        $region45: #{tpu_custom_call.1} parent=11 // pred_check
          %p537 = pneg %p287
        $region46: #{tpu_custom_call.1} parent=11 // pred_check_branch
          %539 = sbr.rel (%p537) target = $region48
        $region47: #{tpu_custom_call.1} parent=11 // pred_region
          _
        $region48: #{tpu_custom_call.1} parent=11 // pred_fallthru
          _
        // Predicated region
        $region49: #{tpu_custom_call.1} parent=11 // pred_check
          %p540 = pneg %p308
        $region50: #{tpu_custom_call.1} parent=11 // pred_check_branch
          %542 = sbr.rel (%p540) target = $region52
        $region51: #{tpu_custom_call.1} parent=11 // pred_region
          _
        $region52: #{tpu_custom_call.1} parent=11 // pred_fallthru
          _
        // Predicated region
        $region53: #{tpu_custom_call.1} parent=11 // pred_check
          %p543 = pneg %p329
        $region54: #{tpu_custom_call.1} parent=11 // pred_check_branch
          %545 = sbr.rel (%p543) target = $region56
        $region55: #{tpu_custom_call.1} parent=11 // pred_region
          _
        $region56: #{tpu_custom_call.1} parent=11 // pred_fallthru
          _
        // Predicated region
        $region57: #{tpu_custom_call.1} parent=11 // pred_check
          %p546 = pneg %p350
        $region58: #{tpu_custom_call.1} parent=11 // pred_check_branch
          %548 = sbr.rel (%p546) target = $region60
        $region59: #{tpu_custom_call.1} parent=11 // pred_region
          _
        $region60: #{tpu_custom_call.1} parent=11 // pred_fallthru
          _
        // Predicated region
        $region61: #{tpu_custom_call.1} parent=11 // pred_check
          %p549 = pneg %p371
        $region62: #{tpu_custom_call.1} parent=11 // pred_check_branch
          %551 = sbr.rel (%p549) target = $region64
        $region63: #{tpu_custom_call.1} parent=11 // pred_region
          _
        $region64: #{tpu_custom_call.1} parent=11 // pred_fallthru
          _
        // Predicated region
        $region65: #{tpu_custom_call.1} parent=11 // pred_check
          %p552 = pneg %p392
        $region66: #{tpu_custom_call.1} parent=11 // pred_check_branch
          %554 = sbr.rel (%p552) target = $region68
        $region67: #{tpu_custom_call.1} parent=11 // pred_region
          _
        $region68: #{tpu_custom_call.1} parent=11 // pred_fallthru
          _
        // Predicated region
        $region69: #{tpu_custom_call.1} parent=11 // pred_check
          %p555 = pneg %p413
        $region70: #{tpu_custom_call.1} parent=11 // pred_check_branch
          %557 = sbr.rel (%p555) target = $region72
        $region71: #{tpu_custom_call.1} parent=11 // pred_region
          _
        $region72: #{tpu_custom_call.1} parent=11 // pred_fallthru
          _
        // Predicated region
        $region73: #{tpu_custom_call.1} parent=11 // pred_check
          %p558 = pneg %p434
        $region74: #{tpu_custom_call.1} parent=11 // pred_check_branch
          %560 = sbr.rel (%p558) target = $region76
        $region75: #{tpu_custom_call.1} parent=11 // pred_region
          _
        $region76: #{tpu_custom_call.1} parent=11 // pred_fallthru
          _
      $region12: #{tpu_custom_call.1} parent=5 // pred_fallthru
        _
      %p561 = scmp.lt.s32.totalorder %s32, 2
      // Predicated region
      $region77: #{tpu_custom_call.1} parent=5 // pred_check
        %p562 = pneg %p561
      $region78: #{tpu_custom_call.1} parent=5 // pred_check_branch
        %564 = sbr.rel (%p562) target = $region80
      $region79: #{tpu_custom_call.1} parent=5 // pred_region
        // Predicated region
        $region81: #{tpu_custom_call.1} parent=79 // pred_check
          %p565 = pneg %p66
        $region82: #{tpu_custom_call.1} parent=79 // pred_check_branch
          %567 = sbr.rel (%p565) target = $region84
        $region83: #{tpu_custom_call.1} parent=79 // pred_region
          %p568 = scmp.lt.s32.totalorder %s39, 1
          %s569 = scalar_select %p568, %s39, 1
          %p570 = scmp.lt.s32.totalorder %s40, 0
          %s571 = scalar_select %p570, %s40, 0
          %s572 = sadd.s32 %s571, %s569
          %s573 = smul.addr %s572, 8
          %s574 = scalar_lea.vmem %s0, %s573
        $region84: #{tpu_custom_call.1} parent=79 // pred_fallthru
          _
        // Predicated region
        $region85: #{tpu_custom_call.1} parent=79 // pred_check
          %p575 = pneg %p92
        $region86: #{tpu_custom_call.1} parent=79 // pred_check_branch
          %577 = sbr.rel (%p575) target = $region88
        $region87: #{tpu_custom_call.1} parent=79 // pred_region
          %s578 = sand.u32 %s82, 1
          %s579 = scalar_lea.sflag [#allocation5], %s578
          %s580 = sand.u32 %s82, 1
          %s581 = smul.addr %s580, 4
          %s582 = scalar_lea.vmem [#allocation4], %s581
          %s584 = ssub.s32 64, 64
          %585 = vsyncadd %s579, %s584
          %s586 = smul.addr %s39, 64
          %s587 = scalar_lea.hbm %s1, %s586
          %s589 = sshll.u32 %s582, 4
          %s590 = int_to_ptr.vmem [resolvable:$true] %s589
          %592 = dma.hbm_to_vmem [thread:$0]  %s587, 64, %s590, %s579
        $region88: #{tpu_custom_call.1} parent=79 // pred_fallthru
          _
      $region80: #{tpu_custom_call.1} parent=5 // pred_fallthru
        _
      %p593 = scmp.le.s32.totalorder 1, %s32
      %p594 = scmp.lt.s32.totalorder %s32, 3
      %p595 = pnand %p593, %p594
      %p596 = pneg %p595
      // Predicated region
      $region89: #{tpu_custom_call.1} parent=5 // pred_check
        _
      $region90: #{tpu_custom_call.1} parent=5 // pred_check_branch
        %598 = sbr.rel (%p595) target = $region92
      $region91: #{tpu_custom_call.1} parent=5 // pred_region
        %s599 = ssub.s32 %s32, 1
        %s600 = sand.u32 %s85, 1
        %s601 = scalar_lea.sflag [#allocation5], %s600
        %s602 = sand.u32 %s85, 1
        %s603 = smul.addr %s602, 4
        %s604 = scalar_lea.vmem [#allocation4], %s603
        // Predicated region
        $region93: #{tpu_custom_call.1} parent=91 // pred_check
          %p605 = pneg %p98
        $region94: #{tpu_custom_call.1} parent=91 // pred_check_branch
          %607 = sbr.rel (%p605) target = $region96
        $region95: #{tpu_custom_call.1} parent=91 // pred_region
          %608 = dma.done %s601, 64
        $region96: #{tpu_custom_call.1} parent=91 // pred_fallthru
          _
        // Predicated region
        $region97: #{tpu_custom_call.1} parent=91 // pred_check
          %p609 = pneg %p161
        $region98: #{tpu_custom_call.1} parent=91 // pred_check_branch
          %611 = sbr.rel (%p609) target = $region100
        $region99: #{tpu_custom_call.1} parent=91 // pred_region
          %612 = dma.done [#allocation8], 256
        $region100: #{tpu_custom_call.1} parent=91 // pred_fallthru
          _
        // Predicated region
        $region101: #{tpu_custom_call.1} parent=91 // pred_check
          %p613 = pneg %p224
        $region102: #{tpu_custom_call.1} parent=91 // pred_check_branch
          %615 = sbr.rel (%p613) target = $region104
        $region103: #{tpu_custom_call.1} parent=91 // pred_region
          %616 = dma.done [#allocation8], 16
        $region104: #{tpu_custom_call.1} parent=91 // pred_fallthru
          _
        // Predicated region
        $region105: #{tpu_custom_call.1} parent=91 // pred_check
          %p617 = pneg %p245
        $region106: #{tpu_custom_call.1} parent=91 // pred_check_branch
          %619 = sbr.rel (%p617) target = $region108
        $region107: #{tpu_custom_call.1} parent=91 // pred_region
          %620 = dma.done [#allocation11], 256
        $region108: #{tpu_custom_call.1} parent=91 // pred_fallthru
          _
        // Predicated region
        $region109: #{tpu_custom_call.1} parent=91 // pred_check
          %p621 = pneg %p266
        $region110: #{tpu_custom_call.1} parent=91 // pred_check_branch
          %623 = sbr.rel (%p621) target = $region112
        $region111: #{tpu_custom_call.1} parent=91 // pred_region
          %624 = dma.done [#allocation11], 16
        $region112: #{tpu_custom_call.1} parent=91 // pred_fallthru
          _
        %p625 = scmp.lt.s32.totalorder %s41, 1
        %s626 = scalar_select %p625, %s41, 1
        %p627 = scmp.lt.s32.totalorder %s42, 0
        %s628 = scalar_select %p627, %s42, 0
        %s629 = sadd.s32 %s628, %s626
        %s630 = smul.addr %s629, 8
        %s631 = scalar_lea.vmem %s0, %s630
        %p632 = pneg %p72
        %p633 = pneg %p69
        %s634 = sand.u32 %s85, 1
        %s635 = scalar_lea.sflag [#allocation5], %s634
        %s636 = sand.u32 %s85, 1
        %s637 = smul.addr %s636, 4
        %s638 = scalar_lea.vmem [#allocation4], %s637
        %p639 = pneg %p98
        %p640 = pneg %p95
        %p641 = pneg %p119
        %p642 = pneg %p116
        %p643 = pneg %p140
        %p644 = pneg %p137
        %p645 = pneg %p161
        %p646 = pneg %p158
        %p647 = pneg %p182
        %p648 = pneg %p179
        %p649 = pneg %p203
        %p650 = pneg %p200
        %p651 = pneg %p224
        %p652 = pneg %p221
        %p653 = pneg %p245
        %p654 = pneg %p242
        %p655 = pneg %p266
        %p656 = pneg %p263
        %p657 = pneg %p287
        %p658 = pneg %p284
        %p659 = pneg %p308
        %p660 = pneg %p305
        %p661 = pneg %p329
        %p662 = pneg %p326
        %p663 = pneg %p350
        %p664 = pneg %p347
        %p665 = pneg %p371
        %p666 = pneg %p368
        %p667 = pneg %p392
        %p668 = pneg %p389
        %p669 = pneg %p413
        %p670 = pneg %p410
        %p671 = pneg %p434
        %p672 = pneg %p431
        %p673 = pneg %p462
        %p674 = pneg %p459
        %s675 = sand.u32 %s449, 1
        %s676 = scalar_lea.sflag [#allocation6], %s675
        %s677 = sand.u32 %s449, 1
        %s678 = smul.addr %s677, 8
        %s679 = scalar_lea.vmem [#allocation13], %s678
        %p680 = scmp.lt.s32.totalorder %s41, 1
        %s681 = scalar_select %p680, %s41, 1
        %p682 = scmp.lt.s32.totalorder %s42, 0
        %s683 = scalar_select %p682, %s42, 0
        %s684 = sadd.s32 %s683, %s681
        %s685 = smul.addr %s684, 8
        %s686 = scalar_lea.vmem %s0, %s685
        %p688 = scmp.eq.s32.totalorder %s42, 0
        // Predicated region
        $region113: #{tpu_custom_call.1} parent=91 // pred_check
          %p689 = pneg %p688
        $region114: #{tpu_custom_call.1} parent=91 // pred_check_branch
          %691 = sbr.rel (%p689) target = $region116
        $region115: #{tpu_custom_call.1} parent=91 // pred_region
          %v692 = vld [vmem:[%s604] sm:$0xf]
          %v693 = vld [vmem:[%s3] sm:$0xf]
          %v694 = vld [vmem:[%s3 + $0x4] sm:$0xf]
          %v695 = vld [vmem:[%s3 + $0x8] sm:$0xf]
          %v696 = vld [vmem:[%s3 + $0xc] sm:$0xf]
          %v697 = vld [vmem:[%s6] sm:$0x1]
          %v699 = vlaneseq
          %v700 = vshrl.u32 %v699, 7
          %v701 = vsub.s32 0, %v700
          %v702 = vrot.slane %v697, %v701
          %v708 = vunpack.c.l.b16 %v693
          %v709 = vunpack.c.l.b16 %v694
          %v710 = vunpack.c.l.b16 %v695
          %v711 = vunpack.c.l.b16 %v696
          %v712 = vpack.c.b16 %v709, %v708
          %v713 = vpack.c.b16 %v711, %v710
          %vm716 = vcmask 261120
          %v718 = vsel %vm716, %v692, 0
          %720 = vmatprep.subr.bf16.mxu0 0
          %721 = vmatpush1.bf16.msra.mxu0 %v712
          %722 = vmatprep.subr.bf16.mxu0 0
          %723 = vmatpush1.bf16.msra.mxu0 %v713
          %724 = vmatprep.subr.bf16.mxu0 0
          %725 = vmatpush1.bf16.msra.mxu0 0
          %726 = vmatprep.subr.bf16.mxu0 0
          %727 = vmatpush1.bf16.msra.mxu0 0
          %728 = vmatprep.subr.bf16.mxu0 0
          %729 = vmatpush1.bf16.msra.mxu0 0
          %730 = vmatprep.subr.bf16.mxu0 0
          %731 = vmatpush1.bf16.msra.mxu0 0
          %732 = vmatprep.subr.bf16.mxu0 0
          %733 = vmatpush1.bf16.msra.mxu0 0
          %734 = vmatprep.subr.bf16.mxu0 0
          %735 = vmatpush1.bf16.msra.mxu0 0
          %736 = vmatprep.subr.bf16.mxu0 0
          %737 = vmatpush1.bf16.msra.mxu0 0
          %738 = vmatprep.subr.bf16.mxu0 0
          %739 = vmatpush1.bf16.msra.mxu0 0
          %740 = vmatprep.subr.bf16.mxu0 0
          %741 = vmatpush1.bf16.msra.mxu0 0
          %742 = vmatprep.subr.bf16.mxu0 0
          %743 = vmatpush1.bf16.msra.mxu0 0
          %744 = vmatprep.subr.bf16.mxu0 0
          %745 = vmatpush1.bf16.msra.mxu0 0
          %746 = vmatprep.subr.bf16.mxu0 0
          %747 = vmatpush1.bf16.msra.mxu0 0
          %748 = vmatprep.subr.bf16.mxu0 0
          %749 = vmatpush1.bf16.msra.mxu0 0
          %750 = vmatprep.subr.bf16.mxu0 0
          %751 = vmatpush1.bf16.msra.mxu0 0
          %752 = vmatprep.mubr.bf16.mxu0 0
          %753 = vmatmul.mubr.bf16.gmra.mrb[0].mxu0 %v718
          %v754 = vpop.f32.mrb[0].mxu0
          %v755 = vadd.f32 %v702, %v754
          %v756 = vpop.f32.mrb[0].mxu0
          %v757 = vpop.f32.mrb[0].mxu0
          %v758 = vpop.f32.mrb[0].mxu0
          %759 = vdwg.mxu0
          %v760 = vld [vmem:[#allocation7] sm:$0xf]
          %v761 = vld [vmem:[#allocation7 + $0x4] sm:$0xf]
          %v762 = vld [vmem:[#allocation7 + $0x8] sm:$0xf]
          %v763 = vld [vmem:[#allocation7 + $0xc] sm:$0xf]
          %v764 = vld [vmem:[#allocation9] sm:$0x1]
          %v766 = vlaneseq
          %v767 = vshrl.u32 %v766, 7
          %v768 = vsub.s32 0, %v767
          %v769 = vrot.slane %v764, %v768
          %v775 = vunpack.c.l.b16 %v760
          %v776 = vunpack.c.l.b16 %v761
          %v777 = vunpack.c.l.b16 %v762
          %v778 = vunpack.c.l.b16 %v763
          %v779 = vpack.c.b16 %v776, %v775
          %v780 = vpack.c.b16 %v778, %v777
          %783 = vmatprep.subr.bf16.mxu0 0
          %784 = vmatpush1.bf16.msra.mxu0 %v779
          %785 = vmatprep.subr.bf16.mxu0 0
          %786 = vmatpush1.bf16.msra.mxu0 %v780
          %787 = vmatprep.subr.bf16.mxu0 0
          %788 = vmatpush1.bf16.msra.mxu0 0
          %789 = vmatprep.subr.bf16.mxu0 0
          %790 = vmatpush1.bf16.msra.mxu0 0
          %791 = vmatprep.subr.bf16.mxu0 0
          %792 = vmatpush1.bf16.msra.mxu0 0
          %793 = vmatprep.subr.bf16.mxu0 0
          %794 = vmatpush1.bf16.msra.mxu0 0
          %795 = vmatprep.subr.bf16.mxu0 0
          %796 = vmatpush1.bf16.msra.mxu0 0
          %797 = vmatprep.subr.bf16.mxu0 0
          %798 = vmatpush1.bf16.msra.mxu0 0
          %799 = vmatprep.subr.bf16.mxu0 0
          %800 = vmatpush1.bf16.msra.mxu0 0
          %801 = vmatprep.subr.bf16.mxu0 0
          %802 = vmatpush1.bf16.msra.mxu0 0
          %803 = vmatprep.subr.bf16.mxu0 0
          %804 = vmatpush1.bf16.msra.mxu0 0
          %805 = vmatprep.subr.bf16.mxu0 0
          %806 = vmatpush1.bf16.msra.mxu0 0
          %807 = vmatprep.subr.bf16.mxu0 0
          %808 = vmatpush1.bf16.msra.mxu0 0
          %809 = vmatprep.subr.bf16.mxu0 0
          %810 = vmatpush1.bf16.msra.mxu0 0
          %811 = vmatprep.subr.bf16.mxu0 0
          %812 = vmatpush1.bf16.msra.mxu0 0
          %813 = vmatprep.subr.bf16.mxu0 0
          %814 = vmatpush1.bf16.msra.mxu0 0
          %815 = vmatprep.mubr.bf16.mxu0 0
          %816 = vmatmul.mubr.bf16.gmra.mrb[0].mxu0 %v718
          %v817 = vpop.f32.mrb[0].mxu0
          %v818 = vadd.f32 %v769, %v817
          %v819 = vpop.f32.mrb[0].mxu0
          %v820 = vpop.f32.mrb[0].mxu0
          %v821 = vpop.f32.mrb[0].mxu0
          %822 = vdwg.mxu0
          %v823 = vpack.c.bf16 %v755, %v755
          %vm824 = vcmask 257024
          %825 = vst.msk [vmem:[#allocation2] sm:$0xf] %vm824, %v823
          %v826 = vpack.c.bf16 %v818, %v818
          %827 = vst.msk [vmem:[#allocation3] sm:$0xf] %vm824, %v826
        $region116: #{tpu_custom_call.1} parent=91 // pred_fallthru
          _
        %v828 = vld [vmem:[%s686] sm:$0xff]
        %v829 = vpack.c.bf16 %v828, %v828
        %v830 = vld [vmem:[%s2] sm:$0xf]
        %v831 = vld [vmem:[%s2 + $0x4] sm:$0xf]
        %v832 = vld [vmem:[%s2 + $0x8] sm:$0xf]
        %v833 = vld [vmem:[%s2 + $0xc] sm:$0xf]
        %v834 = vld [vmem:[%s5] sm:$0x1]
        %v836 = vlaneseq
        %v837 = vshrl.u32 %v836, 7
        %v838 = vsub.s32 0, %v837
        %v839 = vrot.slane %v834, %v838
        %v845 = vunpack.c.l.b16 %v830
        %v846 = vunpack.c.l.b16 %v831
        %v847 = vunpack.c.l.b16 %v832
        %v848 = vunpack.c.l.b16 %v833
        %v849 = vpack.c.b16 %v846, %v845
        %v850 = vpack.c.b16 %v848, %v847
        %vm853 = vcmask 261120
        %v855 = vsel %vm853, %v829, 0
        %857 = vmatprep.subr.bf16.mxu0 0
        %858 = vmatpush1.bf16.msra.mxu0 %v849
        %859 = vmatprep.subr.bf16.mxu0 0
        %860 = vmatpush1.bf16.msra.mxu0 %v850
        %861 = vmatprep.subr.bf16.mxu0 0
        %862 = vmatpush1.bf16.msra.mxu0 0
        %863 = vmatprep.subr.bf16.mxu0 0
        %864 = vmatpush1.bf16.msra.mxu0 0
        %865 = vmatprep.subr.bf16.mxu0 0
        %866 = vmatpush1.bf16.msra.mxu0 0
        %867 = vmatprep.subr.bf16.mxu0 0
        %868 = vmatpush1.bf16.msra.mxu0 0
        %869 = vmatprep.subr.bf16.mxu0 0
        %870 = vmatpush1.bf16.msra.mxu0 0
        %871 = vmatprep.subr.bf16.mxu0 0
        %872 = vmatpush1.bf16.msra.mxu0 0
        %873 = vmatprep.subr.bf16.mxu0 0
        %874 = vmatpush1.bf16.msra.mxu0 0
        %875 = vmatprep.subr.bf16.mxu0 0
        %876 = vmatpush1.bf16.msra.mxu0 0
        %877 = vmatprep.subr.bf16.mxu0 0
        %878 = vmatpush1.bf16.msra.mxu0 0
        %879 = vmatprep.subr.bf16.mxu0 0
        %880 = vmatpush1.bf16.msra.mxu0 0
        %881 = vmatprep.subr.bf16.mxu0 0
        %882 = vmatpush1.bf16.msra.mxu0 0
        %883 = vmatprep.subr.bf16.mxu0 0
        %884 = vmatpush1.bf16.msra.mxu0 0
        %885 = vmatprep.subr.bf16.mxu0 0
        %886 = vmatpush1.bf16.msra.mxu0 0
        %887 = vmatprep.subr.bf16.mxu0 0
        %888 = vmatpush1.bf16.msra.mxu0 0
        %889 = vmatprep.mubr.bf16.mxu0 0
        %890 = vmatmul.mubr.bf16.gmra.mrb[0].mxu0 %v855
        %v891 = vpop.f32.mrb[0].mxu0
        %v892 = vadd.f32 %v839, %v891
        %v893 = vpop.f32.mrb[0].mxu0
        %v894 = vpop.f32.mrb[0].mxu0
        %v895 = vpop.f32.mrb[0].mxu0
        %896 = vdwg.mxu0
        %v897 = vpack.c.bf16 %v892, %v892
        %v898 = vld [vmem:[#allocation2] sm:$0xf]
        %v899 = vld [vmem:[#allocation3] sm:$0xf]
        %vm900 = vcmask 64512
        %v902 = vsel %vm900, %v897, 0
        %v905 = vsel %vm900, %v898, 0
        %907 = vmatprep.subr.bf16.mxu0 0
        %908 = vmatpush1.bf16.xpose.msra.mxu0 %v905
        %909 = vmatprep.subr.bf16.mxu0 0
        %910 = vmatpush1.bf16.xpose.msra.mxu0 0
        %911 = vmatprep.subr.bf16.mxu0 0
        %912 = vmatpush1.bf16.xpose.msra.mxu0 0
        %913 = vmatprep.subr.bf16.mxu0 0
        %914 = vmatpush1.bf16.xpose.msra.mxu0 0
        %915 = vmatprep.subr.bf16.mxu0 0
        %916 = vmatpush1.bf16.xpose.msra.mxu0 0
        %917 = vmatprep.subr.bf16.mxu0 0
        %918 = vmatpush1.bf16.xpose.msra.mxu0 0
        %919 = vmatprep.subr.bf16.mxu0 0
        %920 = vmatpush1.bf16.xpose.msra.mxu0 0
        %921 = vmatprep.subr.bf16.mxu0 0
        %922 = vmatpush1.bf16.xpose.msra.mxu0 0
        %923 = vmatprep.subr.bf16.mxu0 0
        %924 = vmatpush1.bf16.xpose.msra.mxu0 0
        %925 = vmatprep.subr.bf16.mxu0 0
        %926 = vmatpush1.bf16.xpose.msra.mxu0 0
        %927 = vmatprep.subr.bf16.mxu0 0
        %928 = vmatpush1.bf16.xpose.msra.mxu0 0
        %929 = vmatprep.subr.bf16.mxu0 0
        %930 = vmatpush1.bf16.xpose.msra.mxu0 0
        %931 = vmatprep.subr.bf16.mxu0 0
        %932 = vmatpush1.bf16.xpose.msra.mxu0 0
        %933 = vmatprep.subr.bf16.mxu0 0
        %934 = vmatpush1.bf16.xpose.msra.mxu0 0
        %935 = vmatprep.subr.bf16.mxu0 0
        %936 = vmatpush1.bf16.xpose.msra.mxu0 0
        %937 = vmatprep.subr.bf16.mxu0 0
        %938 = vmatpush1.bf16.xpose.msra.mxu0 0
        %939 = vmatprep.mubr.bf16.mxu0 0
        %940 = vmatmul.mubr.bf16.gmra.mrb[0].mxu0 %v902
        %v941 = vpop.f32.mrb[0].mxu0
        %v942 = vadd.f32 0.0, %v941
        %v943 = vpop.f32.mrb[0].mxu0
        %v944 = vpop.f32.mrb[0].mxu0
        %v945 = vpop.f32.mrb[0].mxu0
        %946 = vdwg.mxu0
        %v947 = vsel %vm900, %v942, -inf
        %948 = vmax.xlane.f32.xlu0 %v947
        %v949 = vpop.xlane.xlu0 %948
        %v950 = vsub.f32 %v942, %v949
        %v951 = vmul.f32 %v950, 1.442695
        %v952 = vpow.pop %v951
        %v953 = vsel %vm900, %v952, 0.0
        %954 = vadd.xlane.f32.xlu0 %v953
        %v955 = vpop.xlane.xlu0 %954
        %v956 = vpack.c.bf16 %v952, %v952
        %v958 = vsel %vm900, %v956, 0
        %vm960 = vcmask 1043456
        %v962 = vsel %vm960, %v899, 0
        %964 = vmatprep.subr.bf16.mxu0 0
        %965 = vmatpush1.bf16.msra.mxu0 %v962
        %966 = vmatprep.subr.bf16.mxu0 0
        %967 = vmatpush1.bf16.msra.mxu0 0
        %968 = vmatprep.subr.bf16.mxu0 0
        %969 = vmatpush1.bf16.msra.mxu0 0
        %970 = vmatprep.subr.bf16.mxu0 0
        %971 = vmatpush1.bf16.msra.mxu0 0
        %972 = vmatprep.subr.bf16.mxu0 0
        %973 = vmatpush1.bf16.msra.mxu0 0
        %974 = vmatprep.subr.bf16.mxu0 0
        %975 = vmatpush1.bf16.msra.mxu0 0
        %976 = vmatprep.subr.bf16.mxu0 0
        %977 = vmatpush1.bf16.msra.mxu0 0
        %978 = vmatprep.subr.bf16.mxu0 0
        %979 = vmatpush1.bf16.msra.mxu0 0
        %980 = vmatprep.subr.bf16.mxu0 0
        %981 = vmatpush1.bf16.msra.mxu0 0
        %982 = vmatprep.subr.bf16.mxu0 0
        %983 = vmatpush1.bf16.msra.mxu0 0
        %984 = vmatprep.subr.bf16.mxu0 0
        %985 = vmatpush1.bf16.msra.mxu0 0
        %986 = vmatprep.subr.bf16.mxu0 0
        %987 = vmatpush1.bf16.msra.mxu0 0
        %988 = vmatprep.subr.bf16.mxu0 0
        %989 = vmatpush1.bf16.msra.mxu0 0
        %990 = vmatprep.subr.bf16.mxu0 0
        %991 = vmatpush1.bf16.msra.mxu0 0
        %992 = vmatprep.subr.bf16.mxu0 0
        %993 = vmatpush1.bf16.msra.mxu0 0
        %994 = vmatprep.subr.bf16.mxu0 0
        %995 = vmatpush1.bf16.msra.mxu0 0
        %996 = vmatprep.mubr.bf16.mxu0 0
        %997 = vmatmul.mubr.bf16.gmra.mrb[0].mxu0 %v958
        %v998 = vpop.f32.mrb[0].mxu0
        %v999 = vadd.f32 0.0, %v998
        %v1000 = vpop.f32.mrb[0].mxu0
        %v1001 = vpop.f32.mrb[0].mxu0
        %v1002 = vpop.f32.mrb[0].mxu0
        %1003 = vdwg.mxu0
        %v1004 = vrcp.pop %v955
        %v1005 = vmul.f32 %v999, %v1004
        %v1006 = vpack.c.bf16 %v1005, %v1005
        %1008 = vrot.lane.b32.xlu0 %v897, 120
        %v1009 = vpop.permute.xlu0 %1008
        %v1011 = vunpack.c.l.b16 %v898
        %v1012 = vpack.c.b16 %v1011, %v1011
        %1013 = vrot.lane.b32.xlu0 %v1012, 120
        %v1014 = vpop.permute.xlu0 %1013
        %v1016 = vsel %vm900, %v1009, 0
        %v1019 = vsel %vm900, %v1014, 0
        %1021 = vmatprep.subr.bf16.mxu0 0
        %1022 = vmatpush1.bf16.xpose.msra.mxu0 %v1019
        %1023 = vmatprep.subr.bf16.mxu0 0
        %1024 = vmatpush1.bf16.xpose.msra.mxu0 0
        %1025 = vmatprep.subr.bf16.mxu0 0
        %1026 = vmatpush1.bf16.xpose.msra.mxu0 0
        %1027 = vmatprep.subr.bf16.mxu0 0
        %1028 = vmatpush1.bf16.xpose.msra.mxu0 0
        %1029 = vmatprep.subr.bf16.mxu0 0
        %1030 = vmatpush1.bf16.xpose.msra.mxu0 0
        %1031 = vmatprep.subr.bf16.mxu0 0
        %1032 = vmatpush1.bf16.xpose.msra.mxu0 0
        %1033 = vmatprep.subr.bf16.mxu0 0
        %1034 = vmatpush1.bf16.xpose.msra.mxu0 0
        %1035 = vmatprep.subr.bf16.mxu0 0
        %1036 = vmatpush1.bf16.xpose.msra.mxu0 0
        %1037 = vmatprep.subr.bf16.mxu0 0
        %1038 = vmatpush1.bf16.xpose.msra.mxu0 0
        %1039 = vmatprep.subr.bf16.mxu0 0
        %1040 = vmatpush1.bf16.xpose.msra.mxu0 0
        %1041 = vmatprep.subr.bf16.mxu0 0
        %1042 = vmatpush1.bf16.xpose.msra.mxu0 0
        %1043 = vmatprep.subr.bf16.mxu0 0
        %1044 = vmatpush1.bf16.xpose.msra.mxu0 0
        %1045 = vmatprep.subr.bf16.mxu0 0
        %1046 = vmatpush1.bf16.xpose.msra.mxu0 0
        %1047 = vmatprep.subr.bf16.mxu0 0
        %1048 = vmatpush1.bf16.xpose.msra.mxu0 0
        %1049 = vmatprep.subr.bf16.mxu0 0
        %1050 = vmatpush1.bf16.xpose.msra.mxu0 0
        %1051 = vmatprep.subr.bf16.mxu0 0
        %1052 = vmatpush1.bf16.xpose.msra.mxu0 0
        %1053 = vmatprep.mubr.bf16.mxu0 0
        %1054 = vmatmul.mubr.bf16.gmra.mrb[0].mxu0 %v1016
        %v1055 = vpop.f32.mrb[0].mxu0
        %v1056 = vadd.f32 0.0, %v1055
        %v1057 = vpop.f32.mrb[0].mxu0
        %v1058 = vpop.f32.mrb[0].mxu0
        %v1059 = vpop.f32.mrb[0].mxu0
        %1060 = vdwg.mxu0
        %v1061 = vsel %vm900, %v1056, -inf
        %1062 = vmax.xlane.f32.xlu0 %v1061
        %v1063 = vpop.xlane.xlu0 %1062
        %v1064 = vsub.f32 %v1056, %v1063
        %v1065 = vmul.f32 %v1064, 1.442695
        %v1066 = vpow.pop %v1065
        %v1067 = vsel %vm900, %v1066, 0.0
        %1068 = vadd.xlane.f32.xlu0 %v1067
        %v1069 = vpop.xlane.xlu0 %1068
        %v1070 = vpack.c.bf16 %v1066, %v1066
        %v1072 = vunpack.c.l.b16 %v899
        %v1073 = vpack.c.b16 %v1072, %v1072
        %1074 = vrot.lane.b32.xlu0 %v1073, 120
        %v1075 = vpop.permute.xlu0 %1074
        %v1077 = vsel %vm900, %v1070, 0
        %v1080 = vsel %vm960, %v1075, 0
        %1082 = vmatprep.subr.bf16.mxu0 0
        %1083 = vmatpush1.bf16.msra.mxu0 %v1080
        %1084 = vmatprep.subr.bf16.mxu0 0
        %1085 = vmatpush1.bf16.msra.mxu0 0
        %1086 = vmatprep.subr.bf16.mxu0 0
        %1087 = vmatpush1.bf16.msra.mxu0 0
        %1088 = vmatprep.subr.bf16.mxu0 0
        %1089 = vmatpush1.bf16.msra.mxu0 0
        %1090 = vmatprep.subr.bf16.mxu0 0
        %1091 = vmatpush1.bf16.msra.mxu0 0
        %1092 = vmatprep.subr.bf16.mxu0 0
        %1093 = vmatpush1.bf16.msra.mxu0 0
        %1094 = vmatprep.subr.bf16.mxu0 0
        %1095 = vmatpush1.bf16.msra.mxu0 0
        %1096 = vmatprep.subr.bf16.mxu0 0
        %1097 = vmatpush1.bf16.msra.mxu0 0
        %1098 = vmatprep.subr.bf16.mxu0 0
        %1099 = vmatpush1.bf16.msra.mxu0 0
        %1100 = vmatprep.subr.bf16.mxu0 0
        %1101 = vmatpush1.bf16.msra.mxu0 0
        %1102 = vmatprep.subr.bf16.mxu0 0
        %1103 = vmatpush1.bf16.msra.mxu0 0
        %1104 = vmatprep.subr.bf16.mxu0 0
        %1105 = vmatpush1.bf16.msra.mxu0 0
        %1106 = vmatprep.subr.bf16.mxu0 0
        %1107 = vmatpush1.bf16.msra.mxu0 0
        %1108 = vmatprep.subr.bf16.mxu0 0
        %1109 = vmatpush1.bf16.msra.mxu0 0
        %1110 = vmatprep.subr.bf16.mxu0 0
        %1111 = vmatpush1.bf16.msra.mxu0 0
        %1112 = vmatprep.subr.bf16.mxu0 0
        %1113 = vmatpush1.bf16.msra.mxu0 0
        %1114 = vmatprep.mubr.bf16.mxu0 0
        %1115 = vmatmul.mubr.bf16.gmra.mrb[0].mxu0 %v1077
        %v1116 = vpop.f32.mrb[0].mxu0
        %v1117 = vadd.f32 0.0, %v1116
        %v1118 = vpop.f32.mrb[0].mxu0
        %v1119 = vpop.f32.mrb[0].mxu0
        %v1120 = vpop.f32.mrb[0].mxu0
        %1121 = vdwg.mxu0
        %v1122 = vrcp.pop %v1069
        %v1123 = vmul.f32 %v1117, %v1122
        %v1124 = vpack.c.bf16 %v1123, %v1123
        %1125 = vrot.lane.b32.xlu0 %v897, 112
        %v1126 = vpop.permute.xlu0 %1125
        %1127 = vrot.lane.b32.xlu0 %v1012, 112
        %v1128 = vpop.permute.xlu0 %1127
        %v1130 = vsel %vm900, %v1126, 0
        %v1133 = vsel %vm900, %v1128, 0
        %1135 = vmatprep.subr.bf16.mxu0 0
        %1136 = vmatpush1.bf16.xpose.msra.mxu0 %v1133
        %1137 = vmatprep.subr.bf16.mxu0 0
        %1138 = vmatpush1.bf16.xpose.msra.mxu0 0
        %1139 = vmatprep.subr.bf16.mxu0 0
        %1140 = vmatpush1.bf16.xpose.msra.mxu0 0
        %1141 = vmatprep.subr.bf16.mxu0 0
        %1142 = vmatpush1.bf16.xpose.msra.mxu0 0
        %1143 = vmatprep.subr.bf16.mxu0 0
        %1144 = vmatpush1.bf16.xpose.msra.mxu0 0
        %1145 = vmatprep.subr.bf16.mxu0 0
        %1146 = vmatpush1.bf16.xpose.msra.mxu0 0
        %1147 = vmatprep.subr.bf16.mxu0 0
        %1148 = vmatpush1.bf16.xpose.msra.mxu0 0
        %1149 = vmatprep.subr.bf16.mxu0 0
        %1150 = vmatpush1.bf16.xpose.msra.mxu0 0
        %1151 = vmatprep.subr.bf16.mxu0 0
        %1152 = vmatpush1.bf16.xpose.msra.mxu0 0
        %1153 = vmatprep.subr.bf16.mxu0 0
        %1154 = vmatpush1.bf16.xpose.msra.mxu0 0
        %1155 = vmatprep.subr.bf16.mxu0 0
        %1156 = vmatpush1.bf16.xpose.msra.mxu0 0
        %1157 = vmatprep.subr.bf16.mxu0 0
        %1158 = vmatpush1.bf16.xpose.msra.mxu0 0
        %1159 = vmatprep.subr.bf16.mxu0 0
        %1160 = vmatpush1.bf16.xpose.msra.mxu0 0
        %1161 = vmatprep.subr.bf16.mxu0 0
        %1162 = vmatpush1.bf16.xpose.msra.mxu0 0
        %1163 = vmatprep.subr.bf16.mxu0 0
        %1164 = vmatpush1.bf16.xpose.msra.mxu0 0
        %1165 = vmatprep.subr.bf16.mxu0 0
        %1166 = vmatpush1.bf16.xpose.msra.mxu0 0
        %1167 = vmatprep.mubr.bf16.mxu0 0
        %1168 = vmatmul.mubr.bf16.gmra.mrb[0].mxu0 %v1130
        %v1169 = vpop.f32.mrb[0].mxu0
        %v1170 = vadd.f32 0.0, %v1169
        %v1171 = vpop.f32.mrb[0].mxu0
        %v1172 = vpop.f32.mrb[0].mxu0
        %v1173 = vpop.f32.mrb[0].mxu0
        %1174 = vdwg.mxu0
        %v1175 = vsel %vm900, %v1170, -inf
        %1176 = vmax.xlane.f32.xlu0 %v1175
        %v1177 = vpop.xlane.xlu0 %1176
        %v1178 = vsub.f32 %v1170, %v1177
        %v1179 = vmul.f32 %v1178, 1.442695
        %v1180 = vpow.pop %v1179
        %v1181 = vsel %vm900, %v1180, 0.0
        %1182 = vadd.xlane.f32.xlu0 %v1181
        %v1183 = vpop.xlane.xlu0 %1182
        %v1184 = vpack.c.bf16 %v1180, %v1180
        %1185 = vrot.lane.b32.xlu0 %v1073, 112
        %v1186 = vpop.permute.xlu0 %1185
        %v1188 = vsel %vm900, %v1184, 0
        %v1191 = vsel %vm960, %v1186, 0
        %1193 = vmatprep.subr.bf16.mxu0 0
        %1194 = vmatpush1.bf16.msra.mxu0 %v1191
        %1195 = vmatprep.subr.bf16.mxu0 0
        %1196 = vmatpush1.bf16.msra.mxu0 0
        %1197 = vmatprep.subr.bf16.mxu0 0
        %1198 = vmatpush1.bf16.msra.mxu0 0
        %1199 = vmatprep.subr.bf16.mxu0 0
        %1200 = vmatpush1.bf16.msra.mxu0 0
        %1201 = vmatprep.subr.bf16.mxu0 0
        %1202 = vmatpush1.bf16.msra.mxu0 0
        %1203 = vmatprep.subr.bf16.mxu0 0
        %1204 = vmatpush1.bf16.msra.mxu0 0
        %1205 = vmatprep.subr.bf16.mxu0 0
        %1206 = vmatpush1.bf16.msra.mxu0 0
        %1207 = vmatprep.subr.bf16.mxu0 0
        %1208 = vmatpush1.bf16.msra.mxu0 0
        %1209 = vmatprep.subr.bf16.mxu0 0
        %1210 = vmatpush1.bf16.msra.mxu0 0
        %1211 = vmatprep.subr.bf16.mxu0 0
        %1212 = vmatpush1.bf16.msra.mxu0 0
        %1213 = vmatprep.subr.bf16.mxu0 0
        %1214 = vmatpush1.bf16.msra.mxu0 0
        %1215 = vmatprep.subr.bf16.mxu0 0
        %1216 = vmatpush1.bf16.msra.mxu0 0
        %1217 = vmatprep.subr.bf16.mxu0 0
        %1218 = vmatpush1.bf16.msra.mxu0 0
        %1219 = vmatprep.subr.bf16.mxu0 0
        %1220 = vmatpush1.bf16.msra.mxu0 0
        %1221 = vmatprep.subr.bf16.mxu0 0
        %1222 = vmatpush1.bf16.msra.mxu0 0
        %1223 = vmatprep.subr.bf16.mxu0 0
        %1224 = vmatpush1.bf16.msra.mxu0 0
        %1225 = vmatprep.mubr.bf16.mxu0 0
        %1226 = vmatmul.mubr.bf16.gmra.mrb[0].mxu0 %v1188
        %v1227 = vpop.f32.mrb[0].mxu0
        %v1228 = vadd.f32 0.0, %v1227
        %v1229 = vpop.f32.mrb[0].mxu0
        %v1230 = vpop.f32.mrb[0].mxu0
        %v1231 = vpop.f32.mrb[0].mxu0
        %1232 = vdwg.mxu0
        %v1233 = vrcp.pop %v1183
        %v1234 = vmul.f32 %v1228, %v1233
        %v1235 = vpack.c.bf16 %v1234, %v1234
        %1236 = vrot.lane.b32.xlu0 %v897, 104
        %v1237 = vpop.permute.xlu0 %1236
        %1238 = vrot.lane.b32.xlu0 %v1012, 104
        %v1239 = vpop.permute.xlu0 %1238
        %v1241 = vsel %vm900, %v1237, 0
        %v1244 = vsel %vm900, %v1239, 0
        %1246 = vmatprep.subr.bf16.mxu0 0
        %1247 = vmatpush1.bf16.xpose.msra.mxu0 %v1244
        %1248 = vmatprep.subr.bf16.mxu0 0
        %1249 = vmatpush1.bf16.xpose.msra.mxu0 0
        %1250 = vmatprep.subr.bf16.mxu0 0
        %1251 = vmatpush1.bf16.xpose.msra.mxu0 0
        %1252 = vmatprep.subr.bf16.mxu0 0
        %1253 = vmatpush1.bf16.xpose.msra.mxu0 0
        %1254 = vmatprep.subr.bf16.mxu0 0
        %1255 = vmatpush1.bf16.xpose.msra.mxu0 0
        %1256 = vmatprep.subr.bf16.mxu0 0
        %1257 = vmatpush1.bf16.xpose.msra.mxu0 0
        %1258 = vmatprep.subr.bf16.mxu0 0
        %1259 = vmatpush1.bf16.xpose.msra.mxu0 0
        %1260 = vmatprep.subr.bf16.mxu0 0
        %1261 = vmatpush1.bf16.xpose.msra.mxu0 0
        %1262 = vmatprep.subr.bf16.mxu0 0
        %1263 = vmatpush1.bf16.xpose.msra.mxu0 0
        %1264 = vmatprep.subr.bf16.mxu0 0
        %1265 = vmatpush1.bf16.xpose.msra.mxu0 0
        %1266 = vmatprep.subr.bf16.mxu0 0
        %1267 = vmatpush1.bf16.xpose.msra.mxu0 0
        %1268 = vmatprep.subr.bf16.mxu0 0
        %1269 = vmatpush1.bf16.xpose.msra.mxu0 0
        %1270 = vmatprep.subr.bf16.mxu0 0
        %1271 = vmatpush1.bf16.xpose.msra.mxu0 0
        %1272 = vmatprep.subr.bf16.mxu0 0
        %1273 = vmatpush1.bf16.xpose.msra.mxu0 0
        %1274 = vmatprep.subr.bf16.mxu0 0
        %1275 = vmatpush1.bf16.xpose.msra.mxu0 0
        %1276 = vmatprep.subr.bf16.mxu0 0
        %1277 = vmatpush1.bf16.xpose.msra.mxu0 0
        %1278 = vmatprep.mubr.bf16.mxu0 0
        %1279 = vmatmul.mubr.bf16.gmra.mrb[0].mxu0 %v1241
        %v1280 = vpop.f32.mrb[0].mxu0
        %v1281 = vadd.f32 0.0, %v1280
        %v1282 = vpop.f32.mrb[0].mxu0
        %v1283 = vpop.f32.mrb[0].mxu0
        %v1284 = vpop.f32.mrb[0].mxu0
        %1285 = vdwg.mxu0
        %v1286 = vsel %vm900, %v1281, -inf
        %1287 = vmax.xlane.f32.xlu0 %v1286
        %v1288 = vpop.xlane.xlu0 %1287
        %v1289 = vsub.f32 %v1281, %v1288
        %v1290 = vmul.f32 %v1289, 1.442695
        %v1291 = vpow.pop %v1290
        %v1292 = vsel %vm900, %v1291, 0.0
        %1293 = vadd.xlane.f32.xlu0 %v1292
        %v1294 = vpop.xlane.xlu0 %1293
        %v1295 = vpack.c.bf16 %v1291, %v1291
        %1296 = vrot.lane.b32.xlu0 %v1073, 104
        %v1297 = vpop.permute.xlu0 %1296
        %v1299 = vsel %vm900, %v1295, 0
        %v1302 = vsel %vm960, %v1297, 0
        %1304 = vmatprep.subr.bf16.mxu0 0
        %1305 = vmatpush1.bf16.msra.mxu0 %v1302
        %1306 = vmatprep.subr.bf16.mxu0 0
        %1307 = vmatpush1.bf16.msra.mxu0 0
        %1308 = vmatprep.subr.bf16.mxu0 0
        %1309 = vmatpush1.bf16.msra.mxu0 0
        %1310 = vmatprep.subr.bf16.mxu0 0
        %1311 = vmatpush1.bf16.msra.mxu0 0
        %1312 = vmatprep.subr.bf16.mxu0 0
        %1313 = vmatpush1.bf16.msra.mxu0 0
        %1314 = vmatprep.subr.bf16.mxu0 0
        %1315 = vmatpush1.bf16.msra.mxu0 0
        %1316 = vmatprep.subr.bf16.mxu0 0
        %1317 = vmatpush1.bf16.msra.mxu0 0
        %1318 = vmatprep.subr.bf16.mxu0 0
        %1319 = vmatpush1.bf16.msra.mxu0 0
        %1320 = vmatprep.subr.bf16.mxu0 0
        %1321 = vmatpush1.bf16.msra.mxu0 0
        %1322 = vmatprep.subr.bf16.mxu0 0
        %1323 = vmatpush1.bf16.msra.mxu0 0
        %1324 = vmatprep.subr.bf16.mxu0 0
        %1325 = vmatpush1.bf16.msra.mxu0 0
        %1326 = vmatprep.subr.bf16.mxu0 0
        %1327 = vmatpush1.bf16.msra.mxu0 0
        %1328 = vmatprep.subr.bf16.mxu0 0
        %1329 = vmatpush1.bf16.msra.mxu0 0
        %1330 = vmatprep.subr.bf16.mxu0 0
        %1331 = vmatpush1.bf16.msra.mxu0 0
        %1332 = vmatprep.subr.bf16.mxu0 0
        %1333 = vmatpush1.bf16.msra.mxu0 0
        %1334 = vmatprep.subr.bf16.mxu0 0
        %1335 = vmatpush1.bf16.msra.mxu0 0
        %1336 = vmatprep.mubr.bf16.mxu0 0
        %1337 = vmatmul.mubr.bf16.gmra.mrb[0].mxu0 %v1299
        %v1338 = vpop.f32.mrb[0].mxu0
        %v1339 = vadd.f32 0.0, %v1338
        %v1340 = vpop.f32.mrb[0].mxu0
        %v1341 = vpop.f32.mrb[0].mxu0
        %v1342 = vpop.f32.mrb[0].mxu0
        %1343 = vdwg.mxu0
        %v1344 = vrcp.pop %v1294
        %v1345 = vmul.f32 %v1339, %v1344
        %v1346 = vpack.c.bf16 %v1345, %v1345
        %1348 = vrot.lane.b32.xlu0 %v1124, 8
        %v1349 = vpop.permute.xlu0 %1348
        %1351 = vrot.lane.b32.xlu0 %v1235, 16
        %v1352 = vpop.permute.xlu0 %1351
        %1354 = vrot.lane.b32.xlu0 %v1346, 24
        %v1355 = vpop.permute.xlu0 %1354
        %v1358 = vsel %vm900, %v1006, %v1349
        %vm1359 = vcmask 130048
        %v1361 = vsel %vm1359, %v1358, %v1352
        %vm1362 = vcmask 195584
        %v1364 = vsel %vm1362, %v1361, %v1355
        %v1365 = vld [vmem:[#allocation10] sm:$0xf]
        %v1366 = vld [vmem:[#allocation10 + $0x4] sm:$0xf]
        %v1367 = vld [vmem:[#allocation10 + $0x8] sm:$0xf]
        %v1368 = vld [vmem:[#allocation10 + $0xc] sm:$0xf]
        %v1369 = vld [vmem:[#allocation12] sm:$0x1]
        %v1371 = vlaneseq
        %v1372 = vshrl.u32 %v1371, 7
        %v1373 = vsub.s32 0, %v1372
        %v1374 = vrot.slane %v1369, %v1373
        %v1380 = vunpack.c.l.b16 %v1365
        %v1381 = vunpack.c.l.b16 %v1366
        %v1382 = vunpack.c.l.b16 %v1367
        %v1383 = vunpack.c.l.b16 %v1368
        %v1384 = vpack.c.b16 %v1381, %v1380
        %v1385 = vpack.c.b16 %v1383, %v1382
        %v1388 = vsel %vm853, %v1364, 0
        %1390 = vmatprep.subr.bf16.mxu0 0
        %1391 = vmatpush1.bf16.msra.mxu0 %v1384
        %1392 = vmatprep.subr.bf16.mxu0 0
        %1393 = vmatpush1.bf16.msra.mxu0 %v1385
        %1394 = vmatprep.subr.bf16.mxu0 0
        %1395 = vmatpush1.bf16.msra.mxu0 0
        %1396 = vmatprep.subr.bf16.mxu0 0
        %1397 = vmatpush1.bf16.msra.mxu0 0
        %1398 = vmatprep.subr.bf16.mxu0 0
        %1399 = vmatpush1.bf16.msra.mxu0 0
        %1400 = vmatprep.subr.bf16.mxu0 0
        %1401 = vmatpush1.bf16.msra.mxu0 0
        %1402 = vmatprep.subr.bf16.mxu0 0
        %1403 = vmatpush1.bf16.msra.mxu0 0
        %1404 = vmatprep.subr.bf16.mxu0 0
        %1405 = vmatpush1.bf16.msra.mxu0 0
        %1406 = vmatprep.subr.bf16.mxu0 0
        %1407 = vmatpush1.bf16.msra.mxu0 0
        %1408 = vmatprep.subr.bf16.mxu0 0
        %1409 = vmatpush1.bf16.msra.mxu0 0
        %1410 = vmatprep.subr.bf16.mxu0 0
        %1411 = vmatpush1.bf16.msra.mxu0 0
        %1412 = vmatprep.subr.bf16.mxu0 0
        %1413 = vmatpush1.bf16.msra.mxu0 0
        %1414 = vmatprep.subr.bf16.mxu0 0
        %1415 = vmatpush1.bf16.msra.mxu0 0
        %1416 = vmatprep.subr.bf16.mxu0 0
        %1417 = vmatpush1.bf16.msra.mxu0 0
        %1418 = vmatprep.subr.bf16.mxu0 0
        %1419 = vmatpush1.bf16.msra.mxu0 0
        %1420 = vmatprep.subr.bf16.mxu0 0
        %1421 = vmatpush1.bf16.msra.mxu0 0
        %1422 = vmatprep.mubr.bf16.mxu0 0
        %1423 = vmatmul.mubr.bf16.gmra.mrb[0].mxu0 %v1388
        %v1424 = vpop.f32.mrb[0].mxu0
        %v1425 = vadd.f32 %v1374, %v1424
        %v1426 = vpop.f32.mrb[0].mxu0
        %v1427 = vpop.f32.mrb[0].mxu0
        %v1428 = vpop.f32.mrb[0].mxu0
        %1429 = vdwg.mxu0
        %v1430 = vadd.f32 %v1425, %v828
        %v1431 = vsel %vm853, %v1430, 0.0
        %1432 = vadd.xlane.f32.xlu0 %v1431
        %v1433 = vpop.xlane.xlu0 %1432
        %v1434 = vrcp.pop 32.0
        %v1435 = vmul.f32 %v1433, %v1434
        %v1436 = vsub.f32 %v1430, %v1435
        %v1437 = vmul.f32 %v1436, %v1436
        %v1438 = vsel %vm853, %v1437, 0.0
        %1439 = vadd.xlane.f32.xlu0 %v1438
        %v1440 = vpop.xlane.xlu0 %1439
        %v1441 = vmul.f32 %v1440, %v1434
        %v1442 = vadd.f32 %v1441, 1e-05
        %v1443 = vrsqrt.pop %v1442
        %v1444 = vmul.f32 %v1436, %v1443
        %v1445 = vld [vmem:[%s10] sm:$0x1]
        %v1447 = vlaneseq
        %v1448 = vshrl.u32 %v1447, 7
        %v1449 = vsub.s32 0, %v1448
        %v1450 = vrot.slane %v1445, %v1449
        %v1452 = vmul.f32 %v1444, %v1450
        %v1453 = vld [vmem:[%s11] sm:$0x1]
        %v1455 = vlaneseq
        %v1456 = vshrl.u32 %v1455, 7
        %v1457 = vsub.s32 0, %v1456
        %v1458 = vrot.slane %v1453, %v1457
        %v1460 = vadd.f32 %v1452, %v1458
        %v1461 = vpack.c.bf16 %v1460, %v1460
        %v1462 = vld [vmem:[%s12] sm:$0xf]
        %v1463 = vld [vmem:[%s12 + $0x4] sm:$0xf]
        %v1464 = vld [vmem:[%s12 + $0x8] sm:$0xf]
        %v1465 = vld [vmem:[%s12 + $0xc] sm:$0xf]
        %v1466 = vld [vmem:[%s13] sm:$0x1]
        %v1468 = vlaneseq
        %v1469 = vshrl.u32 %v1468, 7
        %v1470 = vsub.s32 0, %v1469
        %v1471 = vrot.slane %v1466, %v1470
        %v1477 = vunpack.c.l.b16 %v1462
        %v1478 = vunpack.c.l.b16 %v1463
        %v1479 = vunpack.c.l.b16 %v1464
        %v1480 = vunpack.c.l.b16 %v1465
        %v1481 = vpack.c.b16 %v1478, %v1477
        %v1482 = vpack.c.b16 %v1480, %v1479
        %v1486 = vsel %vm853, %v1461, 0
        %1488 = vmatprep.subr.bf16.mxu0 0
        %1489 = vmatpush1.bf16.msra.mxu0 %v1481
        %1490 = vmatprep.subr.bf16.mxu0 0
        %1491 = vmatpush1.bf16.msra.mxu0 %v1482
        %1492 = vmatprep.subr.bf16.mxu0 0
        %1493 = vmatpush1.bf16.msra.mxu0 0
        %1494 = vmatprep.subr.bf16.mxu0 0
        %1495 = vmatpush1.bf16.msra.mxu0 0
        %1496 = vmatprep.subr.bf16.mxu0 0
        %1497 = vmatpush1.bf16.msra.mxu0 0
        %1498 = vmatprep.subr.bf16.mxu0 0
        %1499 = vmatpush1.bf16.msra.mxu0 0
        %1500 = vmatprep.subr.bf16.mxu0 0
        %1501 = vmatpush1.bf16.msra.mxu0 0
        %1502 = vmatprep.subr.bf16.mxu0 0
        %1503 = vmatpush1.bf16.msra.mxu0 0
        %1504 = vmatprep.subr.bf16.mxu0 0
        %1505 = vmatpush1.bf16.msra.mxu0 0
        %1506 = vmatprep.subr.bf16.mxu0 0
        %1507 = vmatpush1.bf16.msra.mxu0 0
        %1508 = vmatprep.subr.bf16.mxu0 0
        %1509 = vmatpush1.bf16.msra.mxu0 0
        %1510 = vmatprep.subr.bf16.mxu0 0
        %1511 = vmatpush1.bf16.msra.mxu0 0
        %1512 = vmatprep.subr.bf16.mxu0 0
        %1513 = vmatpush1.bf16.msra.mxu0 0
        %1514 = vmatprep.subr.bf16.mxu0 0
        %1515 = vmatpush1.bf16.msra.mxu0 0
        %1516 = vmatprep.subr.bf16.mxu0 0
        %1517 = vmatpush1.bf16.msra.mxu0 0
        %1518 = vmatprep.subr.bf16.mxu0 0
        %1519 = vmatpush1.bf16.msra.mxu0 0
        %1520 = vmatprep.mubr.bf16.mxu0 0
        %1521 = vmatmul.mubr.bf16.gmra.mrb[0].mxu0 %v1486
        %v1522 = vpop.f32.mrb[0].mxu0
        %v1523 = vadd.f32 %v1471, %v1522
        %v1524 = vpop.f32.mrb[0].mxu0
        %v1525 = vpop.f32.mrb[0].mxu0
        %v1526 = vpop.f32.mrb[0].mxu0
        %1527 = vdwg.mxu0
        %v1528 = vmul.f32 %v1523, 0.5
        %v1529 = vmul.f32 %v1523, 0.70710677
        %v1530 = verf.f32.pop %v1529
        %v1531 = vadd.f32 %v1530, 1.0
        %v1532 = vmul.f32 %v1528, %v1531
        %v1533 = vpack.c.bf16 %v1532, %v1532
        %v1534 = vld [vmem:[%s14] sm:$0xf]
        %v1535 = vld [vmem:[%s14 + $0x4] sm:$0xf]
        %v1536 = vld [vmem:[%s14 + $0x8] sm:$0xf]
        %v1537 = vld [vmem:[%s14 + $0xc] sm:$0xf]
        %v1538 = vld [vmem:[%s14 + $0x10] sm:$0xf]
        %v1539 = vld [vmem:[%s14 + $0x14] sm:$0xf]
        %v1540 = vld [vmem:[%s14 + $0x18] sm:$0xf]
        %v1541 = vld [vmem:[%s14 + $0x1c] sm:$0xf]
        %v1542 = vld [vmem:[%s15] sm:$0x1]
        %v1544 = vlaneseq
        %v1545 = vshrl.u32 %v1544, 7
        %v1546 = vsub.s32 0, %v1545
        %v1547 = vrot.slane %v1542, %v1546
        %v1557 = vunpack.c.l.b16 %v1534
        %v1558 = vunpack.c.l.b16 %v1535
        %v1559 = vunpack.c.l.b16 %v1536
        %v1560 = vunpack.c.l.b16 %v1537
        %v1561 = vunpack.c.l.b16 %v1538
        %v1562 = vunpack.c.l.b16 %v1539
        %v1563 = vunpack.c.l.b16 %v1540
        %v1564 = vunpack.c.l.b16 %v1541
        %v1565 = vpack.c.b16 %v1558, %v1557
        %v1566 = vpack.c.b16 %v1560, %v1559
        %v1567 = vpack.c.b16 %v1562, %v1561
        %v1568 = vpack.c.b16 %v1564, %v1563
        %vm1573 = vcmask 523264
        %v1575 = vsel %vm1573, %v1533, 0
        %1577 = vmatprep.subr.bf16.mxu0 0
        %1578 = vmatpush1.bf16.msra.mxu0 %v1565
        %1579 = vmatprep.subr.bf16.mxu0 0
        %1580 = vmatpush1.bf16.msra.mxu0 %v1566
        %1581 = vmatprep.subr.bf16.mxu0 0
        %1582 = vmatpush1.bf16.msra.mxu0 %v1567
        %1583 = vmatprep.subr.bf16.mxu0 0
        %1584 = vmatpush1.bf16.msra.mxu0 %v1568
        %1585 = vmatprep.subr.bf16.mxu0 0
        %1586 = vmatpush1.bf16.msra.mxu0 0
        %1587 = vmatprep.subr.bf16.mxu0 0
        %1588 = vmatpush1.bf16.msra.mxu0 0
        %1589 = vmatprep.subr.bf16.mxu0 0
        %1590 = vmatpush1.bf16.msra.mxu0 0
        %1591 = vmatprep.subr.bf16.mxu0 0
        %1592 = vmatpush1.bf16.msra.mxu0 0
        %1593 = vmatprep.subr.bf16.mxu0 0
        %1594 = vmatpush1.bf16.msra.mxu0 0
        %1595 = vmatprep.subr.bf16.mxu0 0
        %1596 = vmatpush1.bf16.msra.mxu0 0
        %1597 = vmatprep.subr.bf16.mxu0 0
        %1598 = vmatpush1.bf16.msra.mxu0 0
        %1599 = vmatprep.subr.bf16.mxu0 0
        %1600 = vmatpush1.bf16.msra.mxu0 0
        %1601 = vmatprep.subr.bf16.mxu0 0
        %1602 = vmatpush1.bf16.msra.mxu0 0
        %1603 = vmatprep.subr.bf16.mxu0 0
        %1604 = vmatpush1.bf16.msra.mxu0 0
        %1605 = vmatprep.subr.bf16.mxu0 0
        %1606 = vmatpush1.bf16.msra.mxu0 0
        %1607 = vmatprep.subr.bf16.mxu0 0
        %1608 = vmatpush1.bf16.msra.mxu0 0
        %1609 = vmatprep.mubr.bf16.mxu0 0
        %1610 = vmatmul.mubr.bf16.gmra.mrb[0].mxu0 %v1575
        %v1611 = vpop.f32.mrb[0].mxu0
        %v1612 = vadd.f32 %v1547, %v1611
        %v1613 = vpop.f32.mrb[0].mxu0
        %v1614 = vpop.f32.mrb[0].mxu0
        %v1615 = vpop.f32.mrb[0].mxu0
        %1616 = vdwg.mxu0
        %v1617 = vadd.f32 %v1612, %v1460
        %v1618 = vsel %vm853, %v1617, 0.0
        %1619 = vadd.xlane.f32.xlu0 %v1618
        %v1620 = vpop.xlane.xlu0 %1619
        %v1621 = vmul.f32 %v1620, %v1434
        %v1622 = vsub.f32 %v1617, %v1621
        %v1623 = vmul.f32 %v1622, %v1622
        %v1624 = vsel %vm853, %v1623, 0.0
        %1625 = vadd.xlane.f32.xlu0 %v1624
        %v1626 = vpop.xlane.xlu0 %1625
        %v1627 = vmul.f32 %v1626, %v1434
        %v1628 = vadd.f32 %v1627, 1e-05
        %v1629 = vrsqrt.pop %v1628
        %v1630 = vmul.f32 %v1622, %v1629
        %v1631 = vld [vmem:[%s16] sm:$0x1]
        %v1633 = vlaneseq
        %v1634 = vshrl.u32 %v1633, 7
        %v1635 = vsub.s32 0, %v1634
        %v1636 = vrot.slane %v1631, %v1635
        %v1638 = vmul.f32 %v1630, %v1636
        %v1639 = vld [vmem:[%s17] sm:$0x1]
        %v1641 = vlaneseq
        %v1642 = vshrl.u32 %v1641, 7
        %v1643 = vsub.s32 0, %v1642
        %v1644 = vrot.slane %v1639, %v1643
        %v1646 = vadd.f32 %v1638, %v1644
        %1647 = vst.msk [vmem:[%s679] sm:$0xff] %vm853, %v1646
        %s1648 = sand.u32 %s449, 1
        %s1649 = scalar_lea.sflag [#allocation6], %s1648
        %s1650 = sand.u32 %s449, 1
        %s1651 = smul.addr %s1650, 8
        %s1652 = scalar_lea.vmem [#allocation13], %s1651
        // Predicated region
        $region117: #{tpu_custom_call.1} parent=91 // pred_check
          %p1653 = pneg %p459
        $region118: #{tpu_custom_call.1} parent=91 // pred_check_branch
          %1655 = sbr.rel (%p1653) target = $region120
        $region119: #{tpu_custom_call.1} parent=91 // pred_region
          %s1657 = ssub.s32 128, 128
          %1658 = vsyncadd %s1649, %s1657
          %s1659 = sadd.s32 %s42, %s41
          %s1660 = smul.addr %s1659, 128
          %s1661 = scalar_lea.hbm %s18, %s1660
          %s1663 = sshll.u32 %s1652, 4
          %s1664 = int_to_ptr.vmem [resolvable:$true] %s1663
          %1666 = dma.vmem_to_hbm [thread:$0]  %s1664, 128, %s1661, %s1649
        $region120: #{tpu_custom_call.1} parent=91 // pred_fallthru
          _
      $region92: #{tpu_custom_call.1} parent=5 // pred_fallthru
        _
      %p1667 = scmp.le.s32.totalorder 2, %s32
      // Predicated region
      $region121: #{tpu_custom_call.1} parent=5 // pred_check
        %p1668 = pneg %p1667
      $region122: #{tpu_custom_call.1} parent=5 // pred_check_branch
        %1670 = sbr.rel (%p1668) target = $region124
      $region123: #{tpu_custom_call.1} parent=5 // pred_region
        %s1671 = ssub.s32 %s32, 2
        // Predicated region
        $region125: #{tpu_custom_call.1} parent=123 // pred_check
          %p1672 = pneg %p465
        $region126: #{tpu_custom_call.1} parent=123 // pred_check_branch
          %1674 = sbr.rel (%p1672) target = $region128
        $region127: #{tpu_custom_call.1} parent=123 // pred_region
          %s1675 = sand.u32 %s450, 1
          %s1676 = scalar_lea.sflag [#allocation6], %s1675
          %s1677 = sand.u32 %s450, 1
          %s1678 = smul.addr %s1677, 8
          %s1679 = scalar_lea.vmem [#allocation13], %s1678
          %1680 = dma.done %s1676, 128
        $region128: #{tpu_custom_call.1} parent=123 // pred_fallthru
          _
      $region124: #{tpu_custom_call.1} parent=5 // pred_fallthru
        _
    $region6: #{tpu_custom_call.1} parent=1 // loop_footer
      %s36 = sadd.s32 1, %s32
    $region7: #{tpu_custom_call.1} parent=1 // loop_footer_branch
      %31 = sbr.rel target = $region3
    $region8: #{tpu_custom_call.1} parent=1 // loop_exit
      _
    %1681 = vsyncpa [#allocation5], 1
    %s1682 = scalar_lea.sflag [#allocation5], 1
    %1683 = vsyncpa %s1682, 1
    %1684 = vsyncpa [#allocation8], 1
    %1685 = vsyncpa [#allocation11], 1
    %1686 = vsyncpa [#allocation6], 1
    %s1687 = scalar_lea.sflag [#allocation6], 1
    %1688 = vsyncpa %s1687, 1

// kernel: tpu_custom_call.1
$region0: #{tpu_custom_call.1}
  #allocation0 [shape = 'u32[]', space=smem, size = 0x4, offset = 0x4, fixed_abs, tag = 'smem constant byte address 0x4 - core index']
  #allocation1 [shape = 'u32[144,128]{1,0:T(1,128)}', space=vmem, size = 0x12000, scoped, tag = 'internal scratch']
  #allocation2 [shape = 'bf16[8,32]{1,0:T(8,128)(2,1)}', space=vmem, size = 0x800, scoped, tag = 'scratch operand']
  #allocation3 [shape = 'bf16[8,32]{1,0:T(8,128)(2,1)}', space=vmem, size = 0x800, scoped, tag = 'scratch operand']
  %s0 = inlined_call_operand.vmem [shape: f32[2,8,32], index: 0, kind: input, shape index: {}]
  %s1 = inlined_call_operand.hbm [shape: bf16[2,8,32], index: 1, kind: input, shape index: {}]
  %s2 = inlined_call_operand.vmem [shape: bf16[32,32], index: 2, kind: input, shape index: {}]
  %s3 = inlined_call_operand.vmem [shape: bf16[32,32], index: 3, kind: input, shape index: {}]
  %s4 = inlined_call_operand.hbm [shape: bf16[32,32], index: 4, kind: input, shape index: {}]
  %s5 = inlined_call_operand.vmem [shape: f32[1,32], index: 5, kind: input, shape index: {}]
  %s6 = inlined_call_operand.vmem [shape: f32[1,32], index: 6, kind: input, shape index: {}]
  %s7 = inlined_call_operand.hbm [shape: f32[1,32], index: 7, kind: input, shape index: {}]
  %s8 = inlined_call_operand.hbm [shape: bf16[32,32], index: 8, kind: input, shape index: {}]
  %s9 = inlined_call_operand.hbm [shape: f32[1,32], index: 9, kind: input, shape index: {}]
  %s10 = inlined_call_operand.vmem [shape: f32[1,32], index: 10, kind: input, shape index: {}]
  %s11 = inlined_call_operand.vmem [shape: f32[1,32], index: 11, kind: input, shape index: {}]
  %s12 = inlined_call_operand.vmem [shape: bf16[32,64], index: 12, kind: input, shape index: {}]
  %s13 = inlined_call_operand.vmem [shape: f32[1,64], index: 13, kind: input, shape index: {}]
  %s14 = inlined_call_operand.vmem [shape: bf16[64,32], index: 14, kind: input, shape index: {}]
  %s15 = inlined_call_operand.vmem [shape: f32[1,32], index: 15, kind: input, shape index: {}]
  %s16 = inlined_call_operand.vmem [shape: f32[1,32], index: 16, kind: input, shape index: {}]
  %s17 = inlined_call_operand.vmem [shape: f32[1,32], index: 17, kind: input, shape index: {}]
  %s18 = inlined_call_operand.hbm [shape: f32[2,8,32], index: 18, kind: output, shape index: {}]
  %s19 = sld [smem:[#allocation0]]
  $region129: #{tpu_custom_call.1} parent=0
    _
  %s21 = ssub.s32 1, %s19
  %s22 = scalar_select 0, %s21, %s19
  $region1: #{tpu_custom_call.1} parent=0
    #allocation4 [shape = 'u8[4096]{0}', space=vmem, size = 0x1000, scoped, tag = 'input window, operand 1']
    #allocation5 [shape = 's32[2]{0}', space=sflag, size = 0x8, scoped, tag = 'scoped memory for tpu_custom_call.1']
    #allocation6 [shape = 's32[2]{0}', space=sflag, size = 0x8, scoped, tag = 'scoped memory for tpu_custom_call.1']
    #allocation7 [shape = 'u8[8192]{0}', space=vmem, size = 0x2000, scoped, tag = 'input window, operand 4, single buffered']
    #allocation8 [shape = 's32[1]{0}', space=sflag, size = 0x4, scoped, tag = 'scoped memory for tpu_custom_call.1']
    #allocation9 [shape = 'u8[512]{0}', space=vmem, size = 0x400, scoped, tag = 'input window, operand 7, single buffered']
    #allocation10 [shape = 'u8[8192]{0}', space=vmem, size = 0x2000, scoped, tag = 'input window, operand 8, single buffered']
    #allocation11 [shape = 's32[1]{0}', space=sflag, size = 0x4, scoped, tag = 'scoped memory for tpu_custom_call.1']
    #allocation12 [shape = 'u8[512]{0}', space=vmem, size = 0x400, scoped, tag = 'input window, operand 9, single buffered']
    #allocation13 [shape = 'u8[8192]{0}', space=vmem, size = 0x2000, scoped, tag = 'output window, operand 0']
    %23 = vsyncpa [#allocation5], 0
    %s24 = scalar_lea.sflag [#allocation5], 1
    %25 = vsyncpa %s24, 0
    %26 = vsyncpa [#allocation8], 0
    %27 = vsyncpa [#allocation11], 0
    %28 = vsyncpa [#allocation6], 0
    %s29 = scalar_lea.sflag [#allocation6], 1
    %30 = vsyncpa %s29, 0
    loop: start=0, step=1, limit=4
    $region2: #{tpu_custom_call.1} parent=1 // loop_pre_header
      _
    $region3: #{tpu_custom_call.1} parent=1 // loop_header
      %s32 = sphi 0, %s36
      %p33 = scmp.ge.s32.totalorder %s32, 4
      %s39 = sphi 0, %s51
      %s40 = sphi 0, %s47
      %s41 = sphi 0, %s39
      %s42 = sphi 0, %s40
      %s43 = sphi 0, %s41
      %s44 = sphi 0, %s42
      %s56 = sphi 0, %s58
      %s59 = sphi 0, %s56
      %s60 = sphi 0, %s59
      %s76 = sphi 0, %s60
      %s82 = sphi 0, %s84
      %s85 = sphi 0, %s82
      %s86 = sphi 0, %s85
      %s102 = sphi 0, %s86
      %s106 = sphi 0, %s106
      %s108 = sphi 0, %s106
      %s109 = sphi 0, %s108
      %s123 = sphi 0, %s109
      %s127 = sphi 0, %s127
      %s129 = sphi 0, %s127
      %s130 = sphi 0, %s129
      %s144 = sphi 0, %s130
      %s148 = sphi 0, %s148
      %s150 = sphi 0, %s148
      %s151 = sphi 0, %s150
      %s165 = sphi 0, %s151
      %s169 = sphi 0, %s169
      %s171 = sphi 0, %s169
      %s172 = sphi 0, %s171
      %s186 = sphi 0, %s172
      %s190 = sphi 0, %s190
      %s192 = sphi 0, %s190
      %s193 = sphi 0, %s192
      %s207 = sphi 0, %s193
      %s211 = sphi 0, %s211
      %s213 = sphi 0, %s211
      %s214 = sphi 0, %s213
      %s228 = sphi 0, %s214
      %s232 = sphi 0, %s232
      %s234 = sphi 0, %s232
      %s235 = sphi 0, %s234
      %s249 = sphi 0, %s235
      %s253 = sphi 0, %s253
      %s255 = sphi 0, %s253
      %s256 = sphi 0, %s255
      %s270 = sphi 0, %s256
      %s274 = sphi 0, %s274
      %s276 = sphi 0, %s274
      %s277 = sphi 0, %s276
      %s291 = sphi 0, %s277
      %s295 = sphi 0, %s295
      %s297 = sphi 0, %s295
      %s298 = sphi 0, %s297
      %s312 = sphi 0, %s298
      %s316 = sphi 0, %s316
      %s318 = sphi 0, %s316
      %s319 = sphi 0, %s318
      %s333 = sphi 0, %s319
      %s337 = sphi 0, %s337
      %s339 = sphi 0, %s337
      %s340 = sphi 0, %s339
      %s354 = sphi 0, %s340
      %s358 = sphi 0, %s358
      %s360 = sphi 0, %s358
      %s361 = sphi 0, %s360
      %s375 = sphi 0, %s361
      %s379 = sphi 0, %s379
      %s381 = sphi 0, %s379
      %s382 = sphi 0, %s381
      %s396 = sphi 0, %s382
      %s400 = sphi 0, %s400
      %s402 = sphi 0, %s400
      %s403 = sphi 0, %s402
      %s417 = sphi 0, %s403
      %s421 = sphi 0, %s421
      %s423 = sphi 0, %s421
      %s424 = sphi 0, %s423
      %s438 = sphi 0, %s424
      %s446 = sphi 0, %s448
      %s449 = sphi 0, %s446
      %s450 = sphi 0, %s449
      %s466 = sphi 0, %s450
    $region4: #{tpu_custom_call.1} parent=1 // loop_header_branch
      %35 = sbr.rel (%p33) target = $region8
    $region5: #{tpu_custom_call.1} parent=1 // loop_body
      %s37 = ssub.s32 %s32, 1
      %s38 = ssub.s32 %s32, 2
      %s45 = sadd.s32 1, %s40
      %p46 = scmp.ge.s32.totalorder %s45, 1
      %s47 = scalar_select %p46, 0, %s45
      %s48 = sadd.s32 1, %s39
      %s49 = scalar_select %p46, %s48, %s39
      %p50 = scmp.ge.s32.totalorder %s49, 2
      %s51 = scalar_select %p50, 0, %s49
      %s52 = ssub.s32 %s39, %s51
      %s53 = ssub.s32 %s40, %s47
      %s54 = sor.u32 %s52, %s53
      %p55 = scmp.eq.s32.totalorder %s54, 0
      %s57 = sadd.s32 %s56, 1
      %s58 = scalar_select %p55, %s56, %s57
      %p61 = pneg %p55
      %p62 = scmp.eq.s32.totalorder %s32, 1
      %p63 = por %p61, %p62
      %p64 = scmp.ne.s32.totalorder %s56, %s59
      %p65 = scmp.eq.s32.totalorder %s32, 0
      %p66 = por %p64, %p65
      %p67 = scmp.ne.s32.totalorder %s56, %s59
      %p68 = scmp.eq.s32.totalorder %s37, 1
      %p69 = por %p67, %p68
      %p70 = scmp.ne.s32.totalorder %s59, %s60
      %p71 = scmp.eq.s32.totalorder %s37, 0
      %p72 = por %p70, %p71
      %p73 = scmp.ne.s32.totalorder %s59, %s60
      %p74 = scmp.eq.s32.totalorder %s38, 1
      %p75 = por %p73, %p74
      %p77 = scmp.ne.s32.totalorder %s60, %s76
      %p78 = scmp.eq.s32.totalorder %s38, 0
      %p79 = por %p77, %p78
      %s80 = ssub.s32 %s39, %s51
      %p81 = scmp.eq.s32.totalorder %s80, 0
      %s83 = sadd.s32 %s82, 1
      %s84 = scalar_select %p81, %s82, %s83
      %p87 = pneg %p81
      %p88 = scmp.eq.s32.totalorder %s32, 1
      %p89 = por %p87, %p88
      %p90 = scmp.ne.s32.totalorder %s82, %s85
      %p91 = scmp.eq.s32.totalorder %s32, 0
      %p92 = por %p90, %p91
      %p93 = scmp.ne.s32.totalorder %s82, %s85
      %p94 = scmp.eq.s32.totalorder %s37, 1
      %p95 = por %p93, %p94
      %p96 = scmp.ne.s32.totalorder %s85, %s86
      %p97 = scmp.eq.s32.totalorder %s37, 0
      %p98 = por %p96, %p97
      %p99 = scmp.ne.s32.totalorder %s85, %s86
      %p100 = scmp.eq.s32.totalorder %s38, 1
      %p101 = por %p99, %p100
      %p103 = scmp.ne.s32.totalorder %s86, %s102
      %p104 = scmp.eq.s32.totalorder %s38, 0
      %p105 = por %p103, %p104
      %s107 = sadd.s32 %s106, 1
      %p110 = scmp.eq.s32.totalorder %s32, 1
      %p111 = scmp.ne.s32.totalorder %s106, %s108
      %p112 = scmp.eq.s32.totalorder %s32, 0
      %p113 = por %p111, %p112
      %p114 = scmp.ne.s32.totalorder %s106, %s108
      %p115 = scmp.eq.s32.totalorder %s37, 1
      %p116 = por %p114, %p115
      %p117 = scmp.ne.s32.totalorder %s108, %s109
      %p118 = scmp.eq.s32.totalorder %s37, 0
      %p119 = por %p117, %p118
      %p120 = scmp.ne.s32.totalorder %s108, %s109
      %p121 = scmp.eq.s32.totalorder %s38, 1
      %p122 = por %p120, %p121
      %p124 = scmp.ne.s32.totalorder %s109, %s123
      %p125 = scmp.eq.s32.totalorder %s38, 0
      %p126 = por %p124, %p125
      %s128 = sadd.s32 %s127, 1
      %p131 = scmp.eq.s32.totalorder %s32, 1
      %p132 = scmp.ne.s32.totalorder %s127, %s129
      %p133 = scmp.eq.s32.totalorder %s32, 0
      %p134 = por %p132, %p133
      %p135 = scmp.ne.s32.totalorder %s127, %s129
      %p136 = scmp.eq.s32.totalorder %s37, 1
      %p137 = por %p135, %p136
      %p138 = scmp.ne.s32.totalorder %s129, %s130
      %p139 = scmp.eq.s32.totalorder %s37, 0
      %p140 = por %p138, %p139
      %p141 = scmp.ne.s32.totalorder %s129, %s130
      %p142 = scmp.eq.s32.totalorder %s38, 1
      %p143 = por %p141, %p142
      %p145 = scmp.ne.s32.totalorder %s130, %s144
      %p146 = scmp.eq.s32.totalorder %s38, 0
      %p147 = por %p145, %p146
      %s149 = sadd.s32 %s148, 1
      %p152 = scmp.eq.s32.totalorder %s32, 1
      %p153 = scmp.ne.s32.totalorder %s148, %s150
      %p154 = scmp.eq.s32.totalorder %s32, 0
      %p155 = por %p153, %p154
      %p156 = scmp.ne.s32.totalorder %s148, %s150
      %p157 = scmp.eq.s32.totalorder %s37, 1
      %p158 = por %p156, %p157
      %p159 = scmp.ne.s32.totalorder %s150, %s151
      %p160 = scmp.eq.s32.totalorder %s37, 0
      %p161 = por %p159, %p160
      %p162 = scmp.ne.s32.totalorder %s150, %s151
      %p163 = scmp.eq.s32.totalorder %s38, 1
      %p164 = por %p162, %p163
      %p166 = scmp.ne.s32.totalorder %s151, %s165
      %p167 = scmp.eq.s32.totalorder %s38, 0
      %p168 = por %p166, %p167
      %s170 = sadd.s32 %s169, 1
      %p173 = scmp.eq.s32.totalorder %s32, 1
      %p174 = scmp.ne.s32.totalorder %s169, %s171
      %p175 = scmp.eq.s32.totalorder %s32, 0
      %p176 = por %p174, %p175
      %p177 = scmp.ne.s32.totalorder %s169, %s171
      %p178 = scmp.eq.s32.totalorder %s37, 1
      %p179 = por %p177, %p178
      %p180 = scmp.ne.s32.totalorder %s171, %s172
      %p181 = scmp.eq.s32.totalorder %s37, 0
      %p182 = por %p180, %p181
      %p183 = scmp.ne.s32.totalorder %s171, %s172
      %p184 = scmp.eq.s32.totalorder %s38, 1
      %p185 = por %p183, %p184
      %p187 = scmp.ne.s32.totalorder %s172, %s186
      %p188 = scmp.eq.s32.totalorder %s38, 0
      %p189 = por %p187, %p188
      %s191 = sadd.s32 %s190, 1
      %p194 = scmp.eq.s32.totalorder %s32, 1
      %p195 = scmp.ne.s32.totalorder %s190, %s192
      %p196 = scmp.eq.s32.totalorder %s32, 0
      %p197 = por %p195, %p196
      %p198 = scmp.ne.s32.totalorder %s190, %s192
      %p199 = scmp.eq.s32.totalorder %s37, 1
      %p200 = por %p198, %p199
      %p201 = scmp.ne.s32.totalorder %s192, %s193
      %p202 = scmp.eq.s32.totalorder %s37, 0
      %p203 = por %p201, %p202
      %p204 = scmp.ne.s32.totalorder %s192, %s193
      %p205 = scmp.eq.s32.totalorder %s38, 1
      %p206 = por %p204, %p205
      %p208 = scmp.ne.s32.totalorder %s193, %s207
      %p209 = scmp.eq.s32.totalorder %s38, 0
      %p210 = por %p208, %p209
      %s212 = sadd.s32 %s211, 1
      %p215 = scmp.eq.s32.totalorder %s32, 1
      %p216 = scmp.ne.s32.totalorder %s211, %s213
      %p217 = scmp.eq.s32.totalorder %s32, 0
      %p218 = por %p216, %p217
      %p219 = scmp.ne.s32.totalorder %s211, %s213
      %p220 = scmp.eq.s32.totalorder %s37, 1
      %p221 = por %p219, %p220
      %p222 = scmp.ne.s32.totalorder %s213, %s214
      %p223 = scmp.eq.s32.totalorder %s37, 0
      %p224 = por %p222, %p223
      %p225 = scmp.ne.s32.totalorder %s213, %s214
      %p226 = scmp.eq.s32.totalorder %s38, 1
      %p227 = por %p225, %p226
      %p229 = scmp.ne.s32.totalorder %s214, %s228
      %p230 = scmp.eq.s32.totalorder %s38, 0
      %p231 = por %p229, %p230
      %s233 = sadd.s32 %s232, 1
      %p236 = scmp.eq.s32.totalorder %s32, 1
      %p237 = scmp.ne.s32.totalorder %s232, %s234
      %p238 = scmp.eq.s32.totalorder %s32, 0
      %p239 = por %p237, %p238
      %p240 = scmp.ne.s32.totalorder %s232, %s234
      %p241 = scmp.eq.s32.totalorder %s37, 1
      %p242 = por %p240, %p241
      %p243 = scmp.ne.s32.totalorder %s234, %s235
      %p244 = scmp.eq.s32.totalorder %s37, 0
      %p245 = por %p243, %p244
      %p246 = scmp.ne.s32.totalorder %s234, %s235
      %p247 = scmp.eq.s32.totalorder %s38, 1
      %p248 = por %p246, %p247
      %p250 = scmp.ne.s32.totalorder %s235, %s249
      %p251 = scmp.eq.s32.totalorder %s38, 0
      %p252 = por %p250, %p251
      %s254 = sadd.s32 %s253, 1
      %p257 = scmp.eq.s32.totalorder %s32, 1
      %p258 = scmp.ne.s32.totalorder %s253, %s255
      %p259 = scmp.eq.s32.totalorder %s32, 0
      %p260 = por %p258, %p259
      %p261 = scmp.ne.s32.totalorder %s253, %s255
      %p262 = scmp.eq.s32.totalorder %s37, 1
      %p263 = por %p261, %p262
      %p264 = scmp.ne.s32.totalorder %s255, %s256
      %p265 = scmp.eq.s32.totalorder %s37, 0
      %p266 = por %p264, %p265
      %p267 = scmp.ne.s32.totalorder %s255, %s256
      %p268 = scmp.eq.s32.totalorder %s38, 1
      %p269 = por %p267, %p268
      %p271 = scmp.ne.s32.totalorder %s256, %s270
      %p272 = scmp.eq.s32.totalorder %s38, 0
      %p273 = por %p271, %p272
      %s275 = sadd.s32 %s274, 1
      %p278 = scmp.eq.s32.totalorder %s32, 1
      %p279 = scmp.ne.s32.totalorder %s274, %s276
      %p280 = scmp.eq.s32.totalorder %s32, 0
      %p281 = por %p279, %p280
      %p282 = scmp.ne.s32.totalorder %s274, %s276
      %p283 = scmp.eq.s32.totalorder %s37, 1
      %p284 = por %p282, %p283
      %p285 = scmp.ne.s32.totalorder %s276, %s277
      %p286 = scmp.eq.s32.totalorder %s37, 0
      %p287 = por %p285, %p286
      %p288 = scmp.ne.s32.totalorder %s276, %s277
      %p289 = scmp.eq.s32.totalorder %s38, 1
      %p290 = por %p288, %p289
      %p292 = scmp.ne.s32.totalorder %s277, %s291
      %p293 = scmp.eq.s32.totalorder %s38, 0
      %p294 = por %p292, %p293
      %s296 = sadd.s32 %s295, 1
      %p299 = scmp.eq.s32.totalorder %s32, 1
      %p300 = scmp.ne.s32.totalorder %s295, %s297
      %p301 = scmp.eq.s32.totalorder %s32, 0
      %p302 = por %p300, %p301
      %p303 = scmp.ne.s32.totalorder %s295, %s297
      %p304 = scmp.eq.s32.totalorder %s37, 1
      %p305 = por %p303, %p304
      %p306 = scmp.ne.s32.totalorder %s297, %s298
      %p307 = scmp.eq.s32.totalorder %s37, 0
      %p308 = por %p306, %p307
      %p309 = scmp.ne.s32.totalorder %s297, %s298
      %p310 = scmp.eq.s32.totalorder %s38, 1
      %p311 = por %p309, %p310
      %p313 = scmp.ne.s32.totalorder %s298, %s312
      %p314 = scmp.eq.s32.totalorder %s38, 0
      %p315 = por %p313, %p314
      %s317 = sadd.s32 %s316, 1
      %p320 = scmp.eq.s32.totalorder %s32, 1
      %p321 = scmp.ne.s32.totalorder %s316, %s318
      %p322 = scmp.eq.s32.totalorder %s32, 0
      %p323 = por %p321, %p322
      %p324 = scmp.ne.s32.totalorder %s316, %s318
      %p325 = scmp.eq.s32.totalorder %s37, 1
      %p326 = por %p324, %p325
      %p327 = scmp.ne.s32.totalorder %s318, %s319
      %p328 = scmp.eq.s32.totalorder %s37, 0
      %p329 = por %p327, %p328
      %p330 = scmp.ne.s32.totalorder %s318, %s319
      %p331 = scmp.eq.s32.totalorder %s38, 1
      %p332 = por %p330, %p331
      %p334 = scmp.ne.s32.totalorder %s319, %s333
      %p335 = scmp.eq.s32.totalorder %s38, 0
      %p336 = por %p334, %p335
      %s338 = sadd.s32 %s337, 1
      %p341 = scmp.eq.s32.totalorder %s32, 1
      %p342 = scmp.ne.s32.totalorder %s337, %s339
      %p343 = scmp.eq.s32.totalorder %s32, 0
      %p344 = por %p342, %p343
      %p345 = scmp.ne.s32.totalorder %s337, %s339
      %p346 = scmp.eq.s32.totalorder %s37, 1
      %p347 = por %p345, %p346
      %p348 = scmp.ne.s32.totalorder %s339, %s340
      %p349 = scmp.eq.s32.totalorder %s37, 0
      %p350 = por %p348, %p349
      %p351 = scmp.ne.s32.totalorder %s339, %s340
      %p352 = scmp.eq.s32.totalorder %s38, 1
      %p353 = por %p351, %p352
      %p355 = scmp.ne.s32.totalorder %s340, %s354
      %p356 = scmp.eq.s32.totalorder %s38, 0
      %p357 = por %p355, %p356
      %s359 = sadd.s32 %s358, 1
      %p362 = scmp.eq.s32.totalorder %s32, 1
      %p363 = scmp.ne.s32.totalorder %s358, %s360
      %p364 = scmp.eq.s32.totalorder %s32, 0
      %p365 = por %p363, %p364
      %p366 = scmp.ne.s32.totalorder %s358, %s360
      %p367 = scmp.eq.s32.totalorder %s37, 1
      %p368 = por %p366, %p367
      %p369 = scmp.ne.s32.totalorder %s360, %s361
      %p370 = scmp.eq.s32.totalorder %s37, 0
      %p371 = por %p369, %p370
      %p372 = scmp.ne.s32.totalorder %s360, %s361
      %p373 = scmp.eq.s32.totalorder %s38, 1
      %p374 = por %p372, %p373
      %p376 = scmp.ne.s32.totalorder %s361, %s375
      %p377 = scmp.eq.s32.totalorder %s38, 0
      %p378 = por %p376, %p377
      %s380 = sadd.s32 %s379, 1
      %p383 = scmp.eq.s32.totalorder %s32, 1
      %p384 = scmp.ne.s32.totalorder %s379, %s381
      %p385 = scmp.eq.s32.totalorder %s32, 0
      %p386 = por %p384, %p385
      %p387 = scmp.ne.s32.totalorder %s379, %s381
      %p388 = scmp.eq.s32.totalorder %s37, 1
      %p389 = por %p387, %p388
      %p390 = scmp.ne.s32.totalorder %s381, %s382
      %p391 = scmp.eq.s32.totalorder %s37, 0
      %p392 = por %p390, %p391
      %p393 = scmp.ne.s32.totalorder %s381, %s382
      %p394 = scmp.eq.s32.totalorder %s38, 1
      %p395 = por %p393, %p394
      %p397 = scmp.ne.s32.totalorder %s382, %s396
      %p398 = scmp.eq.s32.totalorder %s38, 0
      %p399 = por %p397, %p398
      %s401 = sadd.s32 %s400, 1
      %p404 = scmp.eq.s32.totalorder %s32, 1
      %p405 = scmp.ne.s32.totalorder %s400, %s402
      %p406 = scmp.eq.s32.totalorder %s32, 0
      %p407 = por %p405, %p406
      %p408 = scmp.ne.s32.totalorder %s400, %s402
      %p409 = scmp.eq.s32.totalorder %s37, 1
      %p410 = por %p408, %p409
      %p411 = scmp.ne.s32.totalorder %s402, %s403
      %p412 = scmp.eq.s32.totalorder %s37, 0
      %p413 = por %p411, %p412
      %p414 = scmp.ne.s32.totalorder %s402, %s403
      %p415 = scmp.eq.s32.totalorder %s38, 1
      %p416 = por %p414, %p415
      %p418 = scmp.ne.s32.totalorder %s403, %s417
      %p419 = scmp.eq.s32.totalorder %s38, 0
      %p420 = por %p418, %p419
      %s422 = sadd.s32 %s421, 1
      %p425 = scmp.eq.s32.totalorder %s32, 1
      %p426 = scmp.ne.s32.totalorder %s421, %s423
      %p427 = scmp.eq.s32.totalorder %s32, 0
      %p428 = por %p426, %p427
      %p429 = scmp.ne.s32.totalorder %s421, %s423
      %p430 = scmp.eq.s32.totalorder %s37, 1
      %p431 = por %p429, %p430
      %p432 = scmp.ne.s32.totalorder %s423, %s424
      %p433 = scmp.eq.s32.totalorder %s37, 0
      %p434 = por %p432, %p433
      %p435 = scmp.ne.s32.totalorder %s423, %s424
      %p436 = scmp.eq.s32.totalorder %s38, 1
      %p437 = por %p435, %p436
      %p439 = scmp.ne.s32.totalorder %s424, %s438
      %p440 = scmp.eq.s32.totalorder %s38, 0
      %p441 = por %p439, %p440
      %s442 = ssub.s32 %s39, %s51
      %s443 = ssub.s32 %s40, %s47
      %s444 = sor.u32 %s442, %s443
      %p445 = scmp.eq.s32.totalorder %s444, 0
      %s447 = sadd.s32 %s446, 1
      %s448 = scalar_select %p445, %s446, %s447
      %p451 = pneg %p445
      %p452 = scmp.eq.s32.totalorder %s32, 1
      %p453 = por %p451, %p452
      %p454 = scmp.ne.s32.totalorder %s446, %s449
      %p455 = scmp.eq.s32.totalorder %s32, 0
      %p456 = por %p454, %p455
      %p457 = scmp.ne.s32.totalorder %s446, %s449
      %p458 = scmp.eq.s32.totalorder %s37, 1
      %p459 = por %p457, %p458
      %p460 = scmp.ne.s32.totalorder %s449, %s450
      %p461 = scmp.eq.s32.totalorder %s37, 0
      %p462 = por %p460, %p461
      %p463 = scmp.ne.s32.totalorder %s449, %s450
      %p464 = scmp.eq.s32.totalorder %s38, 1
      %p465 = por %p463, %p464
      %p467 = scmp.ne.s32.totalorder %s450, %s466
      %p468 = scmp.eq.s32.totalorder %s38, 0
      %p469 = por %p467, %p468
      %p470 = scmp.le.s32.totalorder 1, %s32
      %p471 = scmp.lt.s32.totalorder %s32, 3
      %p472 = pnand %p470, %p471
      %p473 = pneg %p472
      // Predicated region
      $region9: #{tpu_custom_call.1} parent=5 // pred_check
        _
      $region10: #{tpu_custom_call.1} parent=5 // pred_check_branch
        %475 = sbr.rel (%p472) target = $region12
      $region11: #{tpu_custom_call.1} parent=5 // pred_region
        %s476 = ssub.s32 %s32, 1
        // Predicated region
        $region13: #{tpu_custom_call.1} parent=11 // pred_check
          %p477 = pneg %p119
        $region14: #{tpu_custom_call.1} parent=11 // pred_check_branch
          %479 = sbr.rel (%p477) target = $region16
        $region15: #{tpu_custom_call.1} parent=11 // pred_region
          _
        $region16: #{tpu_custom_call.1} parent=11 // pred_fallthru
          _
        // Predicated region
        $region17: #{tpu_custom_call.1} parent=11 // pred_check
          %p480 = pneg %p140
        $region18: #{tpu_custom_call.1} parent=11 // pred_check_branch
          %482 = sbr.rel (%p480) target = $region20
        $region19: #{tpu_custom_call.1} parent=11 // pred_region
          _
        $region20: #{tpu_custom_call.1} parent=11 // pred_fallthru
          _
        // Predicated region
        $region21: #{tpu_custom_call.1} parent=11 // pred_check
          %p483 = pneg %p161
        $region22: #{tpu_custom_call.1} parent=11 // pred_check_branch
          %485 = sbr.rel (%p483) target = $region24
        $region23: #{tpu_custom_call.1} parent=11 // pred_region
          %s487 = ssub.s32 256, 256
          %488 = vsyncadd [#allocation8], %s487
          %s489 = sshll.u32 [#allocation7], 4
          %s490 = int_to_ptr.vmem [resolvable:$true] %s489
          %495 = dma.hbm_to_vmem [thread:$0]  %s4, 256, %s490, [#allocation8], 64, 64, 4
        $region24: #{tpu_custom_call.1} parent=11 // pred_fallthru
          _
        // Predicated region
        $region25: #{tpu_custom_call.1} parent=11 // pred_check
          %p496 = pneg %p182
        $region26: #{tpu_custom_call.1} parent=11 // pred_check_branch
          %498 = sbr.rel (%p496) target = $region28
        $region27: #{tpu_custom_call.1} parent=11 // pred_region
          _
        $region28: #{tpu_custom_call.1} parent=11 // pred_fallthru
          _
        // Predicated region
        $region29: #{tpu_custom_call.1} parent=11 // pred_check
          %p499 = pneg %p203
        $region30: #{tpu_custom_call.1} parent=11 // pred_check_branch
          %501 = sbr.rel (%p499) target = $region32
        $region31: #{tpu_custom_call.1} parent=11 // pred_region
          _
        $region32: #{tpu_custom_call.1} parent=11 // pred_fallthru
          _
        // Predicated region
        $region33: #{tpu_custom_call.1} parent=11 // pred_check
          %p502 = pneg %p224
        $region34: #{tpu_custom_call.1} parent=11 // pred_check_branch
          %504 = sbr.rel (%p502) target = $region36
        $region35: #{tpu_custom_call.1} parent=11 // pred_region
          %s506 = ssub.s32 16, 16
          %507 = vsyncadd [#allocation8], %s506
          %s509 = sshll.u32 [#allocation9], 4
          %s510 = int_to_ptr.vmem [resolvable:$true] %s509
          %512 = dma.hbm_to_vmem [thread:$0]  %s7, 16, %s510, [#allocation8]
        $region36: #{tpu_custom_call.1} parent=11 // pred_fallthru
          _
        // Predicated region
        $region37: #{tpu_custom_call.1} parent=11 // pred_check
          %p513 = pneg %p245
        $region38: #{tpu_custom_call.1} parent=11 // pred_check_branch
          %515 = sbr.rel (%p513) target = $region40
        $region39: #{tpu_custom_call.1} parent=11 // pred_region
          %s517 = ssub.s32 256, 256
          %518 = vsyncadd [#allocation11], %s517
          %s519 = sshll.u32 [#allocation10], 4
          %s520 = int_to_ptr.vmem [resolvable:$true] %s519
          %525 = dma.hbm_to_vmem [thread:$0]  %s8, 256, %s520, [#allocation11], 64, 64, 4
        $region40: #{tpu_custom_call.1} parent=11 // pred_fallthru
          _
        // Predicated region
        $region41: #{tpu_custom_call.1} parent=11 // pred_check
          %p526 = pneg %p266
        $region42: #{tpu_custom_call.1} parent=11 // pred_check_branch
          %528 = sbr.rel (%p526) target = $region44
        $region43: #{tpu_custom_call.1} parent=11 // pred_region
          %s530 = ssub.s32 16, 16
          %531 = vsyncadd [#allocation11], %s530
          %s533 = sshll.u32 [#allocation12], 4
          %s534 = int_to_ptr.vmem [resolvable:$true] %s533
          %536 = dma.hbm_to_vmem [thread:$0]  %s9, 16, %s534, [#allocation11]
        $region44: #{tpu_custom_call.1} parent=11 // pred_fallthru
          _
        // Predicated region
        $region45: #{tpu_custom_call.1} parent=11 // pred_check
          %p537 = pneg %p287
        $region46: #{tpu_custom_call.1} parent=11 // pred_check_branch
          %539 = sbr.rel (%p537) target = $region48
        $region47: #{tpu_custom_call.1} parent=11 // pred_region
          _
        $region48: #{tpu_custom_call.1} parent=11 // pred_fallthru
          _
        // Predicated region
        $region49: #{tpu_custom_call.1} parent=11 // pred_check
          %p540 = pneg %p308
        $region50: #{tpu_custom_call.1} parent=11 // pred_check_branch
          %542 = sbr.rel (%p540) target = $region52
        $region51: #{tpu_custom_call.1} parent=11 // pred_region
          _
        $region52: #{tpu_custom_call.1} parent=11 // pred_fallthru
          _
        // Predicated region
        $region53: #{tpu_custom_call.1} parent=11 // pred_check
          %p543 = pneg %p329
        $region54: #{tpu_custom_call.1} parent=11 // pred_check_branch
          %545 = sbr.rel (%p543) target = $region56
        $region55: #{tpu_custom_call.1} parent=11 // pred_region
          _
        $region56: #{tpu_custom_call.1} parent=11 // pred_fallthru
          _
        // Predicated region
        $region57: #{tpu_custom_call.1} parent=11 // pred_check
          %p546 = pneg %p350
        $region58: #{tpu_custom_call.1} parent=11 // pred_check_branch
          %548 = sbr.rel (%p546) target = $region60
        $region59: #{tpu_custom_call.1} parent=11 // pred_region
          _
        $region60: #{tpu_custom_call.1} parent=11 // pred_fallthru
          _
        // Predicated region
        $region61: #{tpu_custom_call.1} parent=11 // pred_check
          %p549 = pneg %p371
        $region62: #{tpu_custom_call.1} parent=11 // pred_check_branch
          %551 = sbr.rel (%p549) target = $region64
        $region63: #{tpu_custom_call.1} parent=11 // pred_region
          _
        $region64: #{tpu_custom_call.1} parent=11 // pred_fallthru
          _
        // Predicated region
        $region65: #{tpu_custom_call.1} parent=11 // pred_check
          %p552 = pneg %p392
        $region66: #{tpu_custom_call.1} parent=11 // pred_check_branch
          %554 = sbr.rel (%p552) target = $region68
        $region67: #{tpu_custom_call.1} parent=11 // pred_region
          _
        $region68: #{tpu_custom_call.1} parent=11 // pred_fallthru
          _
        // Predicated region
        $region69: #{tpu_custom_call.1} parent=11 // pred_check
          %p555 = pneg %p413
        $region70: #{tpu_custom_call.1} parent=11 // pred_check_branch
          %557 = sbr.rel (%p555) target = $region72
        $region71: #{tpu_custom_call.1} parent=11 // pred_region
          _
        $region72: #{tpu_custom_call.1} parent=11 // pred_fallthru
          _
        // Predicated region
        $region73: #{tpu_custom_call.1} parent=11 // pred_check
          %p558 = pneg %p434
        $region74: #{tpu_custom_call.1} parent=11 // pred_check_branch
          %560 = sbr.rel (%p558) target = $region76
        $region75: #{tpu_custom_call.1} parent=11 // pred_region
          _
        $region76: #{tpu_custom_call.1} parent=11 // pred_fallthru
          _
      $region12: #{tpu_custom_call.1} parent=5 // pred_fallthru
        _
      %p561 = scmp.lt.s32.totalorder %s32, 2
      // Predicated region
      $region77: #{tpu_custom_call.1} parent=5 // pred_check
        %p562 = pneg %p561
      $region78: #{tpu_custom_call.1} parent=5 // pred_check_branch
        %564 = sbr.rel (%p562) target = $region80
      $region79: #{tpu_custom_call.1} parent=5 // pred_region
        // Predicated region
        $region81: #{tpu_custom_call.1} parent=79 // pred_check
          %p565 = pneg %p66
        $region82: #{tpu_custom_call.1} parent=79 // pred_check_branch
          %567 = sbr.rel (%p565) target = $region84
        $region83: #{tpu_custom_call.1} parent=79 // pred_region
          %p568 = scmp.lt.s32.totalorder %s39, 1
          %s569 = scalar_select %p568, %s39, 1
          %p570 = scmp.lt.s32.totalorder %s40, 0
          %s571 = scalar_select %p570, %s40, 0
          %s572 = sadd.s32 %s571, %s569
          %s573 = smul.addr %s572, 8
          %s574 = scalar_lea.vmem %s0, %s573
        $region84: #{tpu_custom_call.1} parent=79 // pred_fallthru
          _
        // Predicated region
        $region85: #{tpu_custom_call.1} parent=79 // pred_check
          %p575 = pneg %p92
        $region86: #{tpu_custom_call.1} parent=79 // pred_check_branch
          %577 = sbr.rel (%p575) target = $region88
        $region87: #{tpu_custom_call.1} parent=79 // pred_region
          %s578 = sand.u32 %s82, 1
          %s579 = scalar_lea.sflag [#allocation5], %s578
          %s580 = sand.u32 %s82, 1
          %s581 = smul.addr %s580, 4
          %s582 = scalar_lea.vmem [#allocation4], %s581
          %s584 = ssub.s32 64, 64
          %585 = vsyncadd %s579, %s584
          %s586 = smul.addr %s39, 64
          %s587 = scalar_lea.hbm %s1, %s586
          %s589 = sshll.u32 %s582, 4
          %s590 = int_to_ptr.vmem [resolvable:$true] %s589
          %592 = dma.hbm_to_vmem [thread:$0]  %s587, 64, %s590, %s579
        $region88: #{tpu_custom_call.1} parent=79 // pred_fallthru
          _
      $region80: #{tpu_custom_call.1} parent=5 // pred_fallthru
        _
      %p593 = scmp.le.s32.totalorder 1, %s32
      %p594 = scmp.lt.s32.totalorder %s32, 3
      %p595 = pnand %p593, %p594
      %p596 = pneg %p595
      // Predicated region
      $region89: #{tpu_custom_call.1} parent=5 // pred_check
        _
      $region90: #{tpu_custom_call.1} parent=5 // pred_check_branch
        %598 = sbr.rel (%p595) target = $region92
      $region91: #{tpu_custom_call.1} parent=5 // pred_region
        %s599 = ssub.s32 %s32, 1
        %s600 = sand.u32 %s85, 1
        %s601 = scalar_lea.sflag [#allocation5], %s600
        %s602 = sand.u32 %s85, 1
        %s603 = smul.addr %s602, 4
        %s604 = scalar_lea.vmem [#allocation4], %s603
        // Predicated region
        $region93: #{tpu_custom_call.1} parent=91 // pred_check
          %p605 = pneg %p98
        $region94: #{tpu_custom_call.1} parent=91 // pred_check_branch
          %607 = sbr.rel (%p605) target = $region96
        $region95: #{tpu_custom_call.1} parent=91 // pred_region
          %608 = dma.done %s601, 64
        $region96: #{tpu_custom_call.1} parent=91 // pred_fallthru
          _
        // Predicated region
        $region97: #{tpu_custom_call.1} parent=91 // pred_check
          %p609 = pneg %p161
        $region98: #{tpu_custom_call.1} parent=91 // pred_check_branch
          %611 = sbr.rel (%p609) target = $region100
        $region99: #{tpu_custom_call.1} parent=91 // pred_region
          %612 = dma.done [#allocation8], 256
        $region100: #{tpu_custom_call.1} parent=91 // pred_fallthru
          _
        // Predicated region
        $region101: #{tpu_custom_call.1} parent=91 // pred_check
          %p613 = pneg %p224
        $region102: #{tpu_custom_call.1} parent=91 // pred_check_branch
          %615 = sbr.rel (%p613) target = $region104
        $region103: #{tpu_custom_call.1} parent=91 // pred_region
          %616 = dma.done [#allocation8], 16
        $region104: #{tpu_custom_call.1} parent=91 // pred_fallthru
          _
        // Predicated region
        $region105: #{tpu_custom_call.1} parent=91 // pred_check
          %p617 = pneg %p245
        $region106: #{tpu_custom_call.1} parent=91 // pred_check_branch
          %619 = sbr.rel (%p617) target = $region108
        $region107: #{tpu_custom_call.1} parent=91 // pred_region
          %620 = dma.done [#allocation11], 256
        $region108: #{tpu_custom_call.1} parent=91 // pred_fallthru
          _
        // Predicated region
        $region109: #{tpu_custom_call.1} parent=91 // pred_check
          %p621 = pneg %p266
        $region110: #{tpu_custom_call.1} parent=91 // pred_check_branch
          %623 = sbr.rel (%p621) target = $region112
        $region111: #{tpu_custom_call.1} parent=91 // pred_region
          %624 = dma.done [#allocation11], 16
        $region112: #{tpu_custom_call.1} parent=91 // pred_fallthru
          _
        %p625 = scmp.lt.s32.totalorder %s41, 1
        %s626 = scalar_select %p625, %s41, 1
        %p627 = scmp.lt.s32.totalorder %s42, 0
        %s628 = scalar_select %p627, %s42, 0
        %s629 = sadd.s32 %s628, %s626
        %s630 = smul.addr %s629, 8
        %s631 = scalar_lea.vmem %s0, %s630
        %p632 = pneg %p72
        %p633 = pneg %p69
        %s634 = sand.u32 %s85, 1
        %s635 = scalar_lea.sflag [#allocation5], %s634
        %s636 = sand.u32 %s85, 1
        %s637 = smul.addr %s636, 4
        %s638 = scalar_lea.vmem [#allocation4], %s637
        %p639 = pneg %p98
        %p640 = pneg %p95
        %p641 = pneg %p119
        %p642 = pneg %p116
        %p643 = pneg %p140
        %p644 = pneg %p137
        %p645 = pneg %p161
        %p646 = pneg %p158
        %p647 = pneg %p182
        %p648 = pneg %p179
        %p649 = pneg %p203
        %p650 = pneg %p200
        %p651 = pneg %p224
        %p652 = pneg %p221
        %p653 = pneg %p245
        %p654 = pneg %p242
        %p655 = pneg %p266
        %p656 = pneg %p263
        %p657 = pneg %p287
        %p658 = pneg %p284
        %p659 = pneg %p308
        %p660 = pneg %p305
        %p661 = pneg %p329
        %p662 = pneg %p326
        %p663 = pneg %p350
        %p664 = pneg %p347
        %p665 = pneg %p371
        %p666 = pneg %p368
        %p667 = pneg %p392
        %p668 = pneg %p389
        %p669 = pneg %p413
        %p670 = pneg %p410
        %p671 = pneg %p434
        %p672 = pneg %p431
        %p673 = pneg %p462
        %p674 = pneg %p459
        %s675 = sand.u32 %s449, 1
        %s676 = scalar_lea.sflag [#allocation6], %s675
        %s677 = sand.u32 %s449, 1
        %s678 = smul.addr %s677, 8
        %s679 = scalar_lea.vmem [#allocation13], %s678
        %p680 = scmp.lt.s32.totalorder %s41, 1
        %s681 = scalar_select %p680, %s41, 1
        %p682 = scmp.lt.s32.totalorder %s42, 0
        %s683 = scalar_select %p682, %s42, 0
        %s684 = sadd.s32 %s683, %s681
        %s685 = smul.addr %s684, 8
        %s686 = scalar_lea.vmem %s0, %s685
        %p688 = scmp.eq.s32.totalorder %s42, 0
        // Predicated region
        $region113: #{tpu_custom_call.1} parent=91 // pred_check
          %p689 = pneg %p688
        $region114: #{tpu_custom_call.1} parent=91 // pred_check_branch
          %691 = sbr.rel (%p689) target = $region116
        $region115: #{tpu_custom_call.1} parent=91 // pred_region
          %v692 = vld [vmem:[%s604] sm:$0xf]
          %v693 = vld [vmem:[%s3] sm:$0xf]
          %v694 = vld [vmem:[%s3 + $0x4] sm:$0xf]
          %v695 = vld [vmem:[%s3 + $0x8] sm:$0xf]
          %v696 = vld [vmem:[%s3 + $0xc] sm:$0xf]
          %v697 = vld [vmem:[%s6] sm:$0x1]
          %v699 = vlaneseq
          %v700 = vshrl.u32 %v699, 7
          %v701 = vsub.s32 0, %v700
          %v702 = vrot.slane %v697, %v701
          %v708 = vunpack.c.l.b16 %v693
          %v709 = vunpack.c.l.b16 %v694
          %v710 = vunpack.c.l.b16 %v695
          %v711 = vunpack.c.l.b16 %v696
          %v712 = vpack.c.b16 %v709, %v708
          %v713 = vpack.c.b16 %v711, %v710
          %vm716 = vcmask 261120
          %v718 = vsel %vm716, %v692, 0
          %720 = vmatprep.subr.bf16.mxu0 0
          %721 = vmatpush1.bf16.msra.mxu0 %v712
          %722 = vmatprep.subr.bf16.mxu0 0
          %723 = vmatpush1.bf16.msra.mxu0 %v713
          %724 = vmatprep.subr.bf16.mxu0 0
          %725 = vmatpush1.bf16.msra.mxu0 0
          %726 = vmatprep.subr.bf16.mxu0 0
          %727 = vmatpush1.bf16.msra.mxu0 0
          %728 = vmatprep.subr.bf16.mxu0 0
          %729 = vmatpush1.bf16.msra.mxu0 0
          %730 = vmatprep.subr.bf16.mxu0 0
          %731 = vmatpush1.bf16.msra.mxu0 0
          %732 = vmatprep.subr.bf16.mxu0 0
          %733 = vmatpush1.bf16.msra.mxu0 0
          %734 = vmatprep.subr.bf16.mxu0 0
          %735 = vmatpush1.bf16.msra.mxu0 0
          %736 = vmatprep.subr.bf16.mxu0 0
          %737 = vmatpush1.bf16.msra.mxu0 0
          %738 = vmatprep.subr.bf16.mxu0 0
          %739 = vmatpush1.bf16.msra.mxu0 0
          %740 = vmatprep.subr.bf16.mxu0 0
          %741 = vmatpush1.bf16.msra.mxu0 0
          %742 = vmatprep.subr.bf16.mxu0 0
          %743 = vmatpush1.bf16.msra.mxu0 0
          %744 = vmatprep.subr.bf16.mxu0 0
          %745 = vmatpush1.bf16.msra.mxu0 0
          %746 = vmatprep.subr.bf16.mxu0 0
          %747 = vmatpush1.bf16.msra.mxu0 0
          %748 = vmatprep.subr.bf16.mxu0 0
          %749 = vmatpush1.bf16.msra.mxu0 0
          %750 = vmatprep.subr.bf16.mxu0 0
          %751 = vmatpush1.bf16.msra.mxu0 0
          %752 = vmatprep.mubr.bf16.mxu0 0
          %753 = vmatmul.mubr.bf16.gmra.mrb[0].mxu0 %v718
          %v754 = vpop.f32.mrb[0].mxu0
          %v755 = vadd.f32 %v702, %v754
          %v756 = vpop.f32.mrb[0].mxu0
          %v757 = vpop.f32.mrb[0].mxu0
          %v758 = vpop.f32.mrb[0].mxu0
          %759 = vdwg.mxu0
          %v760 = vld [vmem:[#allocation7] sm:$0xf]
          %v761 = vld [vmem:[#allocation7 + $0x4] sm:$0xf]
          %v762 = vld [vmem:[#allocation7 + $0x8] sm:$0xf]
          %v763 = vld [vmem:[#allocation7 + $0xc] sm:$0xf]
          %v764 = vld [vmem:[#allocation9] sm:$0x1]
          %v766 = vlaneseq
          %v767 = vshrl.u32 %v766, 7
          %v768 = vsub.s32 0, %v767
          %v769 = vrot.slane %v764, %v768
          %v775 = vunpack.c.l.b16 %v760
          %v776 = vunpack.c.l.b16 %v761
          %v777 = vunpack.c.l.b16 %v762
          %v778 = vunpack.c.l.b16 %v763
          %v779 = vpack.c.b16 %v776, %v775
          %v780 = vpack.c.b16 %v778, %v777
          %783 = vmatprep.subr.bf16.mxu0 0
          %784 = vmatpush1.bf16.msra.mxu0 %v779
          %785 = vmatprep.subr.bf16.mxu0 0
          %786 = vmatpush1.bf16.msra.mxu0 %v780
          %787 = vmatprep.subr.bf16.mxu0 0
          %788 = vmatpush1.bf16.msra.mxu0 0
          %789 = vmatprep.subr.bf16.mxu0 0
          %790 = vmatpush1.bf16.msra.mxu0 0
          %791 = vmatprep.subr.bf16.mxu0 0
          %792 = vmatpush1.bf16.msra.mxu0 0
          %793 = vmatprep.subr.bf16.mxu0 0
          %794 = vmatpush1.bf16.msra.mxu0 0
          %795 = vmatprep.subr.bf16.mxu0 0
          %796 = vmatpush1.bf16.msra.mxu0 0
          %797 = vmatprep.subr.bf16.mxu0 0
          %798 = vmatpush1.bf16.msra.mxu0 0
          %799 = vmatprep.subr.bf16.mxu0 0
          %800 = vmatpush1.bf16.msra.mxu0 0
          %801 = vmatprep.subr.bf16.mxu0 0
          %802 = vmatpush1.bf16.msra.mxu0 0
          %803 = vmatprep.subr.bf16.mxu0 0
          %804 = vmatpush1.bf16.msra.mxu0 0
          %805 = vmatprep.subr.bf16.mxu0 0
          %806 = vmatpush1.bf16.msra.mxu0 0
          %807 = vmatprep.subr.bf16.mxu0 0
          %808 = vmatpush1.bf16.msra.mxu0 0
          %809 = vmatprep.subr.bf16.mxu0 0
          %810 = vmatpush1.bf16.msra.mxu0 0
          %811 = vmatprep.subr.bf16.mxu0 0
          %812 = vmatpush1.bf16.msra.mxu0 0
          %813 = vmatprep.subr.bf16.mxu0 0
          %814 = vmatpush1.bf16.msra.mxu0 0
          %815 = vmatprep.mubr.bf16.mxu0 0
          %816 = vmatmul.mubr.bf16.gmra.mrb[0].mxu0 %v718
          %v817 = vpop.f32.mrb[0].mxu0
          %v818 = vadd.f32 %v769, %v817
          %v819 = vpop.f32.mrb[0].mxu0
          %v820 = vpop.f32.mrb[0].mxu0
          %v821 = vpop.f32.mrb[0].mxu0
          %822 = vdwg.mxu0
          %v823 = vpack.c.bf16 %v755, %v755
          %vm824 = vcmask 257024
          %825 = vst.msk [vmem:[#allocation2] sm:$0xf] %vm824, %v823
          %v826 = vpack.c.bf16 %v818, %v818
          %827 = vst.msk [vmem:[#allocation3] sm:$0xf] %vm824, %v826
        $region116: #{tpu_custom_call.1} parent=91 // pred_fallthru
          _
        %v828 = vld [vmem:[%s686] sm:$0xff]
        %v829 = vpack.c.bf16 %v828, %v828
        %v830 = vld [vmem:[%s2] sm:$0xf]
        %v831 = vld [vmem:[%s2 + $0x4] sm:$0xf]
        %v832 = vld [vmem:[%s2 + $0x8] sm:$0xf]
        %v833 = vld [vmem:[%s2 + $0xc] sm:$0xf]
        %v834 = vld [vmem:[%s5] sm:$0x1]
        %v836 = vlaneseq
        %v837 = vshrl.u32 %v836, 7
        %v838 = vsub.s32 0, %v837
        %v839 = vrot.slane %v834, %v838
        %v845 = vunpack.c.l.b16 %v830
        %v846 = vunpack.c.l.b16 %v831
        %v847 = vunpack.c.l.b16 %v832
        %v848 = vunpack.c.l.b16 %v833
        %v849 = vpack.c.b16 %v846, %v845
        %v850 = vpack.c.b16 %v848, %v847
        %vm853 = vcmask 261120
        %v855 = vsel %vm853, %v829, 0
        %857 = vmatprep.subr.bf16.mxu0 0
        %858 = vmatpush1.bf16.msra.mxu0 %v849
        %859 = vmatprep.subr.bf16.mxu0 0
        %860 = vmatpush1.bf16.msra.mxu0 %v850
        %861 = vmatprep.subr.bf16.mxu0 0
        %862 = vmatpush1.bf16.msra.mxu0 0
        %863 = vmatprep.subr.bf16.mxu0 0
        %864 = vmatpush1.bf16.msra.mxu0 0
        %865 = vmatprep.subr.bf16.mxu0 0
        %866 = vmatpush1.bf16.msra.mxu0 0
        %867 = vmatprep.subr.bf16.mxu0 0
        %868 = vmatpush1.bf16.msra.mxu0 0
        %869 = vmatprep.subr.bf16.mxu0 0
        %870 = vmatpush1.bf16.msra.mxu0 0
        %871 = vmatprep.subr.bf16.mxu0 0
        %872 = vmatpush1.bf16.msra.mxu0 0
        %873 = vmatprep.subr.bf16.mxu0 0
        %874 = vmatpush1.bf16.msra.mxu0 0
        %875 = vmatprep.subr.bf16.mxu0 0
        %876 = vmatpush1.bf16.msra.mxu0 0
        %877 = vmatprep.subr.bf16.mxu0 0
        %878 = vmatpush1.bf16.msra.mxu0 0
        %879 = vmatprep.subr.bf16.mxu0 0
        %880 = vmatpush1.bf16.msra.mxu0 0
        %881 = vmatprep.subr.bf16.mxu0 0
        %882 = vmatpush1.bf16.msra.mxu0 0
        %883 = vmatprep.subr.bf16.mxu0 0
        %884 = vmatpush1.bf16.msra.mxu0 0
        %885 = vmatprep.subr.bf16.mxu0 0
        %886 = vmatpush1.bf16.msra.mxu0 0
        %887 = vmatprep.subr.bf16.mxu0 0
        %888 = vmatpush1.bf16.msra.mxu0 0
        %889 = vmatprep.mubr.bf16.mxu0 0
        %890 = vmatmul.mubr.bf16.gmra.mrb[0].mxu0 %v855
        %v891 = vpop.f32.mrb[0].mxu0
        %v892 = vadd.f32 %v839, %v891
        %v893 = vpop.f32.mrb[0].mxu0
        %v894 = vpop.f32.mrb[0].mxu0
        %v895 = vpop.f32.mrb[0].mxu0
        %896 = vdwg.mxu0
        %v897 = vpack.c.bf16 %v892, %v892
        %v898 = vld [vmem:[#allocation2] sm:$0xf]
        %v899 = vld [vmem:[#allocation3] sm:$0xf]
        %vm900 = vcmask 64512
        %v902 = vsel %vm900, %v897, 0
        %v905 = vsel %vm900, %v898, 0
        %907 = vmatprep.subr.bf16.mxu0 0
        %908 = vmatpush1.bf16.xpose.msra.mxu0 %v905
        %909 = vmatprep.subr.bf16.mxu0 0
        %910 = vmatpush1.bf16.xpose.msra.mxu0 0
        %911 = vmatprep.subr.bf16.mxu0 0
        %912 = vmatpush1.bf16.xpose.msra.mxu0 0
        %913 = vmatprep.subr.bf16.mxu0 0
        %914 = vmatpush1.bf16.xpose.msra.mxu0 0
        %915 = vmatprep.subr.bf16.mxu0 0
        %916 = vmatpush1.bf16.xpose.msra.mxu0 0
        %917 = vmatprep.subr.bf16.mxu0 0
        %918 = vmatpush1.bf16.xpose.msra.mxu0 0
        %919 = vmatprep.subr.bf16.mxu0 0
        %920 = vmatpush1.bf16.xpose.msra.mxu0 0
        %921 = vmatprep.subr.bf16.mxu0 0
        %922 = vmatpush1.bf16.xpose.msra.mxu0 0
        %923 = vmatprep.subr.bf16.mxu0 0
        %924 = vmatpush1.bf16.xpose.msra.mxu0 0
        %925 = vmatprep.subr.bf16.mxu0 0
        %926 = vmatpush1.bf16.xpose.msra.mxu0 0
        %927 = vmatprep.subr.bf16.mxu0 0
        %928 = vmatpush1.bf16.xpose.msra.mxu0 0
        %929 = vmatprep.subr.bf16.mxu0 0
        %930 = vmatpush1.bf16.xpose.msra.mxu0 0
        %931 = vmatprep.subr.bf16.mxu0 0
        %932 = vmatpush1.bf16.xpose.msra.mxu0 0
        %933 = vmatprep.subr.bf16.mxu0 0
        %934 = vmatpush1.bf16.xpose.msra.mxu0 0
        %935 = vmatprep.subr.bf16.mxu0 0
        %936 = vmatpush1.bf16.xpose.msra.mxu0 0
        %937 = vmatprep.subr.bf16.mxu0 0
        %938 = vmatpush1.bf16.xpose.msra.mxu0 0
        %939 = vmatprep.mubr.bf16.mxu0 0
        %940 = vmatmul.mubr.bf16.gmra.mrb[0].mxu0 %v902
        %v941 = vpop.f32.mrb[0].mxu0
        %v942 = vadd.f32 0.0, %v941
        %v943 = vpop.f32.mrb[0].mxu0
        %v944 = vpop.f32.mrb[0].mxu0
        %v945 = vpop.f32.mrb[0].mxu0
        %946 = vdwg.mxu0
        %v947 = vsel %vm900, %v942, -inf
        %948 = vmax.xlane.f32.xlu0 %v947
        %v949 = vpop.xlane.xlu0 %948
        %v950 = vsub.f32 %v942, %v949
        %v951 = vmul.f32 %v950, 1.442695
        %v952 = vpow.pop %v951
        %v953 = vsel %vm900, %v952, 0.0
        %954 = vadd.xlane.f32.xlu0 %v953
        %v955 = vpop.xlane.xlu0 %954
        %v956 = vpack.c.bf16 %v952, %v952
        %v958 = vsel %vm900, %v956, 0
        %vm960 = vcmask 1043456
        %v962 = vsel %vm960, %v899, 0
        %964 = vmatprep.subr.bf16.mxu0 0
        %965 = vmatpush1.bf16.msra.mxu0 %v962
        %966 = vmatprep.subr.bf16.mxu0 0
        %967 = vmatpush1.bf16.msra.mxu0 0
        %968 = vmatprep.subr.bf16.mxu0 0
        %969 = vmatpush1.bf16.msra.mxu0 0
        %970 = vmatprep.subr.bf16.mxu0 0
        %971 = vmatpush1.bf16.msra.mxu0 0
        %972 = vmatprep.subr.bf16.mxu0 0
        %973 = vmatpush1.bf16.msra.mxu0 0
        %974 = vmatprep.subr.bf16.mxu0 0
        %975 = vmatpush1.bf16.msra.mxu0 0
        %976 = vmatprep.subr.bf16.mxu0 0
        %977 = vmatpush1.bf16.msra.mxu0 0
        %978 = vmatprep.subr.bf16.mxu0 0
        %979 = vmatpush1.bf16.msra.mxu0 0
        %980 = vmatprep.subr.bf16.mxu0 0
        %981 = vmatpush1.bf16.msra.mxu0 0
        %982 = vmatprep.subr.bf16.mxu0 0
        %983 = vmatpush1.bf16.msra.mxu0 0
        %984 = vmatprep.subr.bf16.mxu0 0
        %985 = vmatpush1.bf16.msra.mxu0 0
        %986 = vmatprep.subr.bf16.mxu0 0
        %987 = vmatpush1.bf16.msra.mxu0 0
        %988 = vmatprep.subr.bf16.mxu0 0
        %989 = vmatpush1.bf16.msra.mxu0 0
        %990 = vmatprep.subr.bf16.mxu0 0
        %991 = vmatpush1.bf16.msra.mxu0 0
        %992 = vmatprep.subr.bf16.mxu0 0
        %993 = vmatpush1.bf16.msra.mxu0 0
        %994 = vmatprep.subr.bf16.mxu0 0
        %995 = vmatpush1.bf16.msra.mxu0 0
        %996 = vmatprep.mubr.bf16.mxu0 0
        %997 = vmatmul.mubr.bf16.gmra.mrb[0].mxu0 %v958
        %v998 = vpop.f32.mrb[0].mxu0
        %v999 = vadd.f32 0.0, %v998
        %v1000 = vpop.f32.mrb[0].mxu0
        %v1001 = vpop.f32.mrb[0].mxu0
        %v1002 = vpop.f32.mrb[0].mxu0
        %1003 = vdwg.mxu0
        %v1004 = vrcp.pop %v955
        %v1005 = vmul.f32 %v999, %v1004
        %v1006 = vpack.c.bf16 %v1005, %v1005
        %1008 = vrot.lane.b32.xlu0 %v897, 120
        %v1009 = vpop.permute.xlu0 %1008
        %v1011 = vunpack.c.l.b16 %v898
        %v1012 = vpack.c.b16 %v1011, %v1011
        %1013 = vrot.lane.b32.xlu0 %v1012, 120
        %v1014 = vpop.permute.xlu0 %1013
        %v1016 = vsel %vm900, %v1009, 0
        %v1019 = vsel %vm900, %v1014, 0
        %1021 = vmatprep.subr.bf16.mxu0 0
        %1022 = vmatpush1.bf16.xpose.msra.mxu0 %v1019
        %1023 = vmatprep.subr.bf16.mxu0 0
        %1024 = vmatpush1.bf16.xpose.msra.mxu0 0
        %1025 = vmatprep.subr.bf16.mxu0 0
        %1026 = vmatpush1.bf16.xpose.msra.mxu0 0
        %1027 = vmatprep.subr.bf16.mxu0 0
        %1028 = vmatpush1.bf16.xpose.msra.mxu0 0
        %1029 = vmatprep.subr.bf16.mxu0 0
        %1030 = vmatpush1.bf16.xpose.msra.mxu0 0
        %1031 = vmatprep.subr.bf16.mxu0 0
        %1032 = vmatpush1.bf16.xpose.msra.mxu0 0
        %1033 = vmatprep.subr.bf16.mxu0 0
        %1034 = vmatpush1.bf16.xpose.msra.mxu0 0
        %1035 = vmatprep.subr.bf16.mxu0 0
        %1036 = vmatpush1.bf16.xpose.msra.mxu0 0
        %1037 = vmatprep.subr.bf16.mxu0 0
        %1038 = vmatpush1.bf16.xpose.msra.mxu0 0
        %1039 = vmatprep.subr.bf16.mxu0 0
        %1040 = vmatpush1.bf16.xpose.msra.mxu0 0
        %1041 = vmatprep.subr.bf16.mxu0 0
        %1042 = vmatpush1.bf16.xpose.msra.mxu0 0
        %1043 = vmatprep.subr.bf16.mxu0 0
        %1044 = vmatpush1.bf16.xpose.msra.mxu0 0
        %1045 = vmatprep.subr.bf16.mxu0 0
        %1046 = vmatpush1.bf16.xpose.msra.mxu0 0
        %1047 = vmatprep.subr.bf16.mxu0 0
        %1048 = vmatpush1.bf16.xpose.msra.mxu0 0
        %1049 = vmatprep.subr.bf16.mxu0 0
        %1050 = vmatpush1.bf16.xpose.msra.mxu0 0
        %1051 = vmatprep.subr.bf16.mxu0 0
        %1052 = vmatpush1.bf16.xpose.msra.mxu0 0
        %1053 = vmatprep.mubr.bf16.mxu0 0
        %1054 = vmatmul.mubr.bf16.gmra.mrb[0].mxu0 %v1016
        %v1055 = vpop.f32.mrb[0].mxu0
        %v1056 = vadd.f32 0.0, %v1055
        %v1057 = vpop.f32.mrb[0].mxu0
        %v1058 = vpop.f32.mrb[0].mxu0
        %v1059 = vpop.f32.mrb[0].mxu0
        %1060 = vdwg.mxu0
        %v1061 = vsel %vm900, %v1056, -inf
        %1062 = vmax.xlane.f32.xlu0 %v1061
        %v1063 = vpop.xlane.xlu0 %1062
        %v1064 = vsub.f32 %v1056, %v1063
        %v1065 = vmul.f32 %v1064, 1.442695
        %v1066 = vpow.pop %v1065
        %v1067 = vsel %vm900, %v1066, 0.0
        %1068 = vadd.xlane.f32.xlu0 %v1067
        %v1069 = vpop.xlane.xlu0 %1068
        %v1070 = vpack.c.bf16 %v1066, %v1066
        %v1072 = vunpack.c.l.b16 %v899
        %v1073 = vpack.c.b16 %v1072, %v1072
        %1074 = vrot.lane.b32.xlu0 %v1073, 120
        %v1075 = vpop.permute.xlu0 %1074
        %v1077 = vsel %vm900, %v1070, 0
        %v1080 = vsel %vm960, %v1075, 0
        %1082 = vmatprep.subr.bf16.mxu0 0
        %1083 = vmatpush1.bf16.msra.mxu0 %v1080
        %1084 = vmatprep.subr.bf16.mxu0 0
        %1085 = vmatpush1.bf16.msra.mxu0 0
        %1086 = vmatprep.subr.bf16.mxu0 0
        %1087 = vmatpush1.bf16.msra.mxu0 0
        %1088 = vmatprep.subr.bf16.mxu0 0
        %1089 = vmatpush1.bf16.msra.mxu0 0
        %1090 = vmatprep.subr.bf16.mxu0 0
        %1091 = vmatpush1.bf16.msra.mxu0 0
        %1092 = vmatprep.subr.bf16.mxu0 0
        %1093 = vmatpush1.bf16.msra.mxu0 0
        %1094 = vmatprep.subr.bf16.mxu0 0
        %1095 = vmatpush1.bf16.msra.mxu0 0
        %1096 = vmatprep.subr.bf16.mxu0 0
        %1097 = vmatpush1.bf16.msra.mxu0 0
        %1098 = vmatprep.subr.bf16.mxu0 0
        %1099 = vmatpush1.bf16.msra.mxu0 0
        %1100 = vmatprep.subr.bf16.mxu0 0
        %1101 = vmatpush1.bf16.msra.mxu0 0
        %1102 = vmatprep.subr.bf16.mxu0 0
        %1103 = vmatpush1.bf16.msra.mxu0 0
        %1104 = vmatprep.subr.bf16.mxu0 0
        %1105 = vmatpush1.bf16.msra.mxu0 0
        %1106 = vmatprep.subr.bf16.mxu0 0
        %1107 = vmatpush1.bf16.msra.mxu0 0
        %1108 = vmatprep.subr.bf16.mxu0 0
        %1109 = vmatpush1.bf16.msra.mxu0 0
        %1110 = vmatprep.subr.bf16.mxu0 0
        %1111 = vmatpush1.bf16.msra.mxu0 0
        %1112 = vmatprep.subr.bf16.mxu0 0
        %1113 = vmatpush1.bf16.msra.mxu0 0
        %1114 = vmatprep.mubr.bf16.mxu0 0
        %1115 = vmatmul.mubr.bf16.gmra.mrb[0].mxu0 %v1077
        %v1116 = vpop.f32.mrb[0].mxu0
        %v1117 = vadd.f32 0.0, %v1116
        %v1118 = vpop.f32.mrb[0].mxu0
        %v1119 = vpop.f32.mrb[0].mxu0
        %v1120 = vpop.f32.mrb[0].mxu0
        %1121 = vdwg.mxu0
        %v1122 = vrcp.pop %v1069
        %v1123 = vmul.f32 %v1117, %v1122
        %v1124 = vpack.c.bf16 %v1123, %v1123
        %1125 = vrot.lane.b32.xlu0 %v897, 112
        %v1126 = vpop.permute.xlu0 %1125
        %1127 = vrot.lane.b32.xlu0 %v1012, 112
        %v1128 = vpop.permute.xlu0 %1127
        %v1130 = vsel %vm900, %v1126, 0
        %v1133 = vsel %vm900, %v1128, 0
        %1135 = vmatprep.subr.bf16.mxu0 0
        %1136 = vmatpush1.bf16.xpose.msra.mxu0 %v1133
        %1137 = vmatprep.subr.bf16.mxu0 0
        %1138 = vmatpush1.bf16.xpose.msra.mxu0 0
        %1139 = vmatprep.subr.bf16.mxu0 0
        %1140 = vmatpush1.bf16.xpose.msra.mxu0 0
        %1141 = vmatprep.subr.bf16.mxu0 0
        %1142 = vmatpush1.bf16.xpose.msra.mxu0 0
        %1143 = vmatprep.subr.bf16.mxu0 0
        %1144 = vmatpush1.bf16.xpose.msra.mxu0 0
        %1145 = vmatprep.subr.bf16.mxu0 0
        %1146 = vmatpush1.bf16.xpose.msra.mxu0 0
        %1147 = vmatprep.subr.bf16.mxu0 0
        %1148 = vmatpush1.bf16.xpose.msra.mxu0 0
        %1149 = vmatprep.subr.bf16.mxu0 0
        %1150 = vmatpush1.bf16.xpose.msra.mxu0 0
        %1151 = vmatprep.subr.bf16.mxu0 0
        %1152 = vmatpush1.bf16.xpose.msra.mxu0 0
        %1153 = vmatprep.subr.bf16.mxu0 0
        %1154 = vmatpush1.bf16.xpose.msra.mxu0 0
        %1155 = vmatprep.subr.bf16.mxu0 0
        %1156 = vmatpush1.bf16.xpose.msra.mxu0 0
        %1157 = vmatprep.subr.bf16.mxu0 0
        %1158 = vmatpush1.bf16.xpose.msra.mxu0 0
        %1159 = vmatprep.subr.bf16.mxu0 0
        %1160 = vmatpush1.bf16.xpose.msra.mxu0 0
        %1161 = vmatprep.subr.bf16.mxu0 0
        %1162 = vmatpush1.bf16.xpose.msra.mxu0 0
        %1163 = vmatprep.subr.bf16.mxu0 0
        %1164 = vmatpush1.bf16.xpose.msra.mxu0 0
        %1165 = vmatprep.subr.bf16.mxu0 0
        %1166 = vmatpush1.bf16.xpose.msra.mxu0 0
        %1167 = vmatprep.mubr.bf16.mxu0 0
        %1168 = vmatmul.mubr.bf16.gmra.mrb[0].mxu0 %v1130
        %v1169 = vpop.f32.mrb[0].mxu0
        %v1170 = vadd.f32 0.0, %v1169
        %v1171 = vpop.f32.mrb[0].mxu0
        %v1172 = vpop.f32.mrb[0].mxu0
        %v1173 = vpop.f32.mrb[0].mxu0
        %1174 = vdwg.mxu0
        %v1175 = vsel %vm900, %v1170, -inf
        %1176 = vmax.xlane.f32.xlu0 %v1175
        %v1177 = vpop.xlane.xlu0 %1176
        %v1178 = vsub.f32 %v1170, %v1177
        %v1179 = vmul.f32 %v1178, 1.442695
        %v1180 = vpow.pop %v1179
        %v1181 = vsel %vm900, %v1180, 0.0
        %1182 = vadd.xlane.f32.xlu0 %v1181
        %v1183 = vpop.xlane.xlu0 %1182
        %v1184 = vpack.c.bf16 %v1180, %v1180
        %1185 = vrot.lane.b32.xlu0 %v1073, 112
        %v1186 = vpop.permute.xlu0 %1185
        %v1188 = vsel %vm900, %v1184, 0
        %v1191 = vsel %vm960, %v1186, 0
        %1193 = vmatprep.subr.bf16.mxu0 0
        %1194 = vmatpush1.bf16.msra.mxu0 %v1191
        %1195 = vmatprep.subr.bf16.mxu0 0
        %1196 = vmatpush1.bf16.msra.mxu0 0
        %1197 = vmatprep.subr.bf16.mxu0 0
        %1198 = vmatpush1.bf16.msra.mxu0 0
        %1199 = vmatprep.subr.bf16.mxu0 0
        %1200 = vmatpush1.bf16.msra.mxu0 0
        %1201 = vmatprep.subr.bf16.mxu0 0
        %1202 = vmatpush1.bf16.msra.mxu0 0
        %1203 = vmatprep.subr.bf16.mxu0 0
        %1204 = vmatpush1.bf16.msra.mxu0 0
        %1205 = vmatprep.subr.bf16.mxu0 0
        %1206 = vmatpush1.bf16.msra.mxu0 0
        %1207 = vmatprep.subr.bf16.mxu0 0
        %1208 = vmatpush1.bf16.msra.mxu0 0
        %1209 = vmatprep.subr.bf16.mxu0 0
        %1210 = vmatpush1.bf16.msra.mxu0 0
        %1211 = vmatprep.subr.bf16.mxu0 0
        %1212 = vmatpush1.bf16.msra.mxu0 0
        %1213 = vmatprep.subr.bf16.mxu0 0
        %1214 = vmatpush1.bf16.msra.mxu0 0
        %1215 = vmatprep.subr.bf16.mxu0 0
        %1216 = vmatpush1.bf16.msra.mxu0 0
        %1217 = vmatprep.subr.bf16.mxu0 0
        %1218 = vmatpush1.bf16.msra.mxu0 0
        %1219 = vmatprep.subr.bf16.mxu0 0
        %1220 = vmatpush1.bf16.msra.mxu0 0
        %1221 = vmatprep.subr.bf16.mxu0 0
        %1222 = vmatpush1.bf16.msra.mxu0 0
        %1223 = vmatprep.subr.bf16.mxu0 0
        %1224 = vmatpush1.bf16.msra.mxu0 0
        %1225 = vmatprep.mubr.bf16.mxu0 0
        %1226 = vmatmul.mubr.bf16.gmra.mrb[0].mxu0 %v1188
        %v1227 = vpop.f32.mrb[0].mxu0
        %v1228 = vadd.f32 0.0, %v1227
        %v1229 = vpop.f32.mrb[0].mxu0
        %v1230 = vpop.f32.mrb[0].mxu0
        %v1231 = vpop.f32.mrb[0].mxu0
        %1232 = vdwg.mxu0
        %v1233 = vrcp.pop %v1183
        %v1234 = vmul.f32 %v1228, %v1233
        %v1235 = vpack.c.bf16 %v1234, %v1234
        %1236 = vrot.lane.b32.xlu0 %v897, 104
        %v1237 = vpop.permute.xlu0 %1236
        %1238 = vrot.lane.b32.xlu0 %v1012, 104
        %v1239 = vpop.permute.xlu0 %1238
        %v1241 = vsel %vm900, %v1237, 0
        %v1244 = vsel %vm900, %v1239, 0
        %1246 = vmatprep.subr.bf16.mxu0 0
        %1247 = vmatpush1.bf16.xpose.msra.mxu0 %v1244
        %1248 = vmatprep.subr.bf16.mxu0 0
        %1249 = vmatpush1.bf16.xpose.msra.mxu0 0
        %1250 = vmatprep.subr.bf16.mxu0 0
        %1251 = vmatpush1.bf16.xpose.msra.mxu0 0
        %1252 = vmatprep.subr.bf16.mxu0 0
        %1253 = vmatpush1.bf16.xpose.msra.mxu0 0
        %1254 = vmatprep.subr.bf16.mxu0 0
        %1255 = vmatpush1.bf16.xpose.msra.mxu0 0
        %1256 = vmatprep.subr.bf16.mxu0 0
        %1257 = vmatpush1.bf16.xpose.msra.mxu0 0
        %1258 = vmatprep.subr.bf16.mxu0 0
        %1259 = vmatpush1.bf16.xpose.msra.mxu0 0
        %1260 = vmatprep.subr.bf16.mxu0 0
        %1261 = vmatpush1.bf16.xpose.msra.mxu0 0
        %1262 = vmatprep.subr.bf16.mxu0 0
        %1263 = vmatpush1.bf16.xpose.msra.mxu0 0
        %1264 = vmatprep.subr.bf16.mxu0 0
        %1265 = vmatpush1.bf16.xpose.msra.mxu0 0
        %1266 = vmatprep.subr.bf16.mxu0 0
        %1267 = vmatpush1.bf16.xpose.msra.mxu0 0
        %1268 = vmatprep.subr.bf16.mxu0 0
        %1269 = vmatpush1.bf16.xpose.msra.mxu0 0
        %1270 = vmatprep.subr.bf16.mxu0 0
        %1271 = vmatpush1.bf16.xpose.msra.mxu0 0
        %1272 = vmatprep.subr.bf16.mxu0 0
        %1273 = vmatpush1.bf16.xpose.msra.mxu0 0
        %1274 = vmatprep.subr.bf16.mxu0 0
        %1275 = vmatpush1.bf16.xpose.msra.mxu0 0
        %1276 = vmatprep.subr.bf16.mxu0 0
        %1277 = vmatpush1.bf16.xpose.msra.mxu0 0
        %1278 = vmatprep.mubr.bf16.mxu0 0
        %1279 = vmatmul.mubr.bf16.gmra.mrb[0].mxu0 %v1241
        %v1280 = vpop.f32.mrb[0].mxu0
        %v1281 = vadd.f32 0.0, %v1280
        %v1282 = vpop.f32.mrb[0].mxu0
        %v1283 = vpop.f32.mrb[0].mxu0
        %v1284 = vpop.f32.mrb[0].mxu0
        %1285 = vdwg.mxu0
        %v1286 = vsel %vm900, %v1281, -inf
        %1287 = vmax.xlane.f32.xlu0 %v1286
        %v1288 = vpop.xlane.xlu0 %1287
        %v1289 = vsub.f32 %v1281, %v1288
        %v1290 = vmul.f32 %v1289, 1.442695
        %v1291 = vpow.pop %v1290
        %v1292 = vsel %vm900, %v1291, 0.0
        %1293 = vadd.xlane.f32.xlu0 %v1292
        %v1294 = vpop.xlane.xlu0 %1293
        %v1295 = vpack.c.bf16 %v1291, %v1291
        %1296 = vrot.lane.b32.xlu0 %v1073, 104
        %v1297 = vpop.permute.xlu0 %1296
        %v1299 = vsel %vm900, %v1295, 0
        %v1302 = vsel %vm960, %v1297, 0
        %1304 = vmatprep.subr.bf16.mxu0 0
        %1305 = vmatpush1.bf16.msra.mxu0 %v1302
        %1306 = vmatprep.subr.bf16.mxu0 0
        %1307 = vmatpush1.bf16.msra.mxu0 0
        %1308 = vmatprep.subr.bf16.mxu0 0
        %1309 = vmatpush1.bf16.msra.mxu0 0
        %1310 = vmatprep.subr.bf16.mxu0 0
        %1311 = vmatpush1.bf16.msra.mxu0 0
        %1312 = vmatprep.subr.bf16.mxu0 0
        %1313 = vmatpush1.bf16.msra.mxu0 0
        %1314 = vmatprep.subr.bf16.mxu0 0
        %1315 = vmatpush1.bf16.msra.mxu0 0
        %1316 = vmatprep.subr.bf16.mxu0 0
        %1317 = vmatpush1.bf16.msra.mxu0 0
        %1318 = vmatprep.subr.bf16.mxu0 0
        %1319 = vmatpush1.bf16.msra.mxu0 0
        %1320 = vmatprep.subr.bf16.mxu0 0
        %1321 = vmatpush1.bf16.msra.mxu0 0
        %1322 = vmatprep.subr.bf16.mxu0 0
        %1323 = vmatpush1.bf16.msra.mxu0 0
        %1324 = vmatprep.subr.bf16.mxu0 0
        %1325 = vmatpush1.bf16.msra.mxu0 0
        %1326 = vmatprep.subr.bf16.mxu0 0
        %1327 = vmatpush1.bf16.msra.mxu0 0
        %1328 = vmatprep.subr.bf16.mxu0 0
        %1329 = vmatpush1.bf16.msra.mxu0 0
        %1330 = vmatprep.subr.bf16.mxu0 0
        %1331 = vmatpush1.bf16.msra.mxu0 0
        %1332 = vmatprep.subr.bf16.mxu0 0
        %1333 = vmatpush1.bf16.msra.mxu0 0
        %1334 = vmatprep.subr.bf16.mxu0 0
        %1335 = vmatpush1.bf16.msra.mxu0 0
        %1336 = vmatprep.mubr.bf16.mxu0 0
        %1337 = vmatmul.mubr.bf16.gmra.mrb[0].mxu0 %v1299
        %v1338 = vpop.f32.mrb[0].mxu0
        %v1339 = vadd.f32 0.0, %v1338
        %v1340 = vpop.f32.mrb[0].mxu0
        %v1341 = vpop.f32.mrb[0].mxu0
        %v1342 = vpop.f32.mrb[0].mxu0
        %1343 = vdwg.mxu0
        %v1344 = vrcp.pop %v1294
        %v1345 = vmul.f32 %v1339, %v1344
        %v1346 = vpack.c.bf16 %v1345, %v1345
        %1348 = vrot.lane.b32.xlu0 %v1124, 8
        %v1349 = vpop.permute.xlu0 %1348
        %1351 = vrot.lane.b32.xlu0 %v1235, 16
        %v1352 = vpop.permute.xlu0 %1351
        %1354 = vrot.lane.b32.xlu0 %v1346, 24
        %v1355 = vpop.permute.xlu0 %1354
        %v1358 = vsel %vm900, %v1006, %v1349
        %vm1359 = vcmask 130048
        %v1361 = vsel %vm1359, %v1358, %v1352
        %vm1362 = vcmask 195584
        %v1364 = vsel %vm1362, %v1361, %v1355
        %v1365 = vld [vmem:[#allocation10] sm:$0xf]
        %v1366 = vld [vmem:[#allocation10 + $0x4] sm:$0xf]
        %v1367 = vld [vmem:[#allocation10 + $0x8] sm:$0xf]
        %v1368 = vld [vmem:[#allocation10 + $0xc] sm:$0xf]
        %v1369 = vld [vmem:[#allocation12] sm:$0x1]
        %v1371 = vlaneseq
        %v1372 = vshrl.u32 %v1371, 7
        %v1373 = vsub.s32 0, %v1372
        %v1374 = vrot.slane %v1369, %v1373
        %v1380 = vunpack.c.l.b16 %v1365
        %v1381 = vunpack.c.l.b16 %v1366
        %v1382 = vunpack.c.l.b16 %v1367
        %v1383 = vunpack.c.l.b16 %v1368
        %v1384 = vpack.c.b16 %v1381, %v1380
        %v1385 = vpack.c.b16 %v1383, %v1382
        %v1388 = vsel %vm853, %v1364, 0
        %1390 = vmatprep.subr.bf16.mxu0 0
        %1391 = vmatpush1.bf16.msra.mxu0 %v1384
        %1392 = vmatprep.subr.bf16.mxu0 0
        %1393 = vmatpush1.bf16.msra.mxu0 %v1385
        %1394 = vmatprep.subr.bf16.mxu0 0
        %1395 = vmatpush1.bf16.msra.mxu0 0
        %1396 = vmatprep.subr.bf16.mxu0 0
        %1397 = vmatpush1.bf16.msra.mxu0 0
        %1398 = vmatprep.subr.bf16.mxu0 0
        %1399 = vmatpush1.bf16.msra.mxu0 0
        %1400 = vmatprep.subr.bf16.mxu0 0
        %1401 = vmatpush1.bf16.msra.mxu0 0
        %1402 = vmatprep.subr.bf16.mxu0 0
        %1403 = vmatpush1.bf16.msra.mxu0 0
        %1404 = vmatprep.subr.bf16.mxu0 0
        %1405 = vmatpush1.bf16.msra.mxu0 0
        %1406 = vmatprep.subr.bf16.mxu0 0
        %1407 = vmatpush1.bf16.msra.mxu0 0
        %1408 = vmatprep.subr.bf16.mxu0 0
        %1409 = vmatpush1.bf16.msra.mxu0 0
        %1410 = vmatprep.subr.bf16.mxu0 0
        %1411 = vmatpush1.bf16.msra.mxu0 0
        %1412 = vmatprep.subr.bf16.mxu0 0
        %1413 = vmatpush1.bf16.msra.mxu0 0
        %1414 = vmatprep.subr.bf16.mxu0 0
        %1415 = vmatpush1.bf16.msra.mxu0 0
        %1416 = vmatprep.subr.bf16.mxu0 0
        %1417 = vmatpush1.bf16.msra.mxu0 0
        %1418 = vmatprep.subr.bf16.mxu0 0
        %1419 = vmatpush1.bf16.msra.mxu0 0
        %1420 = vmatprep.subr.bf16.mxu0 0
        %1421 = vmatpush1.bf16.msra.mxu0 0
        %1422 = vmatprep.mubr.bf16.mxu0 0
        %1423 = vmatmul.mubr.bf16.gmra.mrb[0].mxu0 %v1388
        %v1424 = vpop.f32.mrb[0].mxu0
        %v1425 = vadd.f32 %v1374, %v1424
        %v1426 = vpop.f32.mrb[0].mxu0
        %v1427 = vpop.f32.mrb[0].mxu0
        %v1428 = vpop.f32.mrb[0].mxu0
        %1429 = vdwg.mxu0
        %v1430 = vadd.f32 %v1425, %v828
        %v1431 = vsel %vm853, %v1430, 0.0
        %1432 = vadd.xlane.f32.xlu0 %v1431
        %v1433 = vpop.xlane.xlu0 %1432
        %v1434 = vrcp.pop 32.0
        %v1435 = vmul.f32 %v1433, %v1434
        %v1436 = vsub.f32 %v1430, %v1435
        %v1437 = vmul.f32 %v1436, %v1436
        %v1438 = vsel %vm853, %v1437, 0.0
        %1439 = vadd.xlane.f32.xlu0 %v1438
        %v1440 = vpop.xlane.xlu0 %1439
        %v1441 = vmul.f32 %v1440, %v1434
        %v1442 = vadd.f32 %v1441, 1e-05
        %v1443 = vrsqrt.pop %v1442
        %v1444 = vmul.f32 %v1436, %v1443
        %v1445 = vld [vmem:[%s10] sm:$0x1]
        %v1447 = vlaneseq
        %v1448 = vshrl.u32 %v1447, 7
        %v1449 = vsub.s32 0, %v1448
        %v1450 = vrot.slane %v1445, %v1449
        %v1452 = vmul.f32 %v1444, %v1450
        %v1453 = vld [vmem:[%s11] sm:$0x1]
        %v1455 = vlaneseq
        %v1456 = vshrl.u32 %v1455, 7
        %v1457 = vsub.s32 0, %v1456
        %v1458 = vrot.slane %v1453, %v1457
        %v1460 = vadd.f32 %v1452, %v1458
        %v1461 = vpack.c.bf16 %v1460, %v1460
        %v1462 = vld [vmem:[%s12] sm:$0xf]
        %v1463 = vld [vmem:[%s12 + $0x4] sm:$0xf]
        %v1464 = vld [vmem:[%s12 + $0x8] sm:$0xf]
        %v1465 = vld [vmem:[%s12 + $0xc] sm:$0xf]
        %v1466 = vld [vmem:[%s13] sm:$0x1]
        %v1468 = vlaneseq
        %v1469 = vshrl.u32 %v1468, 7
        %v1470 = vsub.s32 0, %v1469
        %v1471 = vrot.slane %v1466, %v1470
        %v1477 = vunpack.c.l.b16 %v1462
        %v1478 = vunpack.c.l.b16 %v1463
        %v1479 = vunpack.c.l.b16 %v1464
        %v1480 = vunpack.c.l.b16 %v1465
        %v1481 = vpack.c.b16 %v1478, %v1477
        %v1482 = vpack.c.b16 %v1480, %v1479
        %v1486 = vsel %vm853, %v1461, 0
        %1488 = vmatprep.subr.bf16.mxu0 0
        %1489 = vmatpush1.bf16.msra.mxu0 %v1481
        %1490 = vmatprep.subr.bf16.mxu0 0
        %1491 = vmatpush1.bf16.msra.mxu0 %v1482
        %1492 = vmatprep.subr.bf16.mxu0 0
        %1493 = vmatpush1.bf16.msra.mxu0 0
        %1494 = vmatprep.subr.bf16.mxu0 0
        %1495 = vmatpush1.bf16.msra.mxu0 0
        %1496 = vmatprep.subr.bf16.mxu0 0
        %1497 = vmatpush1.bf16.msra.mxu0 0
        %1498 = vmatprep.subr.bf16.mxu0 0
        %1499 = vmatpush1.bf16.msra.mxu0 0
        %1500 = vmatprep.subr.bf16.mxu0 0
        %1501 = vmatpush1.bf16.msra.mxu0 0
        %1502 = vmatprep.subr.bf16.mxu0 0
        %1503 = vmatpush1.bf16.msra.mxu0 0
        %1504 = vmatprep.subr.bf16.mxu0 0
        %1505 = vmatpush1.bf16.msra.mxu0 0
        %1506 = vmatprep.subr.bf16.mxu0 0
        %1507 = vmatpush1.bf16.msra.mxu0 0
        %1508 = vmatprep.subr.bf16.mxu0 0
        %1509 = vmatpush1.bf16.msra.mxu0 0
        %1510 = vmatprep.subr.bf16.mxu0 0
        %1511 = vmatpush1.bf16.msra.mxu0 0
        %1512 = vmatprep.subr.bf16.mxu0 0
        %1513 = vmatpush1.bf16.msra.mxu0 0
        %1514 = vmatprep.subr.bf16.mxu0 0
        %1515 = vmatpush1.bf16.msra.mxu0 0
        %1516 = vmatprep.subr.bf16.mxu0 0
        %1517 = vmatpush1.bf16.msra.mxu0 0
        %1518 = vmatprep.subr.bf16.mxu0 0
        %1519 = vmatpush1.bf16.msra.mxu0 0
        %1520 = vmatprep.mubr.bf16.mxu0 0
        %1521 = vmatmul.mubr.bf16.gmra.mrb[0].mxu0 %v1486
        %v1522 = vpop.f32.mrb[0].mxu0
        %v1523 = vadd.f32 %v1471, %v1522
        %v1524 = vpop.f32.mrb[0].mxu0
        %v1525 = vpop.f32.mrb[0].mxu0
        %v1526 = vpop.f32.mrb[0].mxu0
        %1527 = vdwg.mxu0
        %v1528 = vmul.f32 %v1523, 0.5
        %v1529 = vmul.f32 %v1523, 0.70710677
        %v1530 = verf.f32.pop %v1529
        %v1531 = vadd.f32 %v1530, 1.0
        %v1532 = vmul.f32 %v1528, %v1531
        %v1533 = vpack.c.bf16 %v1532, %v1532
        %v1534 = vld [vmem:[%s14] sm:$0xf]
        %v1535 = vld [vmem:[%s14 + $0x4] sm:$0xf]
        %v1536 = vld [vmem:[%s14 + $0x8] sm:$0xf]
        %v1537 = vld [vmem:[%s14 + $0xc] sm:$0xf]
        %v1538 = vld [vmem:[%s14 + $0x10] sm:$0xf]
        %v1539 = vld [vmem:[%s14 + $0x14] sm:$0xf]
        %v1540 = vld [vmem:[%s14 + $0x18] sm:$0xf]
        %v1541 = vld [vmem:[%s14 + $0x1c] sm:$0xf]
        %v1542 = vld [vmem:[%s15] sm:$0x1]
        %v1544 = vlaneseq
        %v1545 = vshrl.u32 %v1544, 7
        %v1546 = vsub.s32 0, %v1545
        %v1547 = vrot.slane %v1542, %v1546
        %v1557 = vunpack.c.l.b16 %v1534
        %v1558 = vunpack.c.l.b16 %v1535
        %v1559 = vunpack.c.l.b16 %v1536
        %v1560 = vunpack.c.l.b16 %v1537
        %v1561 = vunpack.c.l.b16 %v1538
        %v1562 = vunpack.c.l.b16 %v1539
        %v1563 = vunpack.c.l.b16 %v1540
        %v1564 = vunpack.c.l.b16 %v1541
        %v1565 = vpack.c.b16 %v1558, %v1557
        %v1566 = vpack.c.b16 %v1560, %v1559
        %v1567 = vpack.c.b16 %v1562, %v1561
        %v1568 = vpack.c.b16 %v1564, %v1563
        %vm1573 = vcmask 523264
        %v1575 = vsel %vm1573, %v1533, 0
        %1577 = vmatprep.subr.bf16.mxu0 0
        %1578 = vmatpush1.bf16.msra.mxu0 %v1565
        %1579 = vmatprep.subr.bf16.mxu0 0
        %1580 = vmatpush1.bf16.msra.mxu0 %v1566
        %1581 = vmatprep.subr.bf16.mxu0 0
        %1582 = vmatpush1.bf16.msra.mxu0 %v1567
        %1583 = vmatprep.subr.bf16.mxu0 0
        %1584 = vmatpush1.bf16.msra.mxu0 %v1568
        %1585 = vmatprep.subr.bf16.mxu0 0
        %1586 = vmatpush1.bf16.msra.mxu0 0
        %1587 = vmatprep.subr.bf16.mxu0 0
        %1588 = vmatpush1.bf16.msra.mxu0 0
        %1589 = vmatprep.subr.bf16.mxu0 0
        %1590 = vmatpush1.bf16.msra.mxu0 0
        %1591 = vmatprep.subr.bf16.mxu0 0
        %1592 = vmatpush1.bf16.msra.mxu0 0
        %1593 = vmatprep.subr.bf16.mxu0 0
        %1594 = vmatpush1.bf16.msra.mxu0 0
        %1595 = vmatprep.subr.bf16.mxu0 0
        %1596 = vmatpush1.bf16.msra.mxu0 0
        %1597 = vmatprep.subr.bf16.mxu0 0
        %1598 = vmatpush1.bf16.msra.mxu0 0
        %1599 = vmatprep.subr.bf16.mxu0 0
        %1600 = vmatpush1.bf16.msra.mxu0 0
        %1601 = vmatprep.subr.bf16.mxu0 0
        %1602 = vmatpush1.bf16.msra.mxu0 0
        %1603 = vmatprep.subr.bf16.mxu0 0
        %1604 = vmatpush1.bf16.msra.mxu0 0
        %1605 = vmatprep.subr.bf16.mxu0 0
        %1606 = vmatpush1.bf16.msra.mxu0 0
        %1607 = vmatprep.subr.bf16.mxu0 0
        %1608 = vmatpush1.bf16.msra.mxu0 0
        %1609 = vmatprep.mubr.bf16.mxu0 0
        %1610 = vmatmul.mubr.bf16.gmra.mrb[0].mxu0 %v1575
        %v1611 = vpop.f32.mrb[0].mxu0
        %v1612 = vadd.f32 %v1547, %v1611
        %v1613 = vpop.f32.mrb[0].mxu0
        %v1614 = vpop.f32.mrb[0].mxu0
        %v1615 = vpop.f32.mrb[0].mxu0
        %1616 = vdwg.mxu0
        %v1617 = vadd.f32 %v1612, %v1460
        %v1618 = vsel %vm853, %v1617, 0.0
        %1619 = vadd.xlane.f32.xlu0 %v1618
        %v1620 = vpop.xlane.xlu0 %1619
        %v1621 = vmul.f32 %v1620, %v1434
        %v1622 = vsub.f32 %v1617, %v1621
        %v1623 = vmul.f32 %v1622, %v1622
        %v1624 = vsel %vm853, %v1623, 0.0
        %1625 = vadd.xlane.f32.xlu0 %v1624
        %v1626 = vpop.xlane.xlu0 %1625
        %v1627 = vmul.f32 %v1626, %v1434
        %v1628 = vadd.f32 %v1627, 1e-05
        %v1629 = vrsqrt.pop %v1628
        %v1630 = vmul.f32 %v1622, %v1629
        %v1631 = vld [vmem:[%s16] sm:$0x1]
        %v1633 = vlaneseq
        %v1634 = vshrl.u32 %v1633, 7
        %v1635 = vsub.s32 0, %v1634
        %v1636 = vrot.slane %v1631, %v1635
        %v1638 = vmul.f32 %v1630, %v1636
        %v1639 = vld [vmem:[%s17] sm:$0x1]
        %v1641 = vlaneseq
        %v1642 = vshrl.u32 %v1641, 7
        %v1643 = vsub.s32 0, %v1642
        %v1644 = vrot.slane %v1639, %v1643
        %v1646 = vadd.f32 %v1638, %v1644
        %1647 = vst.msk [vmem:[%s679] sm:$0xff] %vm853, %v1646
        %s1648 = sand.u32 %s449, 1
        %s1649 = scalar_lea.sflag [#allocation6], %s1648
        %s1650 = sand.u32 %s449, 1
        %s1651 = smul.addr %s1650, 8
        %s1652 = scalar_lea.vmem [#allocation13], %s1651
        // Predicated region
        $region117: #{tpu_custom_call.1} parent=91 // pred_check
          %p1653 = pneg %p459
        $region118: #{tpu_custom_call.1} parent=91 // pred_check_branch
          %1655 = sbr.rel (%p1653) target = $region120
        $region119: #{tpu_custom_call.1} parent=91 // pred_region
          %s1657 = ssub.s32 128, 128
          %1658 = vsyncadd %s1649, %s1657
          %s1659 = sadd.s32 %s42, %s41
          %s1660 = smul.addr %s1659, 128
          %s1661 = scalar_lea.hbm %s18, %s1660
          %s1663 = sshll.u32 %s1652, 4
          %s1664 = int_to_ptr.vmem [resolvable:$true] %s1663
          %1666 = dma.vmem_to_hbm [thread:$0]  %s1664, 128, %s1661, %s1649
        $region120: #{tpu_custom_call.1} parent=91 // pred_fallthru
          _
      $region92: #{tpu_custom_call.1} parent=5 // pred_fallthru
        _
      %p1667 = scmp.le.s32.totalorder 2, %s32
      // Predicated region
      $region121: #{tpu_custom_call.1} parent=5 // pred_check
        %p1668 = pneg %p1667
      $region122: #{tpu_custom_call.1} parent=5 // pred_check_branch
        %1670 = sbr.rel (%p1668) target = $region124
      $region123: #{tpu_custom_call.1} parent=5 // pred_region
        %s1671 = ssub.s32 %s32, 2
        // Predicated region
        $region125: #{tpu_custom_call.1} parent=123 // pred_check
          %p1672 = pneg %p465
        $region126: #{tpu_custom_call.1} parent=123 // pred_check_branch
          %1674 = sbr.rel (%p1672) target = $region128
        $region127: #{tpu_custom_call.1} parent=123 // pred_region
          %s1675 = sand.u32 %s450, 1
          %s1676 = scalar_lea.sflag [#allocation6], %s1675
          %s1677 = sand.u32 %s450, 1
          %s1678 = smul.addr %s1677, 8
          %s1679 = scalar_lea.vmem [#allocation13], %s1678
          %1680 = dma.done %s1676, 128
        $region128: #{tpu_custom_call.1} parent=123 // pred_fallthru
          _
      $region124: #{tpu_custom_call.1} parent=5 // pred_fallthru
        _
    $region6: #{tpu_custom_call.1} parent=1 // loop_footer
      %s36 = sadd.s32 1, %s32
    $region7: #{tpu_custom_call.1} parent=1 // loop_footer_branch
      %31 = sbr.rel target = $region3
    $region8: #{tpu_custom_call.1} parent=1 // loop_exit
      _
    %1681 = vsyncpa [#allocation5], 1
    %s1682 = scalar_lea.sflag [#allocation5], 1
    %1683 = vsyncpa %s1682, 1
    %1684 = vsyncpa [#allocation8], 1
    %1685 = vsyncpa [#allocation11], 1
    %1686 = vsyncpa [#allocation6], 1
    %s1687 = scalar_lea.sflag [#allocation6], 1
    %1688 = vsyncpa %s1687, 1

</llo_original>
